<compile_context>
chip_gen: v7x
topology: tpu7x:2x2x1
jax: 0.10.0
libtpu: 0.0.40
codegen_flags: <defaults>
</compile_context>

<pallas_src>
import functools
import math

import jax
import jax.numpy as jnp
from jax.experimental import pallas as pl
from jax.experimental.pallas import tpu as pltpu

VMEM_SPEC = pl.BlockSpec(memory_space=pltpu.MemorySpace.VMEM)


def _pad16(c):
    return ((c + 15) // 16) * 16


# ---------------------------------------------------------------------------
# Fused kernel
# ---------------------------------------------------------------------------
def _ours_fused_kernel(x_ref, mask_ref,
                       w11_ref, w12_ref, w13_ref, w14_ref,
                       shift_ref, fw1_ref, fw2_ref, fw3_ref, fb_ref,
                       end_ref, abu_ref, re1_ref, re2_ref,
                       *, shifts, center, couts, p_dim):
    """Whole DFFN forward pass in one kernel.

    x_ref     : (Cin0_pad, Np)        f32   input (channel-padded, lane-dense)
    mask_ref  : (k*k, 1, Np)          f32   per-tap zero-padding validity mask
    w1*_ref   : (Cout_pad, k*k*Cin_pad) bf16 conv weights (BN scale folded in)
    shift_ref : (sum Cout_pad, 1)     f32   folded BN shift (+bias), packed
    fw*_ref   : padded FC weights     f32
    fb_ref    : (3, 128)              f32   packed FC biases
    outputs   : end (L, P), abu (P, Np), re1 (L, Np), re2 (L, Np) -- f32
    """
    kk = len(shifts)

    # Per-tap validity masks (identical for every conv layer): compare once.
    masks = [mask_ref[t] != 0.0 for t in range(kk)]        # each (1, Np) bool

    # Static offsets of each layer's shift vector inside the packed array.
    offs = []
    o = 0
    for c in couts:
        offs.append(o)
        o += c

    def layer_shift(i):
        return shift_ref[offs[i]:offs[i] + couts[i], :]    # (Cout_pad, 1)

    def conv_bn_relu(act, w_ref, shift):
        """act: (Cin_pad, Np) f32 -> (Cout_pad, Np) f32."""
        blocks = []
        for t in range(kk):                 # static unroll over the k*k taps
            sh = shifts[t]
            rolled = pltpu.roll(act, sh, 1) if sh else act
            if t == center:                 # center tap: always valid
                blocks.append(rolled)
            else:
                blocks.append(jnp.where(masks[t], rolled,
                                        jnp.zeros_like(rolled)))
        # One stacked-K patch matrix, one bf16 cast, ONE MXU matmul per layer.
        patches = jnp.concatenate(blocks, axis=0).astype(jnp.bfloat16)
        acc = jnp.dot(w_ref[...], patches,
                      preferred_element_type=jnp.float32)
        return jnp.maximum(acc + shift, 0.0)

    # ---- Abu ----
    x = x_ref[...]
    x11 = conv_bn_relu(x,   w11_ref, layer_shift(0))      # (128, Np)
    x12 = conv_bn_relu(x11, w12_ref, layer_shift(1))      # (64,  Np)
    abu_pad = conv_bn_relu(x12, w13_ref, layer_shift(2))  # (P_pad, Np), rows>=P are 0
    re1 = conv_bn_relu(abu_pad, w14_ref, layer_shift(3))  # (L,   Np)
    abu = abu_pad[0:p_dim, :]                              # (P, Np)
    abu_ref[...] = abu
    re1_ref[...] = re1

    # ---- End MLP (f32, lane-dense 128-wide hiddens; padding is exact) ----
    h1 = jax.nn.sigmoid(
        jnp.dot(re1, fw1_ref[...], preferred_element_type=jnp.float32)
        + fb_ref[0:1, :])
    h2 = jax.nn.sigmoid(
        jnp.dot(h1, fw2_ref[...], preferred_element_type=jnp.float32)
        + fb_ref[1:2, :])
    end = jax.nn.sigmoid(
        jnp.dot(h2, fw3_ref[...], preferred_element_type=jnp.float32)
        + fb_ref[2:3, 0:p_dim])
    end_ref[...] = end

    # ---- re2 = end @ abu ----
    re2_ref[...] = jnp.dot(end, abu, preferred_element_type=jnp.float32)


# ---------------------------------------------------------------------------
# Wrapper helpers
# ---------------------------------------------------------------------------
def _tap_masks(H, W, k, p):
    """(k*k, 1, Np) 0/1 masks marking taps that fall inside the zero padding."""
    n = jnp.arange(H * W, dtype=jnp.int32)
    y, x = n // W, n % W
    rows = []
    for dy in range(k):
        for dx in range(k):
            yy, xx = y + dy - p, x + dx - p
            rows.append(((yy >= 0) & (yy < H) & (xx >= 0) & (xx < W))
                        .astype(jnp.float32))
    return jnp.stack(rows, 0).reshape(k * k, 1, H * W)


def _tap_shifts(H, W, k, p):
    """Lane-roll amounts so out[n] reads in[n + (dy-p)*W + (dx-p)]."""
    Np = H * W
    return tuple((-((dy - p) * W + (dx - p))) % Np
                 for dy in range(k) for dx in range(k))


def ours_forward(Y, params, *, k, p):
    n, L, H, W = Y.shape
    assert n == 1, "End's reshape requires batch == 1 (same as the PyTorch module)"
    assert 2 * p == k - 1, "spatial-preserving conv assumed (e.g. k=3, p=1)"
    Np = H * W
    kk = k * k
    P = params["c13"][0].shape[1]

    # Padded channel counts (multiples of 16 => aligned patch assembly).
    c_out = (128, 64, _pad16(P), L)
    c_in = (_pad16(L), c_out[0], c_out[1], c_out[2])

    # ---- conv weights: fold BN scale (f32), pad, tap-major reshape, bf16 ----
    def prep_conv(name, cin_pad, cout_pad):
        w, scale, shift = params[name]            # (kk,Cout,Cin), (Cout,1), (Cout,1)
        _, cout, cin = w.shape
        wf = w * scale[None]                       # fold scale in f32
        wf = jnp.pad(wf, ((0, 0), (0, cout_pad - cout), (0, cin_pad - cin)))
        wm = wf.transpose(1, 0, 2).reshape(cout_pad, kk * cin_pad)
        sh = jnp.pad(shift, ((0, cout_pad - cout), (0, 0)))
        return wm.astype(jnp.bfloat16), sh

    w11, s11 = prep_conv("c11", c_in[0], c_out[0])
    w12, s12 = prep_conv("c12", c_in[1], c_out[1])
    w13, s13 = prep_conv("c13", c_in[2], c_out[2])
    w14, s14 = prep_conv("c14", c_in[3], c_out[3])
    shift_all = jnp.concatenate([s11, s12, s13, s14], axis=0)   # (sum Cout, 1)

    # ---- End MLP: pad to lane-dense 128-wide hiddens, pack biases ----
    def prep_fc(name, kin_pad, kout_pad):
        w, b = params[name]                        # (nin, nout), (1, nout)
        nin, nout = w.shape
        wp = jnp.pad(w, ((0, kin_pad - nin), (0, kout_pad - nout)))
        bp = jnp.pad(b, ((0, 0), (0, 128 - nout)))
        return wp, bp

    fw1, fb1 = prep_fc("fc1", Np, 128)             # (Np, 128)
    fw2, fb2 = prep_fc("fc2", 128, 128)            # (128, 128)
    fw3, fb3 = prep_fc("fc3", 128, P)              # (128, P)
    fb_all = jnp.concatenate([fb1, fb2, fb3], axis=0)           # (3, 128)

    # ---- input, border masks, tap shifts ----
    x = jnp.pad(Y.reshape(L, Np), ((0, c_in[0] - L), (0, 0)))
    masks = _tap_masks(H, W, k, p)
    shifts = _tap_shifts(H, W, k, p)
    center = p * k + p
    assert shifts[center] == 0

    operands = (x, masks, w11, w12, w13, w14, shift_all, fw1, fw2, fw3, fb_all)

    cost = pl.CostEstimate(
        flops=int(2 * Np * sum(co * kk * ci for co, ci in zip(c_out, c_in))
                  + 2 * L * (Np * 128 + 128 * 128 + 128 * P)
                  + 2 * L * P * Np),
        transcendentals=int(3 * L * 128),
        bytes_accessed=int(sum(a.size * a.dtype.itemsize for a in operands)
                           + 4 * (L * P + P * Np + 2 * L * Np)))

    kern = functools.partial(_ours_fused_kernel, shifts=shifts, center=center,
                             couts=c_out, p_dim=P)
    end, abu2, re1_2, re2_2 = pl.pallas_call(
        kern,
        out_shape=(jax.ShapeDtypeStruct((L, P), jnp.float32),     # end
                   jax.ShapeDtypeStruct((P, Np), jnp.float32),    # abu
                   jax.ShapeDtypeStruct((L, Np), jnp.float32),    # re1
                   jax.ShapeDtypeStruct((L, Np), jnp.float32)),   # re2
        in_specs=[VMEM_SPEC] * len(operands),
        out_specs=(VMEM_SPEC,) * 4,
        cost_estimate=cost,
    )(*operands)

    return (end,                               # (L, P)
            abu2[None],                        # (1, P, Np)
            re1_2.reshape(1, L, H, W),         # (1, L, H, W)
            re2_2[None])                       # (1, L, Np)


# ---------------------------------------------------------------------------
# Pure-JAX reference (same folded-BN math) for a sanity check
# ---------------------------------------------------------------------------
def reference_forward(Y, params, *, k, p):
    _, L, H, W = Y.shape
    Np = H * W
    x = Y.reshape(L, Np).astype(jnp.float32)

    def conv_ref(act, w, scale, shift):
        kk, cout, cin = w.shape
        a = jnp.pad(act.reshape(cin, H, W), ((0, 0), (p, p), (p, p)))
        acc = jnp.zeros((cout, Np), jnp.float32)
        for dy in range(k):
            for dx in range(k):
                patch = a[:, dy:dy + H, dx:dx + W].reshape(cin, Np)
                acc = acc + w[dy * k + dx] @ patch
        return jnp.maximum(acc * scale + shift, 0.0)

    x11 = conv_ref(x, *params["c11"])
    x12 = conv_ref(x11, *params["c12"])
    abu = conv_ref(x12, *params["c13"])
    re1 = conv_ref(abu, *params["c14"])

    def fc(h, wb):
        w, b = wb
        return jax.nn.sigmoid(h @ w + b)

    end = fc(fc(fc(re1, params["fc1"]), params["fc2"]), params["fc3"])
    re2 = end @ abu
    return end, abu[None], re1.reshape(1, L, H, W), re2[None]


# ---------------------------------------------------------------------------
# Deterministic parameter construction (raw f32 params; folding done in wrapper)
# ---------------------------------------------------------------------------
def init_params(key, L, P, Np, k):
    kc11, kc12, kc13, kc14, kf1, kf2, kf3 = jax.random.split(key, 7)
    eps = 1e-5

    def conv_block(k_, cin, cout):
        kw, kb, kg, kbe, km, kv = jax.random.split(k_, 6)
        w = jax.random.normal(kw, (k * k, cout, cin), jnp.float32) \
            / math.sqrt(cin * k * k)
        bias = 0.01 * jax.random.normal(kb, (cout,), jnp.float32)
        # BN (inference): non-trivial running stats / affine, folded below.
        gamma = 1.0 + 0.1 * jax.random.normal(kg, (cout,), jnp.float32)
        beta = 0.05 * jax.random.normal(kbe, (cout,), jnp.float32)
        mean = 0.02 * jax.random.normal(km, (cout,), jnp.float32)
        var = jax.random.uniform(kv, (cout,), jnp.float32,
                                 minval=0.5, maxval=1.5)
        scale = gamma / jnp.sqrt(var + eps)
        shift = beta + (bias - mean) * scale
        return (w, scale.reshape(cout, 1), shift.reshape(cout, 1))

    def fc_block(k_, nin, nout):
        kw, kb = jax.random.split(k_)
        w = jax.random.normal(kw, (nin, nout), jnp.float32) / math.sqrt(nin)
        b = 0.01 * jax.random.normal(kb, (1, nout), jnp.float32)
        return (w, b)

    return {
        "c11": conv_block(kc11, L, 128),
        "c12": conv_block(kc12, 128, 64),
        "c13": conv_block(kc13, 64, P),
        "c14": conv_block(kc14, P, L),
        "fc1": fc_block(kf1, Np, 100),
        "fc2": fc_block(kf2, 100, 30),
        "fc3": fc_block(kf3, 30, P),
    }


# ---------------------------------------------------------------------------
if __name__ == "__main__":
    L, P, H, W, k, p = 4, 4, 16, 16, 3, 1   # k=3, p=1 -> spatial preserved
    Np = H * W

    key = jax.random.PRNGKey(0)
    k_inp, k_par = jax.random.split(key)
    Y = jax.random.normal(k_inp, (1, L, H, W), jnp.float32)
    params = init_params(k_par, L, P, Np, k)

    fwd = jax.jit(functools.partial(ours_forward, k=k, p=p))
    end, abu, re1, re2 = fwd(Y, params)
    jax.block_until_ready((end, abu, re1, re2))

    assert end.shape == (L, P)
    assert abu.shape == (1, P, Np)
    assert re1.shape == (1, L, H, W)
    assert re2.shape == (1, L, Np)

    # Numerical sanity check vs. pure-JAX reference (bf16-MXU level tolerance).
    r_end, r_abu, r_re1, r_re2 = reference_forward(Y, params, k=k, p=p)
    for got, ref in ((end, r_end), (abu, r_abu), (re1, r_re1), (re2, r_re2)):
        assert bool(jnp.all(jnp.isfinite(got)))
        assert bool(jnp.allclose(got, ref, rtol=5e-2, atol=5e-2)), \
            float(jnp.max(jnp.abs(got - ref)))

    print("KERNEL_OK")
</pallas_src>

<mosaic_0001>
module attributes {stable_mosaic.version = 11 : i64} {
  func.func @_ours_fused_kernel(%arg0: memref<16x256xf32, #tpu.memory_space<vmem>>, %arg1: memref<9x1x256xf32, #tpu.memory_space<vmem>>, %arg2: memref<128x144xbf16, #tpu.memory_space<vmem>>, %arg3: memref<64x1152xbf16, #tpu.memory_space<vmem>>, %arg4: memref<16x576xbf16, #tpu.memory_space<vmem>>, %arg5: memref<4x144xbf16, #tpu.memory_space<vmem>>, %arg6: memref<212x1xf32, #tpu.memory_space<vmem>>, %arg7: memref<256x128xf32, #tpu.memory_space<vmem>>, %arg8: memref<128x128xf32, #tpu.memory_space<vmem>>, %arg9: memref<128x4xf32, #tpu.memory_space<vmem>>, %arg10: memref<3x128xf32, #tpu.memory_space<vmem>>, %arg11: memref<4x4xf32, #tpu.memory_space<vmem>>, %arg12: memref<4x256xf32, #tpu.memory_space<vmem>>, %arg13: memref<4x256xf32, #tpu.memory_space<vmem>>, %arg14: memref<4x256xf32, #tpu.memory_space<vmem>>) attributes {dimension_semantics = [], scalar_prefetch = 0 : i64, scratch_operands = 0 : i64, tpu.core_type = #tpu.core_type<tc>} {
    %c0 = arith.constant 0 : index
    %c0_0 = arith.constant 0 : index
    %c0_1 = arith.constant 0 : index
    %0 = vector.load %arg1[%c0, %c0_0, %c0_1] : memref<9x1x256xf32, #tpu.memory_space<vmem>>, vector<1x1x256xf32>
    %1 = vector.shape_cast %0 : vector<1x1x256xf32> to vector<1x256xf32>
    %cst = arith.constant 0.000000e+00 : f32
    %2 = vector.broadcast %cst : f32 to vector<1x256xf32>
    %3 = arith.cmpf one, %1, %2 : vector<1x256xf32>
    %c1 = arith.constant 1 : index
    %c0_2 = arith.constant 0 : index
    %c0_3 = arith.constant 0 : index
    %4 = vector.load %arg1[%c1, %c0_2, %c0_3] : memref<9x1x256xf32, #tpu.memory_space<vmem>>, vector<1x1x256xf32>
    %5 = vector.shape_cast %4 : vector<1x1x256xf32> to vector<1x256xf32>
    %cst_4 = arith.constant 0.000000e+00 : f32
    %6 = vector.broadcast %cst_4 : f32 to vector<1x256xf32>
    %7 = arith.cmpf one, %5, %6 : vector<1x256xf32>
    %c2 = arith.constant 2 : index
    %c0_5 = arith.constant 0 : index
    %c0_6 = arith.constant 0 : index
    %8 = vector.load %arg1[%c2, %c0_5, %c0_6] : memref<9x1x256xf32, #tpu.memory_space<vmem>>, vector<1x1x256xf32>
    %9 = vector.shape_cast %8 : vector<1x1x256xf32> to vector<1x256xf32>
    %cst_7 = arith.constant 0.000000e+00 : f32
    %10 = vector.broadcast %cst_7 : f32 to vector<1x256xf32>
    %11 = arith.cmpf one, %9, %10 : vector<1x256xf32>
    %c3 = arith.constant 3 : index
    %c0_8 = arith.constant 0 : index
    %c0_9 = arith.constant 0 : index
    %12 = vector.load %arg1[%c3, %c0_8, %c0_9] : memref<9x1x256xf32, #tpu.memory_space<vmem>>, vector<1x1x256xf32>
    %13 = vector.shape_cast %12 : vector<1x1x256xf32> to vector<1x256xf32>
    %cst_10 = arith.constant 0.000000e+00 : f32
    %14 = vector.broadcast %cst_10 : f32 to vector<1x256xf32>
    %15 = arith.cmpf one, %13, %14 : vector<1x256xf32>
    %c5 = arith.constant 5 : index
    %c0_11 = arith.constant 0 : index
    %c0_12 = arith.constant 0 : index
    %16 = vector.load %arg1[%c5, %c0_11, %c0_12] : memref<9x1x256xf32, #tpu.memory_space<vmem>>, vector<1x1x256xf32>
    %17 = vector.shape_cast %16 : vector<1x1x256xf32> to vector<1x256xf32>
    %cst_13 = arith.constant 0.000000e+00 : f32
    %18 = vector.broadcast %cst_13 : f32 to vector<1x256xf32>
    %19 = arith.cmpf one, %17, %18 : vector<1x256xf32>
    %c6 = arith.constant 6 : index
    %c0_14 = arith.constant 0 : index
    %c0_15 = arith.constant 0 : index
    %20 = vector.load %arg1[%c6, %c0_14, %c0_15] : memref<9x1x256xf32, #tpu.memory_space<vmem>>, vector<1x1x256xf32>
    %21 = vector.shape_cast %20 : vector<1x1x256xf32> to vector<1x256xf32>
    %cst_16 = arith.constant 0.000000e+00 : f32
    %22 = vector.broadcast %cst_16 : f32 to vector<1x256xf32>
    %23 = arith.cmpf one, %21, %22 : vector<1x256xf32>
    %c7 = arith.constant 7 : index
    %c0_17 = arith.constant 0 : index
    %c0_18 = arith.constant 0 : index
    %24 = vector.load %arg1[%c7, %c0_17, %c0_18] : memref<9x1x256xf32, #tpu.memory_space<vmem>>, vector<1x1x256xf32>
    %25 = vector.shape_cast %24 : vector<1x1x256xf32> to vector<1x256xf32>
    %cst_19 = arith.constant 0.000000e+00 : f32
    %26 = vector.broadcast %cst_19 : f32 to vector<1x256xf32>
    %27 = arith.cmpf one, %25, %26 : vector<1x256xf32>
    %c8 = arith.constant 8 : index
    %c0_20 = arith.constant 0 : index
    %c0_21 = arith.constant 0 : index
    %28 = vector.load %arg1[%c8, %c0_20, %c0_21] : memref<9x1x256xf32, #tpu.memory_space<vmem>>, vector<1x1x256xf32>
    %29 = vector.shape_cast %28 : vector<1x1x256xf32> to vector<1x256xf32>
    %cst_22 = arith.constant 0.000000e+00 : f32
    %30 = vector.broadcast %cst_22 : f32 to vector<1x256xf32>
    %31 = arith.cmpf one, %29, %30 : vector<1x256xf32>
    %c0_23 = arith.constant 0 : index
    %c0_24 = arith.constant 0 : index
    %32 = vector.load %arg0[%c0_23, %c0_24] : memref<16x256xf32, #tpu.memory_space<vmem>>, vector<16x256xf32>
    %c0_25 = arith.constant 0 : index
    %c0_26 = arith.constant 0 : index
    %33 = vector.load %arg6[%c0_25, %c0_26] : memref<212x1xf32, #tpu.memory_space<vmem>>, vector<128x1xf32>
    %c17_i32 = arith.constant 17 : i32
    %34 = tpu.dynamic_rotate %32 by %c17_i32 dim 1 : vector<16x256xf32>, i32 -> vector<16x256xf32>
    %cst_27 = arith.constant 0.000000e+00 : f32
    %35 = vector.broadcast %cst_27 : f32 to vector<16x256xf32>
    %36 = vector.shape_cast %3 : vector<1x256xi1> to vector<1x256xi1>
    %37 = vector.broadcast %36 : vector<1x256xi1> to vector<16x256xi1>
    %38 = arith.select %37, %34, %35 : vector<16x256xi1>, vector<16x256xf32>
    %c16_i32 = arith.constant 16 : i32
    %39 = tpu.dynamic_rotate %32 by %c16_i32 dim 1 : vector<16x256xf32>, i32 -> vector<16x256xf32>
    %cst_28 = arith.constant 0.000000e+00 : f32
    %40 = vector.broadcast %cst_28 : f32 to vector<16x256xf32>
    %41 = vector.shape_cast %7 : vector<1x256xi1> to vector<1x256xi1>
    %42 = vector.broadcast %41 : vector<1x256xi1> to vector<16x256xi1>
    %43 = arith.select %42, %39, %40 : vector<16x256xi1>, vector<16x256xf32>
    %c15_i32 = arith.constant 15 : i32
    %44 = tpu.dynamic_rotate %32 by %c15_i32 dim 1 : vector<16x256xf32>, i32 -> vector<16x256xf32>
    %cst_29 = arith.constant 0.000000e+00 : f32
    %45 = vector.broadcast %cst_29 : f32 to vector<16x256xf32>
    %46 = vector.shape_cast %11 : vector<1x256xi1> to vector<1x256xi1>
    %47 = vector.broadcast %46 : vector<1x256xi1> to vector<16x256xi1>
    %48 = arith.select %47, %44, %45 : vector<16x256xi1>, vector<16x256xf32>
    %c1_i32 = arith.constant 1 : i32
    %49 = tpu.dynamic_rotate %32 by %c1_i32 dim 1 : vector<16x256xf32>, i32 -> vector<16x256xf32>
    %cst_30 = arith.constant 0.000000e+00 : f32
    %50 = vector.broadcast %cst_30 : f32 to vector<16x256xf32>
    %51 = vector.shape_cast %15 : vector<1x256xi1> to vector<1x256xi1>
    %52 = vector.broadcast %51 : vector<1x256xi1> to vector<16x256xi1>
    %53 = arith.select %52, %49, %50 : vector<16x256xi1>, vector<16x256xf32>
    %c255_i32 = arith.constant 255 : i32
    %54 = tpu.dynamic_rotate %32 by %c255_i32 dim 1 : vector<16x256xf32>, i32 -> vector<16x256xf32>
    %cst_31 = arith.constant 0.000000e+00 : f32
    %55 = vector.broadcast %cst_31 : f32 to vector<16x256xf32>
    %56 = vector.shape_cast %19 : vector<1x256xi1> to vector<1x256xi1>
    %57 = vector.broadcast %56 : vector<1x256xi1> to vector<16x256xi1>
    %58 = arith.select %57, %54, %55 : vector<16x256xi1>, vector<16x256xf32>
    %c241_i32 = arith.constant 241 : i32
    %59 = tpu.dynamic_rotate %32 by %c241_i32 dim 1 : vector<16x256xf32>, i32 -> vector<16x256xf32>
    %cst_32 = arith.constant 0.000000e+00 : f32
    %60 = vector.broadcast %cst_32 : f32 to vector<16x256xf32>
    %61 = vector.shape_cast %23 : vector<1x256xi1> to vector<1x256xi1>
    %62 = vector.broadcast %61 : vector<1x256xi1> to vector<16x256xi1>
    %63 = arith.select %62, %59, %60 : vector<16x256xi1>, vector<16x256xf32>
    %c240_i32 = arith.constant 240 : i32
    %64 = tpu.dynamic_rotate %32 by %c240_i32 dim 1 : vector<16x256xf32>, i32 -> vector<16x256xf32>
    %cst_33 = arith.constant 0.000000e+00 : f32
    %65 = vector.broadcast %cst_33 : f32 to vector<16x256xf32>
    %66 = vector.shape_cast %27 : vector<1x256xi1> to vector<1x256xi1>
    %67 = vector.broadcast %66 : vector<1x256xi1> to vector<16x256xi1>
    %68 = arith.select %67, %64, %65 : vector<16x256xi1>, vector<16x256xf32>
    %c239_i32 = arith.constant 239 : i32
    %69 = tpu.dynamic_rotate %32 by %c239_i32 dim 1 : vector<16x256xf32>, i32 -> vector<16x256xf32>
    %cst_34 = arith.constant 0.000000e+00 : f32
    %70 = vector.broadcast %cst_34 : f32 to vector<16x256xf32>
    %71 = vector.shape_cast %31 : vector<1x256xi1> to vector<1x256xi1>
    %72 = vector.broadcast %71 : vector<1x256xi1> to vector<16x256xi1>
    %73 = arith.select %72, %69, %70 : vector<16x256xi1>, vector<16x256xf32>
    %74 = tpu.concatenate %38, %43, %48, %53, %32, %58, %63, %68, %73 in 0 : vector<16x256xf32>, vector<16x256xf32>, vector<16x256xf32>, vector<16x256xf32>, vector<16x256xf32>, vector<16x256xf32>, vector<16x256xf32>, vector<16x256xf32>, vector<16x256xf32> -> vector<144x256xf32>
    %75 = arith.truncf %74 : vector<144x256xf32> to vector<144x256xbf16>
    %c0_35 = arith.constant 0 : index
    %c0_36 = arith.constant 0 : index
    %76 = vector.load %arg2[%c0_35, %c0_36] : memref<128x144xbf16, #tpu.memory_space<vmem>>, vector<128x144xbf16>
    %cst_37 = arith.constant dense<0.000000e+00> : vector<128x256xf32>
    %77 = tpu.matmul %76, %75, %cst_37 {dimension_numbers = #tpu.dot_dimension_numbers<[1], [0], [0], [1], [0, 0, 1, 1], [], []>} : vector<128x144xbf16>, vector<144x256xbf16>, vector<128x256xf32> -> vector<128x256xf32>
    %78 = vector.broadcast %33 : vector<128x1xf32> to vector<128x256xf32>
    %79 = arith.addf %77, %78 : vector<128x256xf32>
    %cst_38 = arith.constant 0.000000e+00 : f32
    %80 = vector.broadcast %cst_38 : f32 to vector<128x256xf32>
    %81 = arith.maximumf %79, %80 : vector<128x256xf32>
    %c128 = arith.constant 128 : index
    %c0_39 = arith.constant 0 : index
    %82 = vector.load %arg6[%c128, %c0_39] : memref<212x1xf32, #tpu.memory_space<vmem>>, vector<64x1xf32>
    %c17_i32_40 = arith.constant 17 : i32
    %83 = tpu.dynamic_rotate %81 by %c17_i32_40 dim 1 : vector<128x256xf32>, i32 -> vector<128x256xf32>
    %cst_41 = arith.constant 0.000000e+00 : f32
    %84 = vector.broadcast %cst_41 : f32 to vector<128x256xf32>
    %85 = vector.shape_cast %3 : vector<1x256xi1> to vector<1x256xi1>
    %86 = vector.broadcast %85 : vector<1x256xi1> to vector<128x256xi1>
    %87 = arith.select %86, %83, %84 : vector<128x256xi1>, vector<128x256xf32>
    %c16_i32_42 = arith.constant 16 : i32
    %88 = tpu.dynamic_rotate %81 by %c16_i32_42 dim 1 : vector<128x256xf32>, i32 -> vector<128x256xf32>
    %cst_43 = arith.constant 0.000000e+00 : f32
    %89 = vector.broadcast %cst_43 : f32 to vector<128x256xf32>
    %90 = vector.shape_cast %7 : vector<1x256xi1> to vector<1x256xi1>
    %91 = vector.broadcast %90 : vector<1x256xi1> to vector<128x256xi1>
    %92 = arith.select %91, %88, %89 : vector<128x256xi1>, vector<128x256xf32>
    %c15_i32_44 = arith.constant 15 : i32
    %93 = tpu.dynamic_rotate %81 by %c15_i32_44 dim 1 : vector<128x256xf32>, i32 -> vector<128x256xf32>
    %cst_45 = arith.constant 0.000000e+00 : f32
    %94 = vector.broadcast %cst_45 : f32 to vector<128x256xf32>
    %95 = vector.shape_cast %11 : vector<1x256xi1> to vector<1x256xi1>
    %96 = vector.broadcast %95 : vector<1x256xi1> to vector<128x256xi1>
    %97 = arith.select %96, %93, %94 : vector<128x256xi1>, vector<128x256xf32>
    %c1_i32_46 = arith.constant 1 : i32
    %98 = tpu.dynamic_rotate %81 by %c1_i32_46 dim 1 : vector<128x256xf32>, i32 -> vector<128x256xf32>
    %cst_47 = arith.constant 0.000000e+00 : f32
    %99 = vector.broadcast %cst_47 : f32 to vector<128x256xf32>
    %100 = vector.shape_cast %15 : vector<1x256xi1> to vector<1x256xi1>
    %101 = vector.broadcast %100 : vector<1x256xi1> to vector<128x256xi1>
    %102 = arith.select %101, %98, %99 : vector<128x256xi1>, vector<128x256xf32>
    %c255_i32_48 = arith.constant 255 : i32
    %103 = tpu.dynamic_rotate %81 by %c255_i32_48 dim 1 : vector<128x256xf32>, i32 -> vector<128x256xf32>
    %cst_49 = arith.constant 0.000000e+00 : f32
    %104 = vector.broadcast %cst_49 : f32 to vector<128x256xf32>
    %105 = vector.shape_cast %19 : vector<1x256xi1> to vector<1x256xi1>
    %106 = vector.broadcast %105 : vector<1x256xi1> to vector<128x256xi1>
    %107 = arith.select %106, %103, %104 : vector<128x256xi1>, vector<128x256xf32>
    %c241_i32_50 = arith.constant 241 : i32
    %108 = tpu.dynamic_rotate %81 by %c241_i32_50 dim 1 : vector<128x256xf32>, i32 -> vector<128x256xf32>
    %cst_51 = arith.constant 0.000000e+00 : f32
    %109 = vector.broadcast %cst_51 : f32 to vector<128x256xf32>
    %110 = vector.shape_cast %23 : vector<1x256xi1> to vector<1x256xi1>
    %111 = vector.broadcast %110 : vector<1x256xi1> to vector<128x256xi1>
    %112 = arith.select %111, %108, %109 : vector<128x256xi1>, vector<128x256xf32>
    %c240_i32_52 = arith.constant 240 : i32
    %113 = tpu.dynamic_rotate %81 by %c240_i32_52 dim 1 : vector<128x256xf32>, i32 -> vector<128x256xf32>
    %cst_53 = arith.constant 0.000000e+00 : f32
    %114 = vector.broadcast %cst_53 : f32 to vector<128x256xf32>
    %115 = vector.shape_cast %27 : vector<1x256xi1> to vector<1x256xi1>
    %116 = vector.broadcast %115 : vector<1x256xi1> to vector<128x256xi1>
    %117 = arith.select %116, %113, %114 : vector<128x256xi1>, vector<128x256xf32>
    %c239_i32_54 = arith.constant 239 : i32
    %118 = tpu.dynamic_rotate %81 by %c239_i32_54 dim 1 : vector<128x256xf32>, i32 -> vector<128x256xf32>
    %cst_55 = arith.constant 0.000000e+00 : f32
    %119 = vector.broadcast %cst_55 : f32 to vector<128x256xf32>
    %120 = vector.shape_cast %31 : vector<1x256xi1> to vector<1x256xi1>
    %121 = vector.broadcast %120 : vector<1x256xi1> to vector<128x256xi1>
    %122 = arith.select %121, %118, %119 : vector<128x256xi1>, vector<128x256xf32>
    %123 = tpu.concatenate %87, %92, %97, %102, %81, %107, %112, %117, %122 in 0 : vector<128x256xf32>, vector<128x256xf32>, vector<128x256xf32>, vector<128x256xf32>, vector<128x256xf32>, vector<128x256xf32>, vector<128x256xf32>, vector<128x256xf32>, vector<128x256xf32> -> vector<1152x256xf32>
    %124 = arith.truncf %123 : vector<1152x256xf32> to vector<1152x256xbf16>
    %c0_56 = arith.constant 0 : index
    %c0_57 = arith.constant 0 : index
    %125 = vector.load %arg3[%c0_56, %c0_57] : memref<64x1152xbf16, #tpu.memory_space<vmem>>, vector<64x1152xbf16>
    %cst_58 = arith.constant dense<0.000000e+00> : vector<64x256xf32>
    %126 = tpu.matmul %125, %124, %cst_58 {dimension_numbers = #tpu.dot_dimension_numbers<[1], [0], [0], [1], [0, 0, 1, 1], [], []>} : vector<64x1152xbf16>, vector<1152x256xbf16>, vector<64x256xf32> -> vector<64x256xf32>
    %127 = vector.broadcast %82 : vector<64x1xf32> to vector<64x256xf32>
    %128 = arith.addf %126, %127 : vector<64x256xf32>
    %cst_59 = arith.constant 0.000000e+00 : f32
    %129 = vector.broadcast %cst_59 : f32 to vector<64x256xf32>
    %130 = arith.maximumf %128, %129 : vector<64x256xf32>
    %c192 = arith.constant 192 : index
    %c0_60 = arith.constant 0 : index
    %131 = vector.load %arg6[%c192, %c0_60] : memref<212x1xf32, #tpu.memory_space<vmem>>, vector<16x1xf32>
    %c17_i32_61 = arith.constant 17 : i32
    %132 = tpu.dynamic_rotate %130 by %c17_i32_61 dim 1 : vector<64x256xf32>, i32 -> vector<64x256xf32>
    %cst_62 = arith.constant 0.000000e+00 : f32
    %133 = vector.broadcast %cst_62 : f32 to vector<64x256xf32>
    %134 = vector.shape_cast %3 : vector<1x256xi1> to vector<1x256xi1>
    %135 = vector.broadcast %134 : vector<1x256xi1> to vector<64x256xi1>
    %136 = arith.select %135, %132, %133 : vector<64x256xi1>, vector<64x256xf32>
    %c16_i32_63 = arith.constant 16 : i32
    %137 = tpu.dynamic_rotate %130 by %c16_i32_63 dim 1 : vector<64x256xf32>, i32 -> vector<64x256xf32>
    %cst_64 = arith.constant 0.000000e+00 : f32
    %138 = vector.broadcast %cst_64 : f32 to vector<64x256xf32>
    %139 = vector.shape_cast %7 : vector<1x256xi1> to vector<1x256xi1>
    %140 = vector.broadcast %139 : vector<1x256xi1> to vector<64x256xi1>
    %141 = arith.select %140, %137, %138 : vector<64x256xi1>, vector<64x256xf32>
    %c15_i32_65 = arith.constant 15 : i32
    %142 = tpu.dynamic_rotate %130 by %c15_i32_65 dim 1 : vector<64x256xf32>, i32 -> vector<64x256xf32>
    %cst_66 = arith.constant 0.000000e+00 : f32
    %143 = vector.broadcast %cst_66 : f32 to vector<64x256xf32>
    %144 = vector.shape_cast %11 : vector<1x256xi1> to vector<1x256xi1>
    %145 = vector.broadcast %144 : vector<1x256xi1> to vector<64x256xi1>
    %146 = arith.select %145, %142, %143 : vector<64x256xi1>, vector<64x256xf32>
    %c1_i32_67 = arith.constant 1 : i32
    %147 = tpu.dynamic_rotate %130 by %c1_i32_67 dim 1 : vector<64x256xf32>, i32 -> vector<64x256xf32>
    %cst_68 = arith.constant 0.000000e+00 : f32
    %148 = vector.broadcast %cst_68 : f32 to vector<64x256xf32>
    %149 = vector.shape_cast %15 : vector<1x256xi1> to vector<1x256xi1>
    %150 = vector.broadcast %149 : vector<1x256xi1> to vector<64x256xi1>
    %151 = arith.select %150, %147, %148 : vector<64x256xi1>, vector<64x256xf32>
    %c255_i32_69 = arith.constant 255 : i32
    %152 = tpu.dynamic_rotate %130 by %c255_i32_69 dim 1 : vector<64x256xf32>, i32 -> vector<64x256xf32>
    %cst_70 = arith.constant 0.000000e+00 : f32
    %153 = vector.broadcast %cst_70 : f32 to vector<64x256xf32>
    %154 = vector.shape_cast %19 : vector<1x256xi1> to vector<1x256xi1>
    %155 = vector.broadcast %154 : vector<1x256xi1> to vector<64x256xi1>
    %156 = arith.select %155, %152, %153 : vector<64x256xi1>, vector<64x256xf32>
    %c241_i32_71 = arith.constant 241 : i32
    %157 = tpu.dynamic_rotate %130 by %c241_i32_71 dim 1 : vector<64x256xf32>, i32 -> vector<64x256xf32>
    %cst_72 = arith.constant 0.000000e+00 : f32
    %158 = vector.broadcast %cst_72 : f32 to vector<64x256xf32>
    %159 = vector.shape_cast %23 : vector<1x256xi1> to vector<1x256xi1>
    %160 = vector.broadcast %159 : vector<1x256xi1> to vector<64x256xi1>
    %161 = arith.select %160, %157, %158 : vector<64x256xi1>, vector<64x256xf32>
    %c240_i32_73 = arith.constant 240 : i32
    %162 = tpu.dynamic_rotate %130 by %c240_i32_73 dim 1 : vector<64x256xf32>, i32 -> vector<64x256xf32>
    %cst_74 = arith.constant 0.000000e+00 : f32
    %163 = vector.broadcast %cst_74 : f32 to vector<64x256xf32>
    %164 = vector.shape_cast %27 : vector<1x256xi1> to vector<1x256xi1>
    %165 = vector.broadcast %164 : vector<1x256xi1> to vector<64x256xi1>
    %166 = arith.select %165, %162, %163 : vector<64x256xi1>, vector<64x256xf32>
    %c239_i32_75 = arith.constant 239 : i32
    %167 = tpu.dynamic_rotate %130 by %c239_i32_75 dim 1 : vector<64x256xf32>, i32 -> vector<64x256xf32>
    %cst_76 = arith.constant 0.000000e+00 : f32
    %168 = vector.broadcast %cst_76 : f32 to vector<64x256xf32>
    %169 = vector.shape_cast %31 : vector<1x256xi1> to vector<1x256xi1>
    %170 = vector.broadcast %169 : vector<1x256xi1> to vector<64x256xi1>
    %171 = arith.select %170, %167, %168 : vector<64x256xi1>, vector<64x256xf32>
    %172 = tpu.concatenate %136, %141, %146, %151, %130, %156, %161, %166, %171 in 0 : vector<64x256xf32>, vector<64x256xf32>, vector<64x256xf32>, vector<64x256xf32>, vector<64x256xf32>, vector<64x256xf32>, vector<64x256xf32>, vector<64x256xf32>, vector<64x256xf32> -> vector<576x256xf32>
    %173 = arith.truncf %172 : vector<576x256xf32> to vector<576x256xbf16>
    %c0_77 = arith.constant 0 : index
    %c0_78 = arith.constant 0 : index
    %174 = vector.load %arg4[%c0_77, %c0_78] : memref<16x576xbf16, #tpu.memory_space<vmem>>, vector<16x576xbf16>
    %cst_79 = arith.constant dense<0.000000e+00> : vector<16x256xf32>
    %175 = tpu.matmul %174, %173, %cst_79 {dimension_numbers = #tpu.dot_dimension_numbers<[1], [0], [0], [1], [0, 0, 1, 1], [], []>} : vector<16x576xbf16>, vector<576x256xbf16>, vector<16x256xf32> -> vector<16x256xf32>
    %176 = vector.broadcast %131 : vector<16x1xf32> to vector<16x256xf32>
    %177 = arith.addf %175, %176 : vector<16x256xf32>
    %cst_80 = arith.constant 0.000000e+00 : f32
    %178 = vector.broadcast %cst_80 : f32 to vector<16x256xf32>
    %179 = arith.maximumf %177, %178 : vector<16x256xf32>
    %c208 = arith.constant 208 : index
    %c0_81 = arith.constant 0 : index
    %180 = vector.load %arg6[%c208, %c0_81] : memref<212x1xf32, #tpu.memory_space<vmem>>, vector<4x1xf32>
    %c17_i32_82 = arith.constant 17 : i32
    %181 = tpu.dynamic_rotate %179 by %c17_i32_82 dim 1 : vector<16x256xf32>, i32 -> vector<16x256xf32>
    %cst_83 = arith.constant 0.000000e+00 : f32
    %182 = vector.broadcast %cst_83 : f32 to vector<16x256xf32>
    %183 = vector.shape_cast %3 : vector<1x256xi1> to vector<1x256xi1>
    %184 = vector.broadcast %183 : vector<1x256xi1> to vector<16x256xi1>
    %185 = arith.select %184, %181, %182 : vector<16x256xi1>, vector<16x256xf32>
    %c16_i32_84 = arith.constant 16 : i32
    %186 = tpu.dynamic_rotate %179 by %c16_i32_84 dim 1 : vector<16x256xf32>, i32 -> vector<16x256xf32>
    %cst_85 = arith.constant 0.000000e+00 : f32
    %187 = vector.broadcast %cst_85 : f32 to vector<16x256xf32>
    %188 = vector.shape_cast %7 : vector<1x256xi1> to vector<1x256xi1>
    %189 = vector.broadcast %188 : vector<1x256xi1> to vector<16x256xi1>
    %190 = arith.select %189, %186, %187 : vector<16x256xi1>, vector<16x256xf32>
    %c15_i32_86 = arith.constant 15 : i32
    %191 = tpu.dynamic_rotate %179 by %c15_i32_86 dim 1 : vector<16x256xf32>, i32 -> vector<16x256xf32>
    %cst_87 = arith.constant 0.000000e+00 : f32
    %192 = vector.broadcast %cst_87 : f32 to vector<16x256xf32>
    %193 = vector.shape_cast %11 : vector<1x256xi1> to vector<1x256xi1>
    %194 = vector.broadcast %193 : vector<1x256xi1> to vector<16x256xi1>
    %195 = arith.select %194, %191, %192 : vector<16x256xi1>, vector<16x256xf32>
    %c1_i32_88 = arith.constant 1 : i32
    %196 = tpu.dynamic_rotate %179 by %c1_i32_88 dim 1 : vector<16x256xf32>, i32 -> vector<16x256xf32>
    %cst_89 = arith.constant 0.000000e+00 : f32
    %197 = vector.broadcast %cst_89 : f32 to vector<16x256xf32>
    %198 = vector.shape_cast %15 : vector<1x256xi1> to vector<1x256xi1>
    %199 = vector.broadcast %198 : vector<1x256xi1> to vector<16x256xi1>
    %200 = arith.select %199, %196, %197 : vector<16x256xi1>, vector<16x256xf32>
    %c255_i32_90 = arith.constant 255 : i32
    %201 = tpu.dynamic_rotate %179 by %c255_i32_90 dim 1 : vector<16x256xf32>, i32 -> vector<16x256xf32>
    %cst_91 = arith.constant 0.000000e+00 : f32
    %202 = vector.broadcast %cst_91 : f32 to vector<16x256xf32>
    %203 = vector.shape_cast %19 : vector<1x256xi1> to vector<1x256xi1>
    %204 = vector.broadcast %203 : vector<1x256xi1> to vector<16x256xi1>
    %205 = arith.select %204, %201, %202 : vector<16x256xi1>, vector<16x256xf32>
    %c241_i32_92 = arith.constant 241 : i32
    %206 = tpu.dynamic_rotate %179 by %c241_i32_92 dim 1 : vector<16x256xf32>, i32 -> vector<16x256xf32>
    %cst_93 = arith.constant 0.000000e+00 : f32
    %207 = vector.broadcast %cst_93 : f32 to vector<16x256xf32>
    %208 = vector.shape_cast %23 : vector<1x256xi1> to vector<1x256xi1>
    %209 = vector.broadcast %208 : vector<1x256xi1> to vector<16x256xi1>
    %210 = arith.select %209, %206, %207 : vector<16x256xi1>, vector<16x256xf32>
    %c240_i32_94 = arith.constant 240 : i32
    %211 = tpu.dynamic_rotate %179 by %c240_i32_94 dim 1 : vector<16x256xf32>, i32 -> vector<16x256xf32>
    %cst_95 = arith.constant 0.000000e+00 : f32
    %212 = vector.broadcast %cst_95 : f32 to vector<16x256xf32>
    %213 = vector.shape_cast %27 : vector<1x256xi1> to vector<1x256xi1>
    %214 = vector.broadcast %213 : vector<1x256xi1> to vector<16x256xi1>
    %215 = arith.select %214, %211, %212 : vector<16x256xi1>, vector<16x256xf32>
    %c239_i32_96 = arith.constant 239 : i32
    %216 = tpu.dynamic_rotate %179 by %c239_i32_96 dim 1 : vector<16x256xf32>, i32 -> vector<16x256xf32>
    %cst_97 = arith.constant 0.000000e+00 : f32
    %217 = vector.broadcast %cst_97 : f32 to vector<16x256xf32>
    %218 = vector.shape_cast %31 : vector<1x256xi1> to vector<1x256xi1>
    %219 = vector.broadcast %218 : vector<1x256xi1> to vector<16x256xi1>
    %220 = arith.select %219, %216, %217 : vector<16x256xi1>, vector<16x256xf32>
    %221 = tpu.concatenate %185, %190, %195, %200, %179, %205, %210, %215, %220 in 0 : vector<16x256xf32>, vector<16x256xf32>, vector<16x256xf32>, vector<16x256xf32>, vector<16x256xf32>, vector<16x256xf32>, vector<16x256xf32>, vector<16x256xf32>, vector<16x256xf32> -> vector<144x256xf32>
    %222 = arith.truncf %221 : vector<144x256xf32> to vector<144x256xbf16>
    %c0_98 = arith.constant 0 : index
    %c0_99 = arith.constant 0 : index
    %223 = vector.load %arg5[%c0_98, %c0_99] : memref<4x144xbf16, #tpu.memory_space<vmem>>, vector<4x144xbf16>
    %cst_100 = arith.constant dense<0.000000e+00> : vector<4x256xf32>
    %224 = tpu.matmul %223, %222, %cst_100 {dimension_numbers = #tpu.dot_dimension_numbers<[1], [0], [0], [1], [0, 0, 1, 1], [], []>} : vector<4x144xbf16>, vector<144x256xbf16>, vector<4x256xf32> -> vector<4x256xf32>
    %225 = vector.broadcast %180 : vector<4x1xf32> to vector<4x256xf32>
    %226 = arith.addf %224, %225 : vector<4x256xf32>
    %cst_101 = arith.constant 0.000000e+00 : f32
    %227 = vector.broadcast %cst_101 : f32 to vector<4x256xf32>
    %228 = arith.maximumf %226, %227 : vector<4x256xf32>
    %229 = vector.extract_strided_slice %179 {offsets = [0, 0], sizes = [4, 256], strides = [1, 1]} : vector<16x256xf32> to vector<4x256xf32>
    %c0_102 = arith.constant 0 : index
    %c0_103 = arith.constant 0 : index
    %230 = vector.load %arg12[%c0_102, %c0_103] : memref<4x256xf32, #tpu.memory_space<vmem>>, vector<4x256xf32>
    tpu.vector_store %arg12[%c0_102, %c0_103], %229 {strides = array<i32>} : memref<4x256xf32, #tpu.memory_space<vmem>>, vector<4x256xf32>,
    %c0_104 = arith.constant 0 : index
    %c0_105 = arith.constant 0 : index
    %231 = vector.load %arg13[%c0_104, %c0_105] : memref<4x256xf32, #tpu.memory_space<vmem>>, vector<4x256xf32>
    tpu.vector_store %arg13[%c0_104, %c0_105], %228 {strides = array<i32>} : memref<4x256xf32, #tpu.memory_space<vmem>>, vector<4x256xf32>,
    %c0_106 = arith.constant 0 : index
    %c0_107 = arith.constant 0 : index
    %232 = vector.load %arg7[%c0_106, %c0_107] : memref<256x128xf32, #tpu.memory_space<vmem>>, vector<256x128xf32>
    %cst_108 = arith.constant dense<0.000000e+00> : vector<4x128xf32>
    %233 = tpu.matmul %228, %232, %cst_108 {dimension_numbers = #tpu.dot_dimension_numbers<[1], [0], [0], [1], [0, 0, 1, 1], [], []>} : vector<4x256xf32>, vector<256x128xf32>, vector<4x128xf32> -> vector<4x128xf32>
    %c0_109 = arith.constant 0 : index
    %c0_110 = arith.constant 0 : index
    %234 = vector.load %arg10[%c0_109, %c0_110] : memref<3x128xf32, #tpu.memory_space<vmem>>, vector<1x128xf32>
    %235 = vector.broadcast %234 : vector<1x128xf32> to vector<4x128xf32>
    %236 = arith.addf %233, %235 : vector<4x128xf32>
    %237 = arith.negf %236 : vector<4x128xf32>
    %238 = math.exp %237 : vector<4x128xf32>
    %cst_111 = arith.constant 1.000000e+00 : f32
    %239 = vector.broadcast %cst_111 : f32 to vector<4x128xf32>
    %240 = arith.addf %239, %238 : vector<4x128xf32>
    %241 = arith.divf %239, %240 : vector<4x128xf32>
    %c0_112 = arith.constant 0 : index
    %c0_113 = arith.constant 0 : index
    %242 = vector.load %arg8[%c0_112, %c0_113] : memref<128x128xf32, #tpu.memory_space<vmem>>, vector<128x128xf32>
    %cst_114 = arith.constant dense<0.000000e+00> : vector<4x128xf32>
    %243 = tpu.matmul %241, %242, %cst_114 {dimension_numbers = #tpu.dot_dimension_numbers<[1], [0], [0], [1], [0, 0, 1, 1], [], []>} : vector<4x128xf32>, vector<128x128xf32>, vector<4x128xf32> -> vector<4x128xf32>
    %c1_115 = arith.constant 1 : index
    %c0_116 = arith.constant 0 : index
    %244 = vector.load %arg10[%c1_115, %c0_116] : memref<3x128xf32, #tpu.memory_space<vmem>>, vector<1x128xf32>
    %245 = vector.broadcast %244 : vector<1x128xf32> to vector<4x128xf32>
    %246 = arith.addf %243, %245 : vector<4x128xf32>
    %247 = arith.negf %246 : vector<4x128xf32>
    %248 = math.exp %247 : vector<4x128xf32>
    %cst_117 = arith.constant 1.000000e+00 : f32
    %249 = vector.broadcast %cst_117 : f32 to vector<4x128xf32>
    %250 = arith.addf %249, %248 : vector<4x128xf32>
    %251 = arith.divf %249, %250 : vector<4x128xf32>
    %c0_118 = arith.constant 0 : index
    %c0_119 = arith.constant 0 : index
    %252 = vector.load %arg9[%c0_118, %c0_119] : memref<128x4xf32, #tpu.memory_space<vmem>>, vector<128x4xf32>
    %cst_120 = arith.constant dense<0.000000e+00> : vector<4x4xf32>
    %253 = tpu.matmul %251, %252, %cst_120 {dimension_numbers = #tpu.dot_dimension_numbers<[1], [0], [0], [1], [0, 0, 1, 1], [], []>} : vector<4x128xf32>, vector<128x4xf32>, vector<4x4xf32> -> vector<4x4xf32>
    %c2_121 = arith.constant 2 : index
    %c0_122 = arith.constant 0 : index
    %254 = vector.load %arg10[%c2_121, %c0_122] : memref<3x128xf32, #tpu.memory_space<vmem>>, vector<1x4xf32>
    %255 = vector.broadcast %254 : vector<1x4xf32> to vector<4x4xf32>
    %256 = arith.addf %253, %255 : vector<4x4xf32>
    %257 = arith.negf %256 : vector<4x4xf32>
    %258 = math.exp %257 : vector<4x4xf32>
    %cst_123 = arith.constant 1.000000e+00 : f32
    %259 = vector.broadcast %cst_123 : f32 to vector<4x4xf32>
    %260 = arith.addf %259, %258 : vector<4x4xf32>
    %261 = arith.divf %259, %260 : vector<4x4xf32>
    %c0_124 = arith.constant 0 : index
    %c0_125 = arith.constant 0 : index
    %262 = vector.load %arg11[%c0_124, %c0_125] : memref<4x4xf32, #tpu.memory_space<vmem>>, vector<4x4xf32>
    tpu.vector_store %arg11[%c0_124, %c0_125], %261 {strides = array<i32>} : memref<4x4xf32, #tpu.memory_space<vmem>>, vector<4x4xf32>,
    %cst_126 = arith.constant dense<0.000000e+00> : vector<4x256xf32>
    %263 = tpu.matmul %261, %229, %cst_126 {dimension_numbers = #tpu.dot_dimension_numbers<[1], [0], [0], [1], [0, 0, 1, 1], [], []>} : vector<4x4xf32>, vector<4x256xf32>, vector<4x256xf32> -> vector<4x256xf32>
    %c0_127 = arith.constant 0 : index
    %c0_128 = arith.constant 0 : index
    %264 = vector.load %arg14[%c0_127, %c0_128] : memref<4x256xf32, #tpu.memory_space<vmem>>, vector<4x256xf32>
    tpu.vector_store %arg14[%c0_127, %c0_128], %263 {strides = array<i32>} : memref<4x256xf32, #tpu.memory_space<vmem>>, vector<4x256xf32>,
    return
  }
}

</mosaic_0001>

<llo_original>
// kernel: ours_forward.1
$region0: #{ours_forward.1}
  #allocation0 [shape = 'u32[]', space=smem, size = 0x4, offset = 0x4, fixed_abs, tag = 'smem constant byte address 0x4 - core index']
  #allocation1 [shape = 'u32[144,128]{1,0:T(1,128)}', space=vmem, size = 0x12000, scoped, tag = 'internal scratch']
  %s0 = inlined_call_operand.vmem [shape: f32[16,256], index: 0, kind: input, shape index: {}]
  %s1 = inlined_call_operand.vmem [shape: f32[9,1,256], index: 1, kind: input, shape index: {}]
  %s2 = inlined_call_operand.vmem [shape: bf16[128,144], index: 2, kind: input, shape index: {}]
  %s3 = inlined_call_operand.vmem [shape: bf16[64,1152], index: 3, kind: input, shape index: {}]
  %s4 = inlined_call_operand.vmem [shape: bf16[16,576], index: 4, kind: input, shape index: {}]
  %s5 = inlined_call_operand.vmem [shape: bf16[4,144], index: 5, kind: input, shape index: {}]
  %s6 = inlined_call_operand.vmem [shape: f32[212,1], index: 6, kind: input, shape index: {}]
  %s7 = inlined_call_operand.vmem [shape: f32[256,128], index: 7, kind: input, shape index: {}]
  %s8 = inlined_call_operand.vmem [shape: f32[128,128], index: 8, kind: input, shape index: {}]
  %s9 = inlined_call_operand.vmem [shape: f32[128,4], index: 9, kind: input, shape index: {}]
  %s10 = inlined_call_operand.vmem [shape: f32[3,128], index: 10, kind: input, shape index: {}]
  %s11 = inlined_call_operand.hbm [shape: f32[4,4], index: 11, kind: output, shape index: {0}]
  %s12 = inlined_call_operand.hbm [shape: f32[4,256], index: 12, kind: output, shape index: {1}]
  %s13 = inlined_call_operand.vmem [shape: f32[4,256], index: 13, kind: output, shape index: {2}]
  %s14 = inlined_call_operand.hbm [shape: f32[4,256], index: 14, kind: output, shape index: {3}]
  %15 = xla_tuple %s11, %s12, %s13, %s14
  %s16 = sld [smem:[#allocation0]]
  $region78: #{ours_forward.1} parent=0
    _
  %s18 = ssub.s32 1, %s16
  %s19 = scalar_select 0, %s18, %s16
  $region1: #{ours_forward.1} parent=0
    #allocation2 [shape = 'u8[2048]{0}', space=vmem, size = 0x800, scoped, tag = 'output window, operand 0, single buffered']
    #allocation3 [shape = 's32[1]{0}', space=sflag, size = 0x4, scoped, tag = 'scoped memory for ours_forward.1']
    #allocation4 [shape = 'u8[4096]{0}', space=vmem, size = 0x1000, scoped, tag = 'output window, operand 1, single buffered']
    #allocation5 [shape = 's32[1]{0}', space=sflag, size = 0x4, scoped, tag = 'scoped memory for ours_forward.1']
    #allocation6 [shape = 'u8[4096]{0}', space=vmem, size = 0x1000, scoped, tag = 'output window, operand 3, single buffered']
    %20 = vsyncpa [#allocation3], 0
    %21 = vsyncpa [#allocation5], 0
    // Predicated region
    $region2: #{ours_forward.1} parent=1 // pred_check
      _
    $region3: #{ours_forward.1} parent=1 // pred_check_branch
      %23 = sbr.rel (0) target = $region5
    $region4: #{ours_forward.1} parent=1 // pred_region
      _
    $region5: #{ours_forward.1} parent=1 // pred_fallthru
      _
    // Predicated region
    $region6: #{ours_forward.1} parent=1 // pred_check
      _
    $region7: #{ours_forward.1} parent=1 // pred_check_branch
      %25 = sbr.rel (0) target = $region9
    $region8: #{ours_forward.1} parent=1 // pred_region
      _
    $region9: #{ours_forward.1} parent=1 // pred_fallthru
      _
    // Predicated region
    $region10: #{ours_forward.1} parent=1 // pred_check
      _
    $region11: #{ours_forward.1} parent=1 // pred_check_branch
      %27 = sbr.rel (0) target = $region13
    $region12: #{ours_forward.1} parent=1 // pred_region
      _
    $region13: #{ours_forward.1} parent=1 // pred_fallthru
      _
    // Predicated region
    $region14: #{ours_forward.1} parent=1 // pred_check
      _
    $region15: #{ours_forward.1} parent=1 // pred_check_branch
      %29 = sbr.rel (0) target = $region17
    $region16: #{ours_forward.1} parent=1 // pred_region
      _
    $region17: #{ours_forward.1} parent=1 // pred_fallthru
      _
    // Predicated region
    $region18: #{ours_forward.1} parent=1 // pred_check
      _
    $region19: #{ours_forward.1} parent=1 // pred_check_branch
      %31 = sbr.rel (0) target = $region21
    $region20: #{ours_forward.1} parent=1 // pred_region
      _
    $region21: #{ours_forward.1} parent=1 // pred_fallthru
      _
    // Predicated region
    $region22: #{ours_forward.1} parent=1 // pred_check
      _
    $region23: #{ours_forward.1} parent=1 // pred_check_branch
      %33 = sbr.rel (0) target = $region25
    $region24: #{ours_forward.1} parent=1 // pred_region
      _
    $region25: #{ours_forward.1} parent=1 // pred_fallthru
      _
    // Predicated region
    $region26: #{ours_forward.1} parent=1 // pred_check
      _
    $region27: #{ours_forward.1} parent=1 // pred_check_branch
      %35 = sbr.rel (0) target = $region29
    $region28: #{ours_forward.1} parent=1 // pred_region
      _
    $region29: #{ours_forward.1} parent=1 // pred_fallthru
      _
    // Predicated region
    $region30: #{ours_forward.1} parent=1 // pred_check
      _
    $region31: #{ours_forward.1} parent=1 // pred_check_branch
      %37 = sbr.rel (0) target = $region33
    $region32: #{ours_forward.1} parent=1 // pred_region
      _
    $region33: #{ours_forward.1} parent=1 // pred_fallthru
      _
    // Predicated region
    $region34: #{ours_forward.1} parent=1 // pred_check
      _
    $region35: #{ours_forward.1} parent=1 // pred_check_branch
      %39 = sbr.rel (0) target = $region37
    $region36: #{ours_forward.1} parent=1 // pred_region
      _
    $region37: #{ours_forward.1} parent=1 // pred_fallthru
      _
    // Predicated region
    $region38: #{ours_forward.1} parent=1 // pred_check
      _
    $region39: #{ours_forward.1} parent=1 // pred_check_branch
      %41 = sbr.rel (0) target = $region41
    $region40: #{ours_forward.1} parent=1 // pred_region
      _
    $region41: #{ours_forward.1} parent=1 // pred_fallthru
      _
    // Predicated region
    $region42: #{ours_forward.1} parent=1 // pred_check
      _
    $region43: #{ours_forward.1} parent=1 // pred_check_branch
      %43 = sbr.rel (0) target = $region45
    $region44: #{ours_forward.1} parent=1 // pred_region
      _
    $region45: #{ours_forward.1} parent=1 // pred_fallthru
      _
    %v45 = vld [vmem:[%s1] sm:$0x3]
    %vm46 = vcmp.ne.f32.partialorder %v45, 0.0
    %s47 = scalar_lea.vmem %s1, 2
    %v48 = vld [vmem:[%s47] sm:$0x3]
    %vm49 = vcmp.ne.f32.partialorder %v48, 0.0
    %s50 = scalar_lea.vmem %s1, 4
    %v51 = vld [vmem:[%s50] sm:$0x3]
    %vm52 = vcmp.ne.f32.partialorder %v51, 0.0
    %s53 = scalar_lea.vmem %s1, 6
    %v54 = vld [vmem:[%s53] sm:$0x3]
    %vm55 = vcmp.ne.f32.partialorder %v54, 0.0
    %s56 = scalar_lea.vmem %s1, 10
    %v57 = vld [vmem:[%s56] sm:$0x3]
    %vm58 = vcmp.ne.f32.partialorder %v57, 0.0
    %s59 = scalar_lea.vmem %s1, 12
    %v60 = vld [vmem:[%s59] sm:$0x3]
    %vm61 = vcmp.ne.f32.partialorder %v60, 0.0
    %s62 = scalar_lea.vmem %s1, 14
    %v63 = vld [vmem:[%s62] sm:$0x3]
    %vm64 = vcmp.ne.f32.partialorder %v63, 0.0
    %s65 = scalar_lea.vmem %s1, 16
    %v66 = vld [vmem:[%s65] sm:$0x3]
    %vm67 = vcmp.ne.f32.partialorder %v66, 0.0
    %v68 = vld [vmem:[%s0] sm:$0xff]
    %v69 = vld [vmem:[%s0 + $0x8] sm:$0xff]
    %v70 = vld [vmem:[%s0 + $0x10] sm:$0xff]
    %v71 = vld [vmem:[%s0 + $0x18] sm:$0xff]
    %v72 = vld [vmem:[%s6] sm:$0xff]
    %v73 = vld [vmem:[%s6 + $0x8] sm:$0xff]
    %v74 = vld [vmem:[%s6 + $0x10] sm:$0xff]
    %v75 = vld [vmem:[%s6 + $0x18] sm:$0xff]
    %v76 = vld [vmem:[%s6 + $0x20] sm:$0xff]
    %v77 = vld [vmem:[%s6 + $0x28] sm:$0xff]
    %v78 = vld [vmem:[%s6 + $0x30] sm:$0xff]
    %v79 = vld [vmem:[%s6 + $0x38] sm:$0xff]
    %v80 = vld [vmem:[%s6 + $0x40] sm:$0xff]
    %v81 = vld [vmem:[%s6 + $0x48] sm:$0xff]
    %v82 = vld [vmem:[%s6 + $0x50] sm:$0xff]
    %v83 = vld [vmem:[%s6 + $0x58] sm:$0xff]
    %v84 = vld [vmem:[%s6 + $0x60] sm:$0xff]
    %v85 = vld [vmem:[%s6 + $0x68] sm:$0xff]
    %v86 = vld [vmem:[%s6 + $0x70] sm:$0xff]
    %v87 = vld [vmem:[%s6 + $0x78] sm:$0xff]
    %88 = vrot.lane.b32.xlu0 %v68, 17
    %v89 = vpop.permute.xlu0 %88
    %90 = vrot.lane.b32.xlu0 %v70, 17
    %v91 = vpop.permute.xlu0 %90
    %92 = vrot.lane.b32.xlu0 %v69, 17
    %v93 = vpop.permute.xlu0 %92
    %94 = vrot.lane.b32.xlu0 %v71, 17
    %v95 = vpop.permute.xlu0 %94
    %v96 = vlaneseq
    %v97 = vand.u32 %v96, 127
    %vm98 = vcmp.lt.s32.totalorder %v97, 17
    %v99 = vsel %vm98, %v89, %v93
    %v100 = vsel %vm98, %v91, %v95
    %v101 = vsel %vm98, %v93, %v89
    %v102 = vsel %vm98, %v95, %v91
    %v103 = vsel %vm46, 1, 0
    %v104 = vlaneseq
    %v105 = vshrl.u32 %v104, 7
    %v106 = vsub.s32 0, %v105
    %v107 = vrot.slane %v103, %v106
    %v108 = vlaneseq
    %v109 = vshrl.u32 %v108, 7
    %v110 = vsub.s32 1, %v109
    %v111 = vrot.slane %v103, %v110
    %vm112 = vcmp.eq.s32.totalorder %v107, 1
    %vm113 = vcmp.eq.s32.totalorder %v111, 1
    %v114 = vsel %vm112, %v101, 0.0
    %v115 = vsel %vm113, %v99, 0.0
    %v116 = vsel %vm112, %v102, 0.0
    %v117 = vsel %vm113, %v100, 0.0
    %118 = vrot.lane.b32.xlu0 %v68, 16
    %v119 = vpop.permute.xlu0 %118
    %120 = vrot.lane.b32.xlu0 %v70, 16
    %v121 = vpop.permute.xlu0 %120
    %122 = vrot.lane.b32.xlu0 %v69, 16
    %v123 = vpop.permute.xlu0 %122
    %124 = vrot.lane.b32.xlu0 %v71, 16
    %v125 = vpop.permute.xlu0 %124
    %vm126 = vcmp.lt.s32.totalorder %v97, 16
    %v127 = vsel %vm126, %v119, %v123
    %v128 = vsel %vm126, %v121, %v125
    %v129 = vsel %vm126, %v123, %v119
    %v130 = vsel %vm126, %v125, %v121
    %v131 = vsel %vm49, 1, 0
    %v132 = vlaneseq
    %v133 = vshrl.u32 %v132, 7
    %v134 = vsub.s32 0, %v133
    %v135 = vrot.slane %v131, %v134
    %v136 = vlaneseq
    %v137 = vshrl.u32 %v136, 7
    %v138 = vsub.s32 1, %v137
    %v139 = vrot.slane %v131, %v138
    %vm140 = vcmp.eq.s32.totalorder %v135, 1
    %vm141 = vcmp.eq.s32.totalorder %v139, 1
    %v142 = vsel %vm140, %v129, 0.0
    %v143 = vsel %vm141, %v127, 0.0
    %v144 = vsel %vm140, %v130, 0.0
    %v145 = vsel %vm141, %v128, 0.0
    %146 = vrot.lane.b32.xlu0 %v68, 15
    %v147 = vpop.permute.xlu0 %146
    %148 = vrot.lane.b32.xlu0 %v70, 15
    %v149 = vpop.permute.xlu0 %148
    %150 = vrot.lane.b32.xlu0 %v69, 15
    %v151 = vpop.permute.xlu0 %150
    %152 = vrot.lane.b32.xlu0 %v71, 15
    %v153 = vpop.permute.xlu0 %152
    %vm154 = vcmp.lt.s32.totalorder %v97, 15
    %v155 = vsel %vm154, %v147, %v151
    %v156 = vsel %vm154, %v149, %v153
    %v157 = vsel %vm154, %v151, %v147
    %v158 = vsel %vm154, %v153, %v149
    %v159 = vsel %vm52, 1, 0
    %v160 = vlaneseq
    %v161 = vshrl.u32 %v160, 7
    %v162 = vsub.s32 0, %v161
    %v163 = vrot.slane %v159, %v162
    %v164 = vlaneseq
    %v165 = vshrl.u32 %v164, 7
    %v166 = vsub.s32 1, %v165
    %v167 = vrot.slane %v159, %v166
    %vm168 = vcmp.eq.s32.totalorder %v163, 1
    %vm169 = vcmp.eq.s32.totalorder %v167, 1
    %v170 = vsel %vm168, %v157, 0.0
    %v171 = vsel %vm169, %v155, 0.0
    %v172 = vsel %vm168, %v158, 0.0
    %v173 = vsel %vm169, %v156, 0.0
    %174 = vrot.lane.b32.xlu0 %v68, 1
    %v175 = vpop.permute.xlu0 %174
    %176 = vrot.lane.b32.xlu0 %v70, 1
    %v177 = vpop.permute.xlu0 %176
    %178 = vrot.lane.b32.xlu0 %v69, 1
    %v179 = vpop.permute.xlu0 %178
    %180 = vrot.lane.b32.xlu0 %v71, 1
    %v181 = vpop.permute.xlu0 %180
    %vm182 = vcmp.lt.s32.totalorder %v97, 1
    %v183 = vsel %vm182, %v175, %v179
    %v184 = vsel %vm182, %v177, %v181
    %v185 = vsel %vm182, %v179, %v175
    %v186 = vsel %vm182, %v181, %v177
    %v187 = vsel %vm55, 1, 0
    %v188 = vlaneseq
    %v189 = vshrl.u32 %v188, 7
    %v190 = vsub.s32 0, %v189
    %v191 = vrot.slane %v187, %v190
    %v192 = vlaneseq
    %v193 = vshrl.u32 %v192, 7
    %v194 = vsub.s32 1, %v193
    %v195 = vrot.slane %v187, %v194
    %vm196 = vcmp.eq.s32.totalorder %v191, 1
    %vm197 = vcmp.eq.s32.totalorder %v195, 1
    %v198 = vsel %vm196, %v185, 0.0
    %v199 = vsel %vm197, %v183, 0.0
    %v200 = vsel %vm196, %v186, 0.0
    %v201 = vsel %vm197, %v184, 0.0
    %202 = vrot.lane.b32.xlu0 %v68, 127
    %v203 = vpop.permute.xlu0 %202
    %204 = vrot.lane.b32.xlu0 %v70, 127
    %v205 = vpop.permute.xlu0 %204
    %206 = vrot.lane.b32.xlu0 %v69, 127
    %v207 = vpop.permute.xlu0 %206
    %208 = vrot.lane.b32.xlu0 %v71, 127
    %v209 = vpop.permute.xlu0 %208
    %vm210 = vcmp.lt.s32.totalorder %v97, 127
    %v211 = vsel %vm210, %v203, %v207
    %v212 = vsel %vm210, %v205, %v209
    %v213 = vsel %vm210, %v207, %v203
    %v214 = vsel %vm210, %v209, %v205
    %v215 = vsel %vm58, 1, 0
    %v216 = vlaneseq
    %v217 = vshrl.u32 %v216, 7
    %v218 = vsub.s32 0, %v217
    %v219 = vrot.slane %v215, %v218
    %v220 = vlaneseq
    %v221 = vshrl.u32 %v220, 7
    %v222 = vsub.s32 1, %v221
    %v223 = vrot.slane %v215, %v222
    %vm224 = vcmp.eq.s32.totalorder %v219, 1
    %vm225 = vcmp.eq.s32.totalorder %v223, 1
    %v226 = vsel %vm224, %v211, 0.0
    %v227 = vsel %vm225, %v213, 0.0
    %v228 = vsel %vm224, %v212, 0.0
    %v229 = vsel %vm225, %v214, 0.0
    %230 = vrot.lane.b32.xlu0 %v68, 113
    %v231 = vpop.permute.xlu0 %230
    %232 = vrot.lane.b32.xlu0 %v70, 113
    %v233 = vpop.permute.xlu0 %232
    %234 = vrot.lane.b32.xlu0 %v69, 113
    %v235 = vpop.permute.xlu0 %234
    %236 = vrot.lane.b32.xlu0 %v71, 113
    %v237 = vpop.permute.xlu0 %236
    %vm238 = vcmp.lt.s32.totalorder %v97, 113
    %v239 = vsel %vm238, %v231, %v235
    %v240 = vsel %vm238, %v233, %v237
    %v241 = vsel %vm238, %v235, %v231
    %v242 = vsel %vm238, %v237, %v233
    %v243 = vsel %vm61, 1, 0
    %v244 = vlaneseq
    %v245 = vshrl.u32 %v244, 7
    %v246 = vsub.s32 0, %v245
    %v247 = vrot.slane %v243, %v246
    %v248 = vlaneseq
    %v249 = vshrl.u32 %v248, 7
    %v250 = vsub.s32 1, %v249
    %v251 = vrot.slane %v243, %v250
    %vm252 = vcmp.eq.s32.totalorder %v247, 1
    %vm253 = vcmp.eq.s32.totalorder %v251, 1
    %v254 = vsel %vm252, %v239, 0.0
    %v255 = vsel %vm253, %v241, 0.0
    %v256 = vsel %vm252, %v240, 0.0
    %v257 = vsel %vm253, %v242, 0.0
    %258 = vrot.lane.b32.xlu0 %v68, 112
    %v259 = vpop.permute.xlu0 %258
    %260 = vrot.lane.b32.xlu0 %v70, 112
    %v261 = vpop.permute.xlu0 %260
    %262 = vrot.lane.b32.xlu0 %v69, 112
    %v263 = vpop.permute.xlu0 %262
    %264 = vrot.lane.b32.xlu0 %v71, 112
    %v265 = vpop.permute.xlu0 %264
    %vm266 = vcmp.lt.s32.totalorder %v97, 112
    %v267 = vsel %vm266, %v259, %v263
    %v268 = vsel %vm266, %v261, %v265
    %v269 = vsel %vm266, %v263, %v259
    %v270 = vsel %vm266, %v265, %v261
    %v271 = vsel %vm64, 1, 0
    %v272 = vlaneseq
    %v273 = vshrl.u32 %v272, 7
    %v274 = vsub.s32 0, %v273
    %v275 = vrot.slane %v271, %v274
    %v276 = vlaneseq
    %v277 = vshrl.u32 %v276, 7
    %v278 = vsub.s32 1, %v277
    %v279 = vrot.slane %v271, %v278
    %vm280 = vcmp.eq.s32.totalorder %v275, 1
    %vm281 = vcmp.eq.s32.totalorder %v279, 1
    %v282 = vsel %vm280, %v267, 0.0
    %v283 = vsel %vm281, %v269, 0.0
    %v284 = vsel %vm280, %v268, 0.0
    %v285 = vsel %vm281, %v270, 0.0
    %286 = vrot.lane.b32.xlu0 %v68, 111
    %v287 = vpop.permute.xlu0 %286
    %288 = vrot.lane.b32.xlu0 %v70, 111
    %v289 = vpop.permute.xlu0 %288
    %290 = vrot.lane.b32.xlu0 %v69, 111
    %v291 = vpop.permute.xlu0 %290
    %292 = vrot.lane.b32.xlu0 %v71, 111
    %v293 = vpop.permute.xlu0 %292
    %vm294 = vcmp.lt.s32.totalorder %v97, 111
    %v295 = vsel %vm294, %v287, %v291
    %v296 = vsel %vm294, %v289, %v293
    %v297 = vsel %vm294, %v291, %v287
    %v298 = vsel %vm294, %v293, %v289
    %v299 = vsel %vm67, 1, 0
    %v300 = vlaneseq
    %v301 = vshrl.u32 %v300, 7
    %v302 = vsub.s32 0, %v301
    %v303 = vrot.slane %v299, %v302
    %v304 = vlaneseq
    %v305 = vshrl.u32 %v304, 7
    %v306 = vsub.s32 1, %v305
    %v307 = vrot.slane %v299, %v306
    %vm308 = vcmp.eq.s32.totalorder %v303, 1
    %vm309 = vcmp.eq.s32.totalorder %v307, 1
    %v310 = vsel %vm308, %v295, 0.0
    %v311 = vsel %vm309, %v297, 0.0
    %v312 = vsel %vm308, %v296, 0.0
    %v313 = vsel %vm309, %v298, 0.0
    %v314 = vpack.c.bf16 %v116, %v114
    %v315 = vpack.c.bf16 %v117, %v115
    %v316 = vpack.c.bf16 %v144, %v142
    %v317 = vpack.c.bf16 %v145, %v143
    %v318 = vpack.c.bf16 %v172, %v170
    %v319 = vpack.c.bf16 %v173, %v171
    %v320 = vpack.c.bf16 %v200, %v198
    %v321 = vpack.c.bf16 %v201, %v199
    %v322 = vpack.c.bf16 %v70, %v68
    %v323 = vpack.c.bf16 %v71, %v69
    %v324 = vpack.c.bf16 %v228, %v226
    %v325 = vpack.c.bf16 %v229, %v227
    %v326 = vpack.c.bf16 %v256, %v254
    %v327 = vpack.c.bf16 %v257, %v255
    %v328 = vpack.c.bf16 %v284, %v282
    %v329 = vpack.c.bf16 %v285, %v283
    %v330 = vpack.c.bf16 %v312, %v310
    %v331 = vpack.c.bf16 %v313, %v311
    %v332 = vld [vmem:[%s2] sm:$0xff]
    %v333 = vld [vmem:[%s2 + $0x8] sm:$0xff]
    %v334 = vld [vmem:[%s2 + $0x10] sm:$0xff]
    %v335 = vld [vmem:[%s2 + $0x18] sm:$0xff]
    %v336 = vld [vmem:[%s2 + $0x20] sm:$0xff]
    %v337 = vld [vmem:[%s2 + $0x28] sm:$0xff]
    %v338 = vld [vmem:[%s2 + $0x30] sm:$0xff]
    %v339 = vld [vmem:[%s2 + $0x38] sm:$0xff]
    %v340 = vld [vmem:[%s2 + $0x40] sm:$0xff]
    %v341 = vld [vmem:[%s2 + $0x48] sm:$0xff]
    %v342 = vld [vmem:[%s2 + $0x50] sm:$0xff]
    %v343 = vld [vmem:[%s2 + $0x58] sm:$0xff]
    %v344 = vld [vmem:[%s2 + $0x60] sm:$0xff]
    %v345 = vld [vmem:[%s2 + $0x68] sm:$0xff]
    %v346 = vld [vmem:[%s2 + $0x70] sm:$0xff]
    %v347 = vld [vmem:[%s2 + $0x78] sm:$0xff]
    %349 = vset.pattern.permute.xlu0 0
    %350 = vperm.xlu0 %349, %v72
    %v351 = vpop.permute.xlu0 %350
    %354 = vset.pattern.permute.xlu0 0
    %355 = vperm.xlu0 %354, %v73
    %v356 = vpop.permute.xlu0 %355
    %359 = vset.pattern.permute.xlu0 0
    %360 = vperm.xlu0 %359, %v74
    %v361 = vpop.permute.xlu0 %360
    %364 = vset.pattern.permute.xlu0 0
    %365 = vperm.xlu0 %364, %v75
    %v366 = vpop.permute.xlu0 %365
    %369 = vset.pattern.permute.xlu0 0
    %370 = vperm.xlu0 %369, %v76
    %v371 = vpop.permute.xlu0 %370
    %374 = vset.pattern.permute.xlu0 0
    %375 = vperm.xlu0 %374, %v77
    %v376 = vpop.permute.xlu0 %375
    %379 = vset.pattern.permute.xlu0 0
    %380 = vperm.xlu0 %379, %v78
    %v381 = vpop.permute.xlu0 %380
    %384 = vset.pattern.permute.xlu0 0
    %385 = vperm.xlu0 %384, %v79
    %v386 = vpop.permute.xlu0 %385
    %389 = vset.pattern.permute.xlu0 0
    %390 = vperm.xlu0 %389, %v80
    %v391 = vpop.permute.xlu0 %390
    %394 = vset.pattern.permute.xlu0 0
    %395 = vperm.xlu0 %394, %v81
    %v396 = vpop.permute.xlu0 %395
    %399 = vset.pattern.permute.xlu0 0
    %400 = vperm.xlu0 %399, %v82
    %v401 = vpop.permute.xlu0 %400
    %404 = vset.pattern.permute.xlu0 0
    %405 = vperm.xlu0 %404, %v83
    %v406 = vpop.permute.xlu0 %405
    %409 = vset.pattern.permute.xlu0 0
    %410 = vperm.xlu0 %409, %v84
    %v411 = vpop.permute.xlu0 %410
    %414 = vset.pattern.permute.xlu0 0
    %415 = vperm.xlu0 %414, %v85
    %v416 = vpop.permute.xlu0 %415
    %419 = vset.pattern.permute.xlu0 0
    %420 = vperm.xlu0 %419, %v86
    %v421 = vpop.permute.xlu0 %420
    %424 = vset.pattern.permute.xlu0 0
    %425 = vperm.xlu0 %424, %v87
    %v426 = vpop.permute.xlu0 %425
    %v444 = vunpack.c.l.b16 %v332
    %v445 = vunpack.c.h.b16 %v332
    %v446 = vunpack.c.l.b16 %v333
    %v447 = vunpack.c.h.b16 %v333
    %v448 = vunpack.c.l.b16 %v334
    %v449 = vunpack.c.h.b16 %v334
    %v450 = vunpack.c.l.b16 %v335
    %v451 = vunpack.c.h.b16 %v335
    %v452 = vunpack.c.l.b16 %v336
    %v453 = vunpack.c.h.b16 %v336
    %v454 = vunpack.c.l.b16 %v337
    %v455 = vunpack.c.h.b16 %v337
    %v456 = vunpack.c.l.b16 %v338
    %v457 = vunpack.c.h.b16 %v338
    %v458 = vunpack.c.l.b16 %v339
    %v459 = vunpack.c.h.b16 %v339
    %v460 = vunpack.c.l.b16 %v340
    %v461 = vunpack.c.h.b16 %v340
    %v462 = vunpack.c.l.b16 %v341
    %v463 = vunpack.c.h.b16 %v341
    %v464 = vunpack.c.l.b16 %v342
    %v465 = vunpack.c.h.b16 %v342
    %v466 = vunpack.c.l.b16 %v343
    %v467 = vunpack.c.h.b16 %v343
    %v468 = vunpack.c.l.b16 %v344
    %v469 = vunpack.c.h.b16 %v344
    %v470 = vunpack.c.l.b16 %v345
    %v471 = vunpack.c.h.b16 %v345
    %v472 = vunpack.c.l.b16 %v346
    %v473 = vunpack.c.h.b16 %v346
    %v474 = vunpack.c.l.b16 %v347
    %v475 = vunpack.c.h.b16 %v347
    %v476 = vpack.c.b16 %v446, %v444
    %v477 = vpack.c.b16 %v447, %v445
    %v478 = vpack.c.b16 %v450, %v448
    %v479 = vpack.c.b16 %v451, %v449
    %v480 = vpack.c.b16 %v454, %v452
    %v481 = vpack.c.b16 %v455, %v453
    %v482 = vpack.c.b16 %v458, %v456
    %v483 = vpack.c.b16 %v459, %v457
    %v484 = vpack.c.b16 %v462, %v460
    %v485 = vpack.c.b16 %v463, %v461
    %v486 = vpack.c.b16 %v466, %v464
    %v487 = vpack.c.b16 %v467, %v465
    %v488 = vpack.c.b16 %v470, %v468
    %v489 = vpack.c.b16 %v471, %v469
    %v490 = vpack.c.b16 %v474, %v472
    %v491 = vpack.c.b16 %v475, %v473
    %vm500 = vcmask 130048
    %v502 = vsel %vm500, %v477, 0
    %v505 = vsel %vm500, %v479, 0
    %v508 = vsel %vm500, %v481, 0
    %v511 = vsel %vm500, %v483, 0
    %v514 = vsel %vm500, %v485, 0
    %v517 = vsel %vm500, %v487, 0
    %v520 = vsel %vm500, %v489, 0
    %v523 = vsel %vm500, %v491, 0
    %525 = vmatprep.subr.bf16.mxu0 %v315
    %526 = vmatpush1.bf16.msra.mxu0 %v314
    %527 = vmatprep.subr.bf16.mxu0 %v317
    %528 = vmatpush1.bf16.msra.mxu0 %v316
    %529 = vmatprep.subr.bf16.mxu0 %v319
    %530 = vmatpush1.bf16.msra.mxu0 %v318
    %531 = vmatprep.subr.bf16.mxu0 %v321
    %532 = vmatpush1.bf16.msra.mxu0 %v320
    %533 = vmatprep.subr.bf16.mxu0 %v323
    %534 = vmatpush1.bf16.msra.mxu0 %v322
    %535 = vmatprep.subr.bf16.mxu0 %v325
    %536 = vmatpush1.bf16.msra.mxu0 %v324
    %537 = vmatprep.subr.bf16.mxu0 %v327
    %538 = vmatpush1.bf16.msra.mxu0 %v326
    %539 = vmatprep.subr.bf16.mxu0 %v329
    %540 = vmatpush1.bf16.msra.mxu0 %v328
    %541 = vmatprep.subr.bf16.mxu0 %v331
    %542 = vmatpush1.bf16.msra.mxu0 %v330
    %543 = vmatprep.subr.bf16.mxu0 0
    %544 = vmatpush1.bf16.msra.mxu0 0
    %545 = vmatprep.subr.bf16.mxu0 0
    %546 = vmatpush1.bf16.msra.mxu0 0
    %547 = vmatprep.subr.bf16.mxu0 0
    %548 = vmatpush1.bf16.msra.mxu0 0
    %549 = vmatprep.subr.bf16.mxu0 0
    %550 = vmatpush1.bf16.msra.mxu0 0
    %551 = vmatprep.subr.bf16.mxu0 0
    %552 = vmatpush1.bf16.msra.mxu0 0
    %553 = vmatprep.subr.bf16.mxu0 0
    %554 = vmatpush1.bf16.msra.mxu0 0
    %555 = vmatprep.subr.bf16.mxu0 0
    %556 = vmatpush1.bf16.msra.mxu0 0
    %557 = vmatprep.mubr.bf16.mxu0 %v502
    %558 = vmatmul.mubr.bf16.gmra.mrb[0].mxu0 %v476
    %v559 = vpop.f32.mrb[0].mxu0
    %v560 = vadd.f32 %v351, %v559
    %v561 = vpop.f32.mrb[0].mxu0
    %v562 = vadd.f32 %v351, %v561
    %v563 = vpop.f32.mrb[0].mxu0
    %v564 = vadd.f32 %v356, %v563
    %v565 = vpop.f32.mrb[0].mxu0
    %v566 = vadd.f32 %v356, %v565
    %567 = vmatprep.mubr.bf16.mxu0 %v505
    %568 = vmatmul.mubr.bf16.gmra.mrb[0].mxu0 %v478
    %v569 = vpop.f32.mrb[0].mxu0
    %v570 = vadd.f32 %v361, %v569
    %v571 = vpop.f32.mrb[0].mxu0
    %v572 = vadd.f32 %v361, %v571
    %v573 = vpop.f32.mrb[0].mxu0
    %v574 = vadd.f32 %v366, %v573
    %v575 = vpop.f32.mrb[0].mxu0
    %v576 = vadd.f32 %v366, %v575
    %577 = vmatprep.mubr.bf16.mxu0 %v508
    %578 = vmatmul.mubr.bf16.gmra.mrb[0].mxu0 %v480
    %v579 = vpop.f32.mrb[0].mxu0
    %v580 = vadd.f32 %v371, %v579
    %v581 = vpop.f32.mrb[0].mxu0
    %v582 = vadd.f32 %v371, %v581
    %v583 = vpop.f32.mrb[0].mxu0
    %v584 = vadd.f32 %v376, %v583
    %v585 = vpop.f32.mrb[0].mxu0
    %v586 = vadd.f32 %v376, %v585
    %587 = vmatprep.mubr.bf16.mxu0 %v511
    %588 = vmatmul.mubr.bf16.gmra.mrb[0].mxu0 %v482
    %v589 = vpop.f32.mrb[0].mxu0
    %v590 = vadd.f32 %v381, %v589
    %v591 = vpop.f32.mrb[0].mxu0
    %v592 = vadd.f32 %v381, %v591
    %v593 = vpop.f32.mrb[0].mxu0
    %v594 = vadd.f32 %v386, %v593
    %v595 = vpop.f32.mrb[0].mxu0
    %v596 = vadd.f32 %v386, %v595
    %597 = vmatprep.mubr.bf16.mxu0 %v514
    %598 = vmatmul.mubr.bf16.gmra.mrb[0].mxu0 %v484
    %v599 = vpop.f32.mrb[0].mxu0
    %v600 = vadd.f32 %v391, %v599
    %v601 = vpop.f32.mrb[0].mxu0
    %v602 = vadd.f32 %v391, %v601
    %v603 = vpop.f32.mrb[0].mxu0
    %v604 = vadd.f32 %v396, %v603
    %v605 = vpop.f32.mrb[0].mxu0
    %v606 = vadd.f32 %v396, %v605
    %607 = vmatprep.mubr.bf16.mxu0 %v517
    %608 = vmatmul.mubr.bf16.gmra.mrb[0].mxu0 %v486
    %v609 = vpop.f32.mrb[0].mxu0
    %v610 = vadd.f32 %v401, %v609
    %v611 = vpop.f32.mrb[0].mxu0
    %v612 = vadd.f32 %v401, %v611
    %v613 = vpop.f32.mrb[0].mxu0
    %v614 = vadd.f32 %v406, %v613
    %v615 = vpop.f32.mrb[0].mxu0
    %v616 = vadd.f32 %v406, %v615
    %617 = vmatprep.mubr.bf16.mxu0 %v520
    %618 = vmatmul.mubr.bf16.gmra.mrb[0].mxu0 %v488
    %v619 = vpop.f32.mrb[0].mxu0
    %v620 = vadd.f32 %v411, %v619
    %v621 = vpop.f32.mrb[0].mxu0
    %v622 = vadd.f32 %v411, %v621
    %v623 = vpop.f32.mrb[0].mxu0
    %v624 = vadd.f32 %v416, %v623
    %v625 = vpop.f32.mrb[0].mxu0
    %v626 = vadd.f32 %v416, %v625
    %627 = vmatprep.mubr.bf16.mxu0 %v523
    %628 = vmatmul.mubr.bf16.gmra.mrb[0].mxu0 %v490
    %v629 = vpop.f32.mrb[0].mxu0
    %v630 = vadd.f32 %v421, %v629
    %v631 = vpop.f32.mrb[0].mxu0
    %v632 = vadd.f32 %v421, %v631
    %v633 = vpop.f32.mrb[0].mxu0
    %v634 = vadd.f32 %v426, %v633
    %v635 = vpop.f32.mrb[0].mxu0
    %v636 = vadd.f32 %v426, %v635
    %637 = vdwg.mxu0
    %v638 = vmax.f32 %v560, 0.0
    %v639 = vmax.f32 %v562, 0.0
    %v640 = vmax.f32 %v564, 0.0
    %v641 = vmax.f32 %v566, 0.0
    %v642 = vmax.f32 %v570, 0.0
    %v643 = vmax.f32 %v572, 0.0
    %v644 = vmax.f32 %v574, 0.0
    %v645 = vmax.f32 %v576, 0.0
    %v646 = vmax.f32 %v580, 0.0
    %v647 = vmax.f32 %v582, 0.0
    %v648 = vmax.f32 %v584, 0.0
    %v649 = vmax.f32 %v586, 0.0
    %v650 = vmax.f32 %v590, 0.0
    %v651 = vmax.f32 %v592, 0.0
    %v652 = vmax.f32 %v594, 0.0
    %v653 = vmax.f32 %v596, 0.0
    %v654 = vmax.f32 %v600, 0.0
    %v655 = vmax.f32 %v602, 0.0
    %v656 = vmax.f32 %v604, 0.0
    %v657 = vmax.f32 %v606, 0.0
    %v658 = vmax.f32 %v610, 0.0
    %v659 = vmax.f32 %v612, 0.0
    %v660 = vmax.f32 %v614, 0.0
    %v661 = vmax.f32 %v616, 0.0
    %v662 = vmax.f32 %v620, 0.0
    %v663 = vmax.f32 %v622, 0.0
    %v664 = vmax.f32 %v624, 0.0
    %v665 = vmax.f32 %v626, 0.0
    %v666 = vmax.f32 %v630, 0.0
    %v667 = vmax.f32 %v632, 0.0
    %v668 = vmax.f32 %v634, 0.0
    %v669 = vmax.f32 %v636, 0.0
    %v670 = vld [vmem:[%s6 + $0x80] sm:$0xff]
    %v671 = vld [vmem:[%s6 + $0x88] sm:$0xff]
    %v672 = vld [vmem:[%s6 + $0x90] sm:$0xff]
    %v673 = vld [vmem:[%s6 + $0x98] sm:$0xff]
    %v674 = vld [vmem:[%s6 + $0xa0] sm:$0xff]
    %v675 = vld [vmem:[%s6 + $0xa8] sm:$0xff]
    %v676 = vld [vmem:[%s6 + $0xb0] sm:$0xff]
    %v677 = vld [vmem:[%s6 + $0xb8] sm:$0xff]
    %678 = vrot.lane.b32.xlu0 %v638, 17
    %v679 = vpop.permute.xlu0 %678
    %680 = vrot.lane.b32.xlu0 %v640, 17
    %v681 = vpop.permute.xlu0 %680
    %682 = vrot.lane.b32.xlu0 %v642, 17
    %v683 = vpop.permute.xlu0 %682
    %684 = vrot.lane.b32.xlu0 %v644, 17
    %v685 = vpop.permute.xlu0 %684
    %686 = vrot.lane.b32.xlu0 %v646, 17
    %v687 = vpop.permute.xlu0 %686
    %688 = vrot.lane.b32.xlu0 %v648, 17
    %v689 = vpop.permute.xlu0 %688
    %690 = vrot.lane.b32.xlu0 %v650, 17
    %v691 = vpop.permute.xlu0 %690
    %692 = vrot.lane.b32.xlu0 %v652, 17
    %v693 = vpop.permute.xlu0 %692
    %694 = vrot.lane.b32.xlu0 %v654, 17
    %v695 = vpop.permute.xlu0 %694
    %696 = vrot.lane.b32.xlu0 %v656, 17
    %v697 = vpop.permute.xlu0 %696
    %698 = vrot.lane.b32.xlu0 %v658, 17
    %v699 = vpop.permute.xlu0 %698
    %700 = vrot.lane.b32.xlu0 %v660, 17
    %v701 = vpop.permute.xlu0 %700
    %702 = vrot.lane.b32.xlu0 %v662, 17
    %v703 = vpop.permute.xlu0 %702
    %704 = vrot.lane.b32.xlu0 %v664, 17
    %v705 = vpop.permute.xlu0 %704
    %706 = vrot.lane.b32.xlu0 %v666, 17
    %v707 = vpop.permute.xlu0 %706
    %708 = vrot.lane.b32.xlu0 %v668, 17
    %v709 = vpop.permute.xlu0 %708
    %710 = vrot.lane.b32.xlu0 %v639, 17
    %v711 = vpop.permute.xlu0 %710
    %712 = vrot.lane.b32.xlu0 %v641, 17
    %v713 = vpop.permute.xlu0 %712
    %714 = vrot.lane.b32.xlu0 %v643, 17
    %v715 = vpop.permute.xlu0 %714
    %716 = vrot.lane.b32.xlu0 %v645, 17
    %v717 = vpop.permute.xlu0 %716
    %718 = vrot.lane.b32.xlu0 %v647, 17
    %v719 = vpop.permute.xlu0 %718
    %720 = vrot.lane.b32.xlu0 %v649, 17
    %v721 = vpop.permute.xlu0 %720
    %722 = vrot.lane.b32.xlu0 %v651, 17
    %v723 = vpop.permute.xlu0 %722
    %724 = vrot.lane.b32.xlu0 %v653, 17
    %v725 = vpop.permute.xlu0 %724
    %726 = vrot.lane.b32.xlu0 %v655, 17
    %v727 = vpop.permute.xlu0 %726
    %728 = vrot.lane.b32.xlu0 %v657, 17
    %v729 = vpop.permute.xlu0 %728
    %730 = vrot.lane.b32.xlu0 %v659, 17
    %v731 = vpop.permute.xlu0 %730
    %732 = vrot.lane.b32.xlu0 %v661, 17
    %v733 = vpop.permute.xlu0 %732
    %734 = vrot.lane.b32.xlu0 %v663, 17
    %v735 = vpop.permute.xlu0 %734
    %736 = vrot.lane.b32.xlu0 %v665, 17
    %v737 = vpop.permute.xlu0 %736
    %738 = vrot.lane.b32.xlu0 %v667, 17
    %v739 = vpop.permute.xlu0 %738
    %740 = vrot.lane.b32.xlu0 %v669, 17
    %v741 = vpop.permute.xlu0 %740
    %v742 = vsel %vm98, %v679, %v711
    %v743 = vsel %vm98, %v681, %v713
    %v744 = vsel %vm98, %v683, %v715
    %v745 = vsel %vm98, %v685, %v717
    %v746 = vsel %vm98, %v687, %v719
    %v747 = vsel %vm98, %v689, %v721
    %v748 = vsel %vm98, %v691, %v723
    %v749 = vsel %vm98, %v693, %v725
    %v750 = vsel %vm98, %v695, %v727
    %v751 = vsel %vm98, %v697, %v729
    %v752 = vsel %vm98, %v699, %v731
    %v753 = vsel %vm98, %v701, %v733
    %v754 = vsel %vm98, %v703, %v735
    %v755 = vsel %vm98, %v705, %v737
    %v756 = vsel %vm98, %v707, %v739
    %v757 = vsel %vm98, %v709, %v741
    %v758 = vsel %vm98, %v711, %v679
    %v759 = vsel %vm98, %v713, %v681
    %v760 = vsel %vm98, %v715, %v683
    %v761 = vsel %vm98, %v717, %v685
    %v762 = vsel %vm98, %v719, %v687
    %v763 = vsel %vm98, %v721, %v689
    %v764 = vsel %vm98, %v723, %v691
    %v765 = vsel %vm98, %v725, %v693
    %v766 = vsel %vm98, %v727, %v695
    %v767 = vsel %vm98, %v729, %v697
    %v768 = vsel %vm98, %v731, %v699
    %v769 = vsel %vm98, %v733, %v701
    %v770 = vsel %vm98, %v735, %v703
    %v771 = vsel %vm98, %v737, %v705
    %v772 = vsel %vm98, %v739, %v707
    %v773 = vsel %vm98, %v741, %v709
    %v774 = vsel %vm112, %v758, 0.0
    %v775 = vsel %vm113, %v742, 0.0
    %v776 = vsel %vm112, %v759, 0.0
    %v777 = vsel %vm113, %v743, 0.0
    %v778 = vsel %vm112, %v760, 0.0
    %v779 = vsel %vm113, %v744, 0.0
    %v780 = vsel %vm112, %v761, 0.0
    %v781 = vsel %vm113, %v745, 0.0
    %v782 = vsel %vm112, %v762, 0.0
    %v783 = vsel %vm113, %v746, 0.0
    %v784 = vsel %vm112, %v763, 0.0
    %v785 = vsel %vm113, %v747, 0.0
    %v786 = vsel %vm112, %v764, 0.0
    %v787 = vsel %vm113, %v748, 0.0
    %v788 = vsel %vm112, %v765, 0.0
    %v789 = vsel %vm113, %v749, 0.0
    %v790 = vsel %vm112, %v766, 0.0
    %v791 = vsel %vm113, %v750, 0.0
    %v792 = vsel %vm112, %v767, 0.0
    %v793 = vsel %vm113, %v751, 0.0
    %v794 = vsel %vm112, %v768, 0.0
    %v795 = vsel %vm113, %v752, 0.0
    %v796 = vsel %vm112, %v769, 0.0
    %v797 = vsel %vm113, %v753, 0.0
    %v798 = vsel %vm112, %v770, 0.0
    %v799 = vsel %vm113, %v754, 0.0
    %v800 = vsel %vm112, %v771, 0.0
    %v801 = vsel %vm113, %v755, 0.0
    %v802 = vsel %vm112, %v772, 0.0
    %v803 = vsel %vm113, %v756, 0.0
    %v804 = vsel %vm112, %v773, 0.0
    %v805 = vsel %vm113, %v757, 0.0
    %806 = vrot.lane.b32.xlu0 %v638, 16
    %v807 = vpop.permute.xlu0 %806
    %808 = vrot.lane.b32.xlu0 %v640, 16
    %v809 = vpop.permute.xlu0 %808
    %810 = vrot.lane.b32.xlu0 %v642, 16
    %v811 = vpop.permute.xlu0 %810
    %812 = vrot.lane.b32.xlu0 %v644, 16
    %v813 = vpop.permute.xlu0 %812
    %814 = vrot.lane.b32.xlu0 %v646, 16
    %v815 = vpop.permute.xlu0 %814
    %816 = vrot.lane.b32.xlu0 %v648, 16
    %v817 = vpop.permute.xlu0 %816
    %818 = vrot.lane.b32.xlu0 %v650, 16
    %v819 = vpop.permute.xlu0 %818
    %820 = vrot.lane.b32.xlu0 %v652, 16
    %v821 = vpop.permute.xlu0 %820
    %822 = vrot.lane.b32.xlu0 %v654, 16
    %v823 = vpop.permute.xlu0 %822
    %824 = vrot.lane.b32.xlu0 %v656, 16
    %v825 = vpop.permute.xlu0 %824
    %826 = vrot.lane.b32.xlu0 %v658, 16
    %v827 = vpop.permute.xlu0 %826
    %828 = vrot.lane.b32.xlu0 %v660, 16
    %v829 = vpop.permute.xlu0 %828
    %830 = vrot.lane.b32.xlu0 %v662, 16
    %v831 = vpop.permute.xlu0 %830
    %832 = vrot.lane.b32.xlu0 %v664, 16
    %v833 = vpop.permute.xlu0 %832
    %834 = vrot.lane.b32.xlu0 %v666, 16
    %v835 = vpop.permute.xlu0 %834
    %836 = vrot.lane.b32.xlu0 %v668, 16
    %v837 = vpop.permute.xlu0 %836
    %838 = vrot.lane.b32.xlu0 %v639, 16
    %v839 = vpop.permute.xlu0 %838
    %840 = vrot.lane.b32.xlu0 %v641, 16
    %v841 = vpop.permute.xlu0 %840
    %842 = vrot.lane.b32.xlu0 %v643, 16
    %v843 = vpop.permute.xlu0 %842
    %844 = vrot.lane.b32.xlu0 %v645, 16
    %v845 = vpop.permute.xlu0 %844
    %846 = vrot.lane.b32.xlu0 %v647, 16
    %v847 = vpop.permute.xlu0 %846
    %848 = vrot.lane.b32.xlu0 %v649, 16
    %v849 = vpop.permute.xlu0 %848
    %850 = vrot.lane.b32.xlu0 %v651, 16
    %v851 = vpop.permute.xlu0 %850
    %852 = vrot.lane.b32.xlu0 %v653, 16
    %v853 = vpop.permute.xlu0 %852
    %854 = vrot.lane.b32.xlu0 %v655, 16
    %v855 = vpop.permute.xlu0 %854
    %856 = vrot.lane.b32.xlu0 %v657, 16
    %v857 = vpop.permute.xlu0 %856
    %858 = vrot.lane.b32.xlu0 %v659, 16
    %v859 = vpop.permute.xlu0 %858
    %860 = vrot.lane.b32.xlu0 %v661, 16
    %v861 = vpop.permute.xlu0 %860
    %862 = vrot.lane.b32.xlu0 %v663, 16
    %v863 = vpop.permute.xlu0 %862
    %864 = vrot.lane.b32.xlu0 %v665, 16
    %v865 = vpop.permute.xlu0 %864
    %866 = vrot.lane.b32.xlu0 %v667, 16
    %v867 = vpop.permute.xlu0 %866
    %868 = vrot.lane.b32.xlu0 %v669, 16
    %v869 = vpop.permute.xlu0 %868
    %v870 = vsel %vm126, %v807, %v839
    %v871 = vsel %vm126, %v809, %v841
    %v872 = vsel %vm126, %v811, %v843
    %v873 = vsel %vm126, %v813, %v845
    %v874 = vsel %vm126, %v815, %v847
    %v875 = vsel %vm126, %v817, %v849
    %v876 = vsel %vm126, %v819, %v851
    %v877 = vsel %vm126, %v821, %v853
    %v878 = vsel %vm126, %v823, %v855
    %v879 = vsel %vm126, %v825, %v857
    %v880 = vsel %vm126, %v827, %v859
    %v881 = vsel %vm126, %v829, %v861
    %v882 = vsel %vm126, %v831, %v863
    %v883 = vsel %vm126, %v833, %v865
    %v884 = vsel %vm126, %v835, %v867
    %v885 = vsel %vm126, %v837, %v869
    %v886 = vsel %vm126, %v839, %v807
    %v887 = vsel %vm126, %v841, %v809
    %v888 = vsel %vm126, %v843, %v811
    %v889 = vsel %vm126, %v845, %v813
    %v890 = vsel %vm126, %v847, %v815
    %v891 = vsel %vm126, %v849, %v817
    %v892 = vsel %vm126, %v851, %v819
    %v893 = vsel %vm126, %v853, %v821
    %v894 = vsel %vm126, %v855, %v823
    %v895 = vsel %vm126, %v857, %v825
    %v896 = vsel %vm126, %v859, %v827
    %v897 = vsel %vm126, %v861, %v829
    %v898 = vsel %vm126, %v863, %v831
    %v899 = vsel %vm126, %v865, %v833
    %v900 = vsel %vm126, %v867, %v835
    %v901 = vsel %vm126, %v869, %v837
    %v902 = vsel %vm140, %v886, 0.0
    %v903 = vsel %vm141, %v870, 0.0
    %v904 = vsel %vm140, %v887, 0.0
    %v905 = vsel %vm141, %v871, 0.0
    %v906 = vsel %vm140, %v888, 0.0
    %v907 = vsel %vm141, %v872, 0.0
    %v908 = vsel %vm140, %v889, 0.0
    %v909 = vsel %vm141, %v873, 0.0
    %v910 = vsel %vm140, %v890, 0.0
    %v911 = vsel %vm141, %v874, 0.0
    %v912 = vsel %vm140, %v891, 0.0
    %v913 = vsel %vm141, %v875, 0.0
    %v914 = vsel %vm140, %v892, 0.0
    %v915 = vsel %vm141, %v876, 0.0
    %v916 = vsel %vm140, %v893, 0.0
    %v917 = vsel %vm141, %v877, 0.0
    %v918 = vsel %vm140, %v894, 0.0
    %v919 = vsel %vm141, %v878, 0.0
    %v920 = vsel %vm140, %v895, 0.0
    %v921 = vsel %vm141, %v879, 0.0
    %v922 = vsel %vm140, %v896, 0.0
    %v923 = vsel %vm141, %v880, 0.0
    %v924 = vsel %vm140, %v897, 0.0
    %v925 = vsel %vm141, %v881, 0.0
    %v926 = vsel %vm140, %v898, 0.0
    %v927 = vsel %vm141, %v882, 0.0
    %v928 = vsel %vm140, %v899, 0.0
    %v929 = vsel %vm141, %v883, 0.0
    %v930 = vsel %vm140, %v900, 0.0
    %v931 = vsel %vm141, %v884, 0.0
    %v932 = vsel %vm140, %v901, 0.0
    %v933 = vsel %vm141, %v885, 0.0
    %934 = vrot.lane.b32.xlu0 %v638, 15
    %v935 = vpop.permute.xlu0 %934
    %936 = vrot.lane.b32.xlu0 %v640, 15
    %v937 = vpop.permute.xlu0 %936
    %938 = vrot.lane.b32.xlu0 %v642, 15
    %v939 = vpop.permute.xlu0 %938
    %940 = vrot.lane.b32.xlu0 %v644, 15
    %v941 = vpop.permute.xlu0 %940
    %942 = vrot.lane.b32.xlu0 %v646, 15
    %v943 = vpop.permute.xlu0 %942
    %944 = vrot.lane.b32.xlu0 %v648, 15
    %v945 = vpop.permute.xlu0 %944
    %946 = vrot.lane.b32.xlu0 %v650, 15
    %v947 = vpop.permute.xlu0 %946
    %948 = vrot.lane.b32.xlu0 %v652, 15
    %v949 = vpop.permute.xlu0 %948
    %950 = vrot.lane.b32.xlu0 %v654, 15
    %v951 = vpop.permute.xlu0 %950
    %952 = vrot.lane.b32.xlu0 %v656, 15
    %v953 = vpop.permute.xlu0 %952
    %954 = vrot.lane.b32.xlu0 %v658, 15
    %v955 = vpop.permute.xlu0 %954
    %956 = vrot.lane.b32.xlu0 %v660, 15
    %v957 = vpop.permute.xlu0 %956
    %958 = vrot.lane.b32.xlu0 %v662, 15
    %v959 = vpop.permute.xlu0 %958
    %960 = vrot.lane.b32.xlu0 %v664, 15
    %v961 = vpop.permute.xlu0 %960
    %962 = vrot.lane.b32.xlu0 %v666, 15
    %v963 = vpop.permute.xlu0 %962
    %964 = vrot.lane.b32.xlu0 %v668, 15
    %v965 = vpop.permute.xlu0 %964
    %966 = vrot.lane.b32.xlu0 %v639, 15
    %v967 = vpop.permute.xlu0 %966
    %968 = vrot.lane.b32.xlu0 %v641, 15
    %v969 = vpop.permute.xlu0 %968
    %970 = vrot.lane.b32.xlu0 %v643, 15
    %v971 = vpop.permute.xlu0 %970
    %972 = vrot.lane.b32.xlu0 %v645, 15
    %v973 = vpop.permute.xlu0 %972
    %974 = vrot.lane.b32.xlu0 %v647, 15
    %v975 = vpop.permute.xlu0 %974
    %976 = vrot.lane.b32.xlu0 %v649, 15
    %v977 = vpop.permute.xlu0 %976
    %978 = vrot.lane.b32.xlu0 %v651, 15
    %v979 = vpop.permute.xlu0 %978
    %980 = vrot.lane.b32.xlu0 %v653, 15
    %v981 = vpop.permute.xlu0 %980
    %982 = vrot.lane.b32.xlu0 %v655, 15
    %v983 = vpop.permute.xlu0 %982
    %984 = vrot.lane.b32.xlu0 %v657, 15
    %v985 = vpop.permute.xlu0 %984
    %986 = vrot.lane.b32.xlu0 %v659, 15
    %v987 = vpop.permute.xlu0 %986
    %988 = vrot.lane.b32.xlu0 %v661, 15
    %v989 = vpop.permute.xlu0 %988
    %990 = vrot.lane.b32.xlu0 %v663, 15
    %v991 = vpop.permute.xlu0 %990
    %992 = vrot.lane.b32.xlu0 %v665, 15
    %v993 = vpop.permute.xlu0 %992
    %994 = vrot.lane.b32.xlu0 %v667, 15
    %v995 = vpop.permute.xlu0 %994
    %996 = vrot.lane.b32.xlu0 %v669, 15
    %v997 = vpop.permute.xlu0 %996
    %v998 = vsel %vm154, %v935, %v967
    %v999 = vsel %vm154, %v937, %v969
    %v1000 = vsel %vm154, %v939, %v971
    %v1001 = vsel %vm154, %v941, %v973
    %v1002 = vsel %vm154, %v943, %v975
    %v1003 = vsel %vm154, %v945, %v977
    %v1004 = vsel %vm154, %v947, %v979
    %v1005 = vsel %vm154, %v949, %v981
    %v1006 = vsel %vm154, %v951, %v983
    %v1007 = vsel %vm154, %v953, %v985
    %v1008 = vsel %vm154, %v955, %v987
    %v1009 = vsel %vm154, %v957, %v989
    %v1010 = vsel %vm154, %v959, %v991
    %v1011 = vsel %vm154, %v961, %v993
    %v1012 = vsel %vm154, %v963, %v995
    %v1013 = vsel %vm154, %v965, %v997
    %v1014 = vsel %vm154, %v967, %v935
    %v1015 = vsel %vm154, %v969, %v937
    %v1016 = vsel %vm154, %v971, %v939
    %v1017 = vsel %vm154, %v973, %v941
    %v1018 = vsel %vm154, %v975, %v943
    %v1019 = vsel %vm154, %v977, %v945
    %v1020 = vsel %vm154, %v979, %v947
    %v1021 = vsel %vm154, %v981, %v949
    %v1022 = vsel %vm154, %v983, %v951
    %v1023 = vsel %vm154, %v985, %v953
    %v1024 = vsel %vm154, %v987, %v955
    %v1025 = vsel %vm154, %v989, %v957
    %v1026 = vsel %vm154, %v991, %v959
    %v1027 = vsel %vm154, %v993, %v961
    %v1028 = vsel %vm154, %v995, %v963
    %v1029 = vsel %vm154, %v997, %v965
    %v1030 = vsel %vm168, %v1014, 0.0
    %v1031 = vsel %vm169, %v998, 0.0
    %v1032 = vsel %vm168, %v1015, 0.0
    %v1033 = vsel %vm169, %v999, 0.0
    %v1034 = vsel %vm168, %v1016, 0.0
    %v1035 = vsel %vm169, %v1000, 0.0
    %v1036 = vsel %vm168, %v1017, 0.0
    %v1037 = vsel %vm169, %v1001, 0.0
    %v1038 = vsel %vm168, %v1018, 0.0
    %v1039 = vsel %vm169, %v1002, 0.0
    %v1040 = vsel %vm168, %v1019, 0.0
    %v1041 = vsel %vm169, %v1003, 0.0
    %v1042 = vsel %vm168, %v1020, 0.0
    %v1043 = vsel %vm169, %v1004, 0.0
    %v1044 = vsel %vm168, %v1021, 0.0
    %v1045 = vsel %vm169, %v1005, 0.0
    %v1046 = vsel %vm168, %v1022, 0.0
    %v1047 = vsel %vm169, %v1006, 0.0
    %v1048 = vsel %vm168, %v1023, 0.0
    %v1049 = vsel %vm169, %v1007, 0.0
    %v1050 = vsel %vm168, %v1024, 0.0
    %v1051 = vsel %vm169, %v1008, 0.0
    %v1052 = vsel %vm168, %v1025, 0.0
    %v1053 = vsel %vm169, %v1009, 0.0
    %v1054 = vsel %vm168, %v1026, 0.0
    %v1055 = vsel %vm169, %v1010, 0.0
    %v1056 = vsel %vm168, %v1027, 0.0
    %v1057 = vsel %vm169, %v1011, 0.0
    %v1058 = vsel %vm168, %v1028, 0.0
    %v1059 = vsel %vm169, %v1012, 0.0
    %v1060 = vsel %vm168, %v1029, 0.0
    %v1061 = vsel %vm169, %v1013, 0.0
    %1062 = vrot.lane.b32.xlu0 %v638, 1
    %v1063 = vpop.permute.xlu0 %1062
    %1064 = vrot.lane.b32.xlu0 %v640, 1
    %v1065 = vpop.permute.xlu0 %1064
    %1066 = vrot.lane.b32.xlu0 %v642, 1
    %v1067 = vpop.permute.xlu0 %1066
    %1068 = vrot.lane.b32.xlu0 %v644, 1
    %v1069 = vpop.permute.xlu0 %1068
    %1070 = vrot.lane.b32.xlu0 %v646, 1
    %v1071 = vpop.permute.xlu0 %1070
    %1072 = vrot.lane.b32.xlu0 %v648, 1
    %v1073 = vpop.permute.xlu0 %1072
    %1074 = vrot.lane.b32.xlu0 %v650, 1
    %v1075 = vpop.permute.xlu0 %1074
    %1076 = vrot.lane.b32.xlu0 %v652, 1
    %v1077 = vpop.permute.xlu0 %1076
    %1078 = vrot.lane.b32.xlu0 %v654, 1
    %v1079 = vpop.permute.xlu0 %1078
    %1080 = vrot.lane.b32.xlu0 %v656, 1
    %v1081 = vpop.permute.xlu0 %1080
    %1082 = vrot.lane.b32.xlu0 %v658, 1
    %v1083 = vpop.permute.xlu0 %1082
    %1084 = vrot.lane.b32.xlu0 %v660, 1
    %v1085 = vpop.permute.xlu0 %1084
    %1086 = vrot.lane.b32.xlu0 %v662, 1
    %v1087 = vpop.permute.xlu0 %1086
    %1088 = vrot.lane.b32.xlu0 %v664, 1
    %v1089 = vpop.permute.xlu0 %1088
    %1090 = vrot.lane.b32.xlu0 %v666, 1
    %v1091 = vpop.permute.xlu0 %1090
    %1092 = vrot.lane.b32.xlu0 %v668, 1
    %v1093 = vpop.permute.xlu0 %1092
    %1094 = vrot.lane.b32.xlu0 %v639, 1
    %v1095 = vpop.permute.xlu0 %1094
    %1096 = vrot.lane.b32.xlu0 %v641, 1
    %v1097 = vpop.permute.xlu0 %1096
    %1098 = vrot.lane.b32.xlu0 %v643, 1
    %v1099 = vpop.permute.xlu0 %1098
    %1100 = vrot.lane.b32.xlu0 %v645, 1
    %v1101 = vpop.permute.xlu0 %1100
    %1102 = vrot.lane.b32.xlu0 %v647, 1
    %v1103 = vpop.permute.xlu0 %1102
    %1104 = vrot.lane.b32.xlu0 %v649, 1
    %v1105 = vpop.permute.xlu0 %1104
    %1106 = vrot.lane.b32.xlu0 %v651, 1
    %v1107 = vpop.permute.xlu0 %1106
    %1108 = vrot.lane.b32.xlu0 %v653, 1
    %v1109 = vpop.permute.xlu0 %1108
    %1110 = vrot.lane.b32.xlu0 %v655, 1
    %v1111 = vpop.permute.xlu0 %1110
    %1112 = vrot.lane.b32.xlu0 %v657, 1
    %v1113 = vpop.permute.xlu0 %1112
    %1114 = vrot.lane.b32.xlu0 %v659, 1
    %v1115 = vpop.permute.xlu0 %1114
    %1116 = vrot.lane.b32.xlu0 %v661, 1
    %v1117 = vpop.permute.xlu0 %1116
    %1118 = vrot.lane.b32.xlu0 %v663, 1
    %v1119 = vpop.permute.xlu0 %1118
    %1120 = vrot.lane.b32.xlu0 %v665, 1
    %v1121 = vpop.permute.xlu0 %1120
    %1122 = vrot.lane.b32.xlu0 %v667, 1
    %v1123 = vpop.permute.xlu0 %1122
    %1124 = vrot.lane.b32.xlu0 %v669, 1
    %v1125 = vpop.permute.xlu0 %1124
    %v1126 = vsel %vm182, %v1063, %v1095
    %v1127 = vsel %vm182, %v1065, %v1097
    %v1128 = vsel %vm182, %v1067, %v1099
    %v1129 = vsel %vm182, %v1069, %v1101
    %v1130 = vsel %vm182, %v1071, %v1103
    %v1131 = vsel %vm182, %v1073, %v1105
    %v1132 = vsel %vm182, %v1075, %v1107
    %v1133 = vsel %vm182, %v1077, %v1109
    %v1134 = vsel %vm182, %v1079, %v1111
    %v1135 = vsel %vm182, %v1081, %v1113
    %v1136 = vsel %vm182, %v1083, %v1115
    %v1137 = vsel %vm182, %v1085, %v1117
    %v1138 = vsel %vm182, %v1087, %v1119
    %v1139 = vsel %vm182, %v1089, %v1121
    %v1140 = vsel %vm182, %v1091, %v1123
    %v1141 = vsel %vm182, %v1093, %v1125
    %v1142 = vsel %vm182, %v1095, %v1063
    %v1143 = vsel %vm182, %v1097, %v1065
    %v1144 = vsel %vm182, %v1099, %v1067
    %v1145 = vsel %vm182, %v1101, %v1069
    %v1146 = vsel %vm182, %v1103, %v1071
    %v1147 = vsel %vm182, %v1105, %v1073
    %v1148 = vsel %vm182, %v1107, %v1075
    %v1149 = vsel %vm182, %v1109, %v1077
    %v1150 = vsel %vm182, %v1111, %v1079
    %v1151 = vsel %vm182, %v1113, %v1081
    %v1152 = vsel %vm182, %v1115, %v1083
    %v1153 = vsel %vm182, %v1117, %v1085
    %v1154 = vsel %vm182, %v1119, %v1087
    %v1155 = vsel %vm182, %v1121, %v1089
    %v1156 = vsel %vm182, %v1123, %v1091
    %v1157 = vsel %vm182, %v1125, %v1093
    %v1158 = vsel %vm196, %v1142, 0.0
    %v1159 = vsel %vm197, %v1126, 0.0
    %v1160 = vsel %vm196, %v1143, 0.0
    %v1161 = vsel %vm197, %v1127, 0.0
    %v1162 = vsel %vm196, %v1144, 0.0
    %v1163 = vsel %vm197, %v1128, 0.0
    %v1164 = vsel %vm196, %v1145, 0.0
    %v1165 = vsel %vm197, %v1129, 0.0
    %v1166 = vsel %vm196, %v1146, 0.0
    %v1167 = vsel %vm197, %v1130, 0.0
    %v1168 = vsel %vm196, %v1147, 0.0
    %v1169 = vsel %vm197, %v1131, 0.0
    %v1170 = vsel %vm196, %v1148, 0.0
    %v1171 = vsel %vm197, %v1132, 0.0
    %v1172 = vsel %vm196, %v1149, 0.0
    %v1173 = vsel %vm197, %v1133, 0.0
    %v1174 = vsel %vm196, %v1150, 0.0
    %v1175 = vsel %vm197, %v1134, 0.0
    %v1176 = vsel %vm196, %v1151, 0.0
    %v1177 = vsel %vm197, %v1135, 0.0
    %v1178 = vsel %vm196, %v1152, 0.0
    %v1179 = vsel %vm197, %v1136, 0.0
    %v1180 = vsel %vm196, %v1153, 0.0
    %v1181 = vsel %vm197, %v1137, 0.0
    %v1182 = vsel %vm196, %v1154, 0.0
    %v1183 = vsel %vm197, %v1138, 0.0
    %v1184 = vsel %vm196, %v1155, 0.0
    %v1185 = vsel %vm197, %v1139, 0.0
    %v1186 = vsel %vm196, %v1156, 0.0
    %v1187 = vsel %vm197, %v1140, 0.0
    %v1188 = vsel %vm196, %v1157, 0.0
    %v1189 = vsel %vm197, %v1141, 0.0
    %1190 = vrot.lane.b32.xlu0 %v638, 127
    %v1191 = vpop.permute.xlu0 %1190
    %1192 = vrot.lane.b32.xlu0 %v640, 127
    %v1193 = vpop.permute.xlu0 %1192
    %1194 = vrot.lane.b32.xlu0 %v642, 127
    %v1195 = vpop.permute.xlu0 %1194
    %1196 = vrot.lane.b32.xlu0 %v644, 127
    %v1197 = vpop.permute.xlu0 %1196
    %1198 = vrot.lane.b32.xlu0 %v646, 127
    %v1199 = vpop.permute.xlu0 %1198
    %1200 = vrot.lane.b32.xlu0 %v648, 127
    %v1201 = vpop.permute.xlu0 %1200
    %1202 = vrot.lane.b32.xlu0 %v650, 127
    %v1203 = vpop.permute.xlu0 %1202
    %1204 = vrot.lane.b32.xlu0 %v652, 127
    %v1205 = vpop.permute.xlu0 %1204
    %1206 = vrot.lane.b32.xlu0 %v654, 127
    %v1207 = vpop.permute.xlu0 %1206
    %1208 = vrot.lane.b32.xlu0 %v656, 127
    %v1209 = vpop.permute.xlu0 %1208
    %1210 = vrot.lane.b32.xlu0 %v658, 127
    %v1211 = vpop.permute.xlu0 %1210
    %1212 = vrot.lane.b32.xlu0 %v660, 127
    %v1213 = vpop.permute.xlu0 %1212
    %1214 = vrot.lane.b32.xlu0 %v662, 127
    %v1215 = vpop.permute.xlu0 %1214
    %1216 = vrot.lane.b32.xlu0 %v664, 127
    %v1217 = vpop.permute.xlu0 %1216
    %1218 = vrot.lane.b32.xlu0 %v666, 127
    %v1219 = vpop.permute.xlu0 %1218
    %1220 = vrot.lane.b32.xlu0 %v668, 127
    %v1221 = vpop.permute.xlu0 %1220
    %1222 = vrot.lane.b32.xlu0 %v639, 127
    %v1223 = vpop.permute.xlu0 %1222
    %1224 = vrot.lane.b32.xlu0 %v641, 127
    %v1225 = vpop.permute.xlu0 %1224
    %1226 = vrot.lane.b32.xlu0 %v643, 127
    %v1227 = vpop.permute.xlu0 %1226
    %1228 = vrot.lane.b32.xlu0 %v645, 127
    %v1229 = vpop.permute.xlu0 %1228
    %1230 = vrot.lane.b32.xlu0 %v647, 127
    %v1231 = vpop.permute.xlu0 %1230
    %1232 = vrot.lane.b32.xlu0 %v649, 127
    %v1233 = vpop.permute.xlu0 %1232
    %1234 = vrot.lane.b32.xlu0 %v651, 127
    %v1235 = vpop.permute.xlu0 %1234
    %1236 = vrot.lane.b32.xlu0 %v653, 127
    %v1237 = vpop.permute.xlu0 %1236
    %1238 = vrot.lane.b32.xlu0 %v655, 127
    %v1239 = vpop.permute.xlu0 %1238
    %1240 = vrot.lane.b32.xlu0 %v657, 127
    %v1241 = vpop.permute.xlu0 %1240
    %1242 = vrot.lane.b32.xlu0 %v659, 127
    %v1243 = vpop.permute.xlu0 %1242
    %1244 = vrot.lane.b32.xlu0 %v661, 127
    %v1245 = vpop.permute.xlu0 %1244
    %1246 = vrot.lane.b32.xlu0 %v663, 127
    %v1247 = vpop.permute.xlu0 %1246
    %1248 = vrot.lane.b32.xlu0 %v665, 127
    %v1249 = vpop.permute.xlu0 %1248
    %1250 = vrot.lane.b32.xlu0 %v667, 127
    %v1251 = vpop.permute.xlu0 %1250
    %1252 = vrot.lane.b32.xlu0 %v669, 127
    %v1253 = vpop.permute.xlu0 %1252
    %v1254 = vsel %vm210, %v1191, %v1223
    %v1255 = vsel %vm210, %v1193, %v1225
    %v1256 = vsel %vm210, %v1195, %v1227
    %v1257 = vsel %vm210, %v1197, %v1229
    %v1258 = vsel %vm210, %v1199, %v1231
    %v1259 = vsel %vm210, %v1201, %v1233
    %v1260 = vsel %vm210, %v1203, %v1235
    %v1261 = vsel %vm210, %v1205, %v1237
    %v1262 = vsel %vm210, %v1207, %v1239
    %v1263 = vsel %vm210, %v1209, %v1241
    %v1264 = vsel %vm210, %v1211, %v1243
    %v1265 = vsel %vm210, %v1213, %v1245
    %v1266 = vsel %vm210, %v1215, %v1247
    %v1267 = vsel %vm210, %v1217, %v1249
    %v1268 = vsel %vm210, %v1219, %v1251
    %v1269 = vsel %vm210, %v1221, %v1253
    %v1270 = vsel %vm210, %v1223, %v1191
    %v1271 = vsel %vm210, %v1225, %v1193
    %v1272 = vsel %vm210, %v1227, %v1195
    %v1273 = vsel %vm210, %v1229, %v1197
    %v1274 = vsel %vm210, %v1231, %v1199
    %v1275 = vsel %vm210, %v1233, %v1201
    %v1276 = vsel %vm210, %v1235, %v1203
    %v1277 = vsel %vm210, %v1237, %v1205
    %v1278 = vsel %vm210, %v1239, %v1207
    %v1279 = vsel %vm210, %v1241, %v1209
    %v1280 = vsel %vm210, %v1243, %v1211
    %v1281 = vsel %vm210, %v1245, %v1213
    %v1282 = vsel %vm210, %v1247, %v1215
    %v1283 = vsel %vm210, %v1249, %v1217
    %v1284 = vsel %vm210, %v1251, %v1219
    %v1285 = vsel %vm210, %v1253, %v1221
    %v1286 = vsel %vm224, %v1254, 0.0
    %v1287 = vsel %vm225, %v1270, 0.0
    %v1288 = vsel %vm224, %v1255, 0.0
    %v1289 = vsel %vm225, %v1271, 0.0
    %v1290 = vsel %vm224, %v1256, 0.0
    %v1291 = vsel %vm225, %v1272, 0.0
    %v1292 = vsel %vm224, %v1257, 0.0
    %v1293 = vsel %vm225, %v1273, 0.0
    %v1294 = vsel %vm224, %v1258, 0.0
    %v1295 = vsel %vm225, %v1274, 0.0
    %v1296 = vsel %vm224, %v1259, 0.0
    %v1297 = vsel %vm225, %v1275, 0.0
    %v1298 = vsel %vm224, %v1260, 0.0
    %v1299 = vsel %vm225, %v1276, 0.0
    %v1300 = vsel %vm224, %v1261, 0.0
    %v1301 = vsel %vm225, %v1277, 0.0
    %v1302 = vsel %vm224, %v1262, 0.0
    %v1303 = vsel %vm225, %v1278, 0.0
    %v1304 = vsel %vm224, %v1263, 0.0
    %v1305 = vsel %vm225, %v1279, 0.0
    %v1306 = vsel %vm224, %v1264, 0.0
    %v1307 = vsel %vm225, %v1280, 0.0
    %v1308 = vsel %vm224, %v1265, 0.0
    %v1309 = vsel %vm225, %v1281, 0.0
    %v1310 = vsel %vm224, %v1266, 0.0
    %v1311 = vsel %vm225, %v1282, 0.0
    %v1312 = vsel %vm224, %v1267, 0.0
    %v1313 = vsel %vm225, %v1283, 0.0
    %v1314 = vsel %vm224, %v1268, 0.0
    %v1315 = vsel %vm225, %v1284, 0.0
    %v1316 = vsel %vm224, %v1269, 0.0
    %v1317 = vsel %vm225, %v1285, 0.0
    %1318 = vrot.lane.b32.xlu0 %v638, 113
    %v1319 = vpop.permute.xlu0 %1318
    %1320 = vrot.lane.b32.xlu0 %v640, 113
    %v1321 = vpop.permute.xlu0 %1320
    %1322 = vrot.lane.b32.xlu0 %v642, 113
    %v1323 = vpop.permute.xlu0 %1322
    %1324 = vrot.lane.b32.xlu0 %v644, 113
    %v1325 = vpop.permute.xlu0 %1324
    %1326 = vrot.lane.b32.xlu0 %v646, 113
    %v1327 = vpop.permute.xlu0 %1326
    %1328 = vrot.lane.b32.xlu0 %v648, 113
    %v1329 = vpop.permute.xlu0 %1328
    %1330 = vrot.lane.b32.xlu0 %v650, 113
    %v1331 = vpop.permute.xlu0 %1330
    %1332 = vrot.lane.b32.xlu0 %v652, 113
    %v1333 = vpop.permute.xlu0 %1332
    %1334 = vrot.lane.b32.xlu0 %v654, 113
    %v1335 = vpop.permute.xlu0 %1334
    %1336 = vrot.lane.b32.xlu0 %v656, 113
    %v1337 = vpop.permute.xlu0 %1336
    %1338 = vrot.lane.b32.xlu0 %v658, 113
    %v1339 = vpop.permute.xlu0 %1338
    %1340 = vrot.lane.b32.xlu0 %v660, 113
    %v1341 = vpop.permute.xlu0 %1340
    %1342 = vrot.lane.b32.xlu0 %v662, 113
    %v1343 = vpop.permute.xlu0 %1342
    %1344 = vrot.lane.b32.xlu0 %v664, 113
    %v1345 = vpop.permute.xlu0 %1344
    %1346 = vrot.lane.b32.xlu0 %v666, 113
    %v1347 = vpop.permute.xlu0 %1346
    %1348 = vrot.lane.b32.xlu0 %v668, 113
    %v1349 = vpop.permute.xlu0 %1348
    %1350 = vrot.lane.b32.xlu0 %v639, 113
    %v1351 = vpop.permute.xlu0 %1350
    %1352 = vrot.lane.b32.xlu0 %v641, 113
    %v1353 = vpop.permute.xlu0 %1352
    %1354 = vrot.lane.b32.xlu0 %v643, 113
    %v1355 = vpop.permute.xlu0 %1354
    %1356 = vrot.lane.b32.xlu0 %v645, 113
    %v1357 = vpop.permute.xlu0 %1356
    %1358 = vrot.lane.b32.xlu0 %v647, 113
    %v1359 = vpop.permute.xlu0 %1358
    %1360 = vrot.lane.b32.xlu0 %v649, 113
    %v1361 = vpop.permute.xlu0 %1360
    %1362 = vrot.lane.b32.xlu0 %v651, 113
    %v1363 = vpop.permute.xlu0 %1362
    %1364 = vrot.lane.b32.xlu0 %v653, 113
    %v1365 = vpop.permute.xlu0 %1364
    %1366 = vrot.lane.b32.xlu0 %v655, 113
    %v1367 = vpop.permute.xlu0 %1366
    %1368 = vrot.lane.b32.xlu0 %v657, 113
    %v1369 = vpop.permute.xlu0 %1368
    %1370 = vrot.lane.b32.xlu0 %v659, 113
    %v1371 = vpop.permute.xlu0 %1370
    %1372 = vrot.lane.b32.xlu0 %v661, 113
    %v1373 = vpop.permute.xlu0 %1372
    %1374 = vrot.lane.b32.xlu0 %v663, 113
    %v1375 = vpop.permute.xlu0 %1374
    %1376 = vrot.lane.b32.xlu0 %v665, 113
    %v1377 = vpop.permute.xlu0 %1376
    %1378 = vrot.lane.b32.xlu0 %v667, 113
    %v1379 = vpop.permute.xlu0 %1378
    %1380 = vrot.lane.b32.xlu0 %v669, 113
    %v1381 = vpop.permute.xlu0 %1380
    %v1382 = vsel %vm238, %v1319, %v1351
    %v1383 = vsel %vm238, %v1321, %v1353
    %v1384 = vsel %vm238, %v1323, %v1355
    %v1385 = vsel %vm238, %v1325, %v1357
    %v1386 = vsel %vm238, %v1327, %v1359
    %v1387 = vsel %vm238, %v1329, %v1361
    %v1388 = vsel %vm238, %v1331, %v1363
    %v1389 = vsel %vm238, %v1333, %v1365
    %v1390 = vsel %vm238, %v1335, %v1367
    %v1391 = vsel %vm238, %v1337, %v1369
    %v1392 = vsel %vm238, %v1339, %v1371
    %v1393 = vsel %vm238, %v1341, %v1373
    %v1394 = vsel %vm238, %v1343, %v1375
    %v1395 = vsel %vm238, %v1345, %v1377
    %v1396 = vsel %vm238, %v1347, %v1379
    %v1397 = vsel %vm238, %v1349, %v1381
    %v1398 = vsel %vm238, %v1351, %v1319
    %v1399 = vsel %vm238, %v1353, %v1321
    %v1400 = vsel %vm238, %v1355, %v1323
    %v1401 = vsel %vm238, %v1357, %v1325
    %v1402 = vsel %vm238, %v1359, %v1327
    %v1403 = vsel %vm238, %v1361, %v1329
    %v1404 = vsel %vm238, %v1363, %v1331
    %v1405 = vsel %vm238, %v1365, %v1333
    %v1406 = vsel %vm238, %v1367, %v1335
    %v1407 = vsel %vm238, %v1369, %v1337
    %v1408 = vsel %vm238, %v1371, %v1339
    %v1409 = vsel %vm238, %v1373, %v1341
    %v1410 = vsel %vm238, %v1375, %v1343
    %v1411 = vsel %vm238, %v1377, %v1345
    %v1412 = vsel %vm238, %v1379, %v1347
    %v1413 = vsel %vm238, %v1381, %v1349
    %v1414 = vsel %vm252, %v1382, 0.0
    %v1415 = vsel %vm253, %v1398, 0.0
    %v1416 = vsel %vm252, %v1383, 0.0
    %v1417 = vsel %vm253, %v1399, 0.0
    %v1418 = vsel %vm252, %v1384, 0.0
    %v1419 = vsel %vm253, %v1400, 0.0
    %v1420 = vsel %vm252, %v1385, 0.0
    %v1421 = vsel %vm253, %v1401, 0.0
    %v1422 = vsel %vm252, %v1386, 0.0
    %v1423 = vsel %vm253, %v1402, 0.0
    %v1424 = vsel %vm252, %v1387, 0.0
    %v1425 = vsel %vm253, %v1403, 0.0
    %v1426 = vsel %vm252, %v1388, 0.0
    %v1427 = vsel %vm253, %v1404, 0.0
    %v1428 = vsel %vm252, %v1389, 0.0
    %v1429 = vsel %vm253, %v1405, 0.0
    %v1430 = vsel %vm252, %v1390, 0.0
    %v1431 = vsel %vm253, %v1406, 0.0
    %v1432 = vsel %vm252, %v1391, 0.0
    %v1433 = vsel %vm253, %v1407, 0.0
    %v1434 = vsel %vm252, %v1392, 0.0
    %v1435 = vsel %vm253, %v1408, 0.0
    %v1436 = vsel %vm252, %v1393, 0.0
    %v1437 = vsel %vm253, %v1409, 0.0
    %v1438 = vsel %vm252, %v1394, 0.0
    %v1439 = vsel %vm253, %v1410, 0.0
    %v1440 = vsel %vm252, %v1395, 0.0
    %v1441 = vsel %vm253, %v1411, 0.0
    %v1442 = vsel %vm252, %v1396, 0.0
    %v1443 = vsel %vm253, %v1412, 0.0
    %v1444 = vsel %vm252, %v1397, 0.0
    %v1445 = vsel %vm253, %v1413, 0.0
    %1446 = vrot.lane.b32.xlu0 %v638, 112
    %v1447 = vpop.permute.xlu0 %1446
    %1448 = vrot.lane.b32.xlu0 %v640, 112
    %v1449 = vpop.permute.xlu0 %1448
    %1450 = vrot.lane.b32.xlu0 %v642, 112
    %v1451 = vpop.permute.xlu0 %1450
    %1452 = vrot.lane.b32.xlu0 %v644, 112
    %v1453 = vpop.permute.xlu0 %1452
    %1454 = vrot.lane.b32.xlu0 %v646, 112
    %v1455 = vpop.permute.xlu0 %1454
    %1456 = vrot.lane.b32.xlu0 %v648, 112
    %v1457 = vpop.permute.xlu0 %1456
    %1458 = vrot.lane.b32.xlu0 %v650, 112
    %v1459 = vpop.permute.xlu0 %1458
    %1460 = vrot.lane.b32.xlu0 %v652, 112
    %v1461 = vpop.permute.xlu0 %1460
    %1462 = vrot.lane.b32.xlu0 %v654, 112
    %v1463 = vpop.permute.xlu0 %1462
    %1464 = vrot.lane.b32.xlu0 %v656, 112
    %v1465 = vpop.permute.xlu0 %1464
    %1466 = vrot.lane.b32.xlu0 %v658, 112
    %v1467 = vpop.permute.xlu0 %1466
    %1468 = vrot.lane.b32.xlu0 %v660, 112
    %v1469 = vpop.permute.xlu0 %1468
    %1470 = vrot.lane.b32.xlu0 %v662, 112
    %v1471 = vpop.permute.xlu0 %1470
    %1472 = vrot.lane.b32.xlu0 %v664, 112
    %v1473 = vpop.permute.xlu0 %1472
    %1474 = vrot.lane.b32.xlu0 %v666, 112
    %v1475 = vpop.permute.xlu0 %1474
    %1476 = vrot.lane.b32.xlu0 %v668, 112
    %v1477 = vpop.permute.xlu0 %1476
    %1478 = vrot.lane.b32.xlu0 %v639, 112
    %v1479 = vpop.permute.xlu0 %1478
    %1480 = vrot.lane.b32.xlu0 %v641, 112
    %v1481 = vpop.permute.xlu0 %1480
    %1482 = vrot.lane.b32.xlu0 %v643, 112
    %v1483 = vpop.permute.xlu0 %1482
    %1484 = vrot.lane.b32.xlu0 %v645, 112
    %v1485 = vpop.permute.xlu0 %1484
    %1486 = vrot.lane.b32.xlu0 %v647, 112
    %v1487 = vpop.permute.xlu0 %1486
    %1488 = vrot.lane.b32.xlu0 %v649, 112
    %v1489 = vpop.permute.xlu0 %1488
    %1490 = vrot.lane.b32.xlu0 %v651, 112
    %v1491 = vpop.permute.xlu0 %1490
    %1492 = vrot.lane.b32.xlu0 %v653, 112
    %v1493 = vpop.permute.xlu0 %1492
    %1494 = vrot.lane.b32.xlu0 %v655, 112
    %v1495 = vpop.permute.xlu0 %1494
    %1496 = vrot.lane.b32.xlu0 %v657, 112
    %v1497 = vpop.permute.xlu0 %1496
    %1498 = vrot.lane.b32.xlu0 %v659, 112
    %v1499 = vpop.permute.xlu0 %1498
    %1500 = vrot.lane.b32.xlu0 %v661, 112
    %v1501 = vpop.permute.xlu0 %1500
    %1502 = vrot.lane.b32.xlu0 %v663, 112
    %v1503 = vpop.permute.xlu0 %1502
    %1504 = vrot.lane.b32.xlu0 %v665, 112
    %v1505 = vpop.permute.xlu0 %1504
    %1506 = vrot.lane.b32.xlu0 %v667, 112
    %v1507 = vpop.permute.xlu0 %1506
    %1508 = vrot.lane.b32.xlu0 %v669, 112
    %v1509 = vpop.permute.xlu0 %1508
    %v1510 = vsel %vm266, %v1447, %v1479
    %v1511 = vsel %vm266, %v1449, %v1481
    %v1512 = vsel %vm266, %v1451, %v1483
    %v1513 = vsel %vm266, %v1453, %v1485
    %v1514 = vsel %vm266, %v1455, %v1487
    %v1515 = vsel %vm266, %v1457, %v1489
    %v1516 = vsel %vm266, %v1459, %v1491
    %v1517 = vsel %vm266, %v1461, %v1493
    %v1518 = vsel %vm266, %v1463, %v1495
    %v1519 = vsel %vm266, %v1465, %v1497
    %v1520 = vsel %vm266, %v1467, %v1499
    %v1521 = vsel %vm266, %v1469, %v1501
    %v1522 = vsel %vm266, %v1471, %v1503
    %v1523 = vsel %vm266, %v1473, %v1505
    %v1524 = vsel %vm266, %v1475, %v1507
    %v1525 = vsel %vm266, %v1477, %v1509
    %v1526 = vsel %vm266, %v1479, %v1447
    %v1527 = vsel %vm266, %v1481, %v1449
    %v1528 = vsel %vm266, %v1483, %v1451
    %v1529 = vsel %vm266, %v1485, %v1453
    %v1530 = vsel %vm266, %v1487, %v1455
    %v1531 = vsel %vm266, %v1489, %v1457
    %v1532 = vsel %vm266, %v1491, %v1459
    %v1533 = vsel %vm266, %v1493, %v1461
    %v1534 = vsel %vm266, %v1495, %v1463
    %v1535 = vsel %vm266, %v1497, %v1465
    %v1536 = vsel %vm266, %v1499, %v1467
    %v1537 = vsel %vm266, %v1501, %v1469
    %v1538 = vsel %vm266, %v1503, %v1471
    %v1539 = vsel %vm266, %v1505, %v1473
    %v1540 = vsel %vm266, %v1507, %v1475
    %v1541 = vsel %vm266, %v1509, %v1477
    %v1542 = vsel %vm280, %v1510, 0.0
    %v1543 = vsel %vm281, %v1526, 0.0
    %v1544 = vsel %vm280, %v1511, 0.0
    %v1545 = vsel %vm281, %v1527, 0.0
    %v1546 = vsel %vm280, %v1512, 0.0
    %v1547 = vsel %vm281, %v1528, 0.0
    %v1548 = vsel %vm280, %v1513, 0.0
    %v1549 = vsel %vm281, %v1529, 0.0
    %v1550 = vsel %vm280, %v1514, 0.0
    %v1551 = vsel %vm281, %v1530, 0.0
    %v1552 = vsel %vm280, %v1515, 0.0
    %v1553 = vsel %vm281, %v1531, 0.0
    %v1554 = vsel %vm280, %v1516, 0.0
    %v1555 = vsel %vm281, %v1532, 0.0
    %v1556 = vsel %vm280, %v1517, 0.0
    %v1557 = vsel %vm281, %v1533, 0.0
    %v1558 = vsel %vm280, %v1518, 0.0
    %v1559 = vsel %vm281, %v1534, 0.0
    %v1560 = vsel %vm280, %v1519, 0.0
    %v1561 = vsel %vm281, %v1535, 0.0
    %v1562 = vsel %vm280, %v1520, 0.0
    %v1563 = vsel %vm281, %v1536, 0.0
    %v1564 = vsel %vm280, %v1521, 0.0
    %v1565 = vsel %vm281, %v1537, 0.0
    %v1566 = vsel %vm280, %v1522, 0.0
    %v1567 = vsel %vm281, %v1538, 0.0
    %v1568 = vsel %vm280, %v1523, 0.0
    %v1569 = vsel %vm281, %v1539, 0.0
    %v1570 = vsel %vm280, %v1524, 0.0
    %v1571 = vsel %vm281, %v1540, 0.0
    %v1572 = vsel %vm280, %v1525, 0.0
    %v1573 = vsel %vm281, %v1541, 0.0
    %1574 = vrot.lane.b32.xlu0 %v638, 111
    %v1575 = vpop.permute.xlu0 %1574
    %1576 = vrot.lane.b32.xlu0 %v640, 111
    %v1577 = vpop.permute.xlu0 %1576
    %1578 = vrot.lane.b32.xlu0 %v642, 111
    %v1579 = vpop.permute.xlu0 %1578
    %1580 = vrot.lane.b32.xlu0 %v644, 111
    %v1581 = vpop.permute.xlu0 %1580
    %1582 = vrot.lane.b32.xlu0 %v646, 111
    %v1583 = vpop.permute.xlu0 %1582
    %1584 = vrot.lane.b32.xlu0 %v648, 111
    %v1585 = vpop.permute.xlu0 %1584
    %1586 = vrot.lane.b32.xlu0 %v650, 111
    %v1587 = vpop.permute.xlu0 %1586
    %1588 = vrot.lane.b32.xlu0 %v652, 111
    %v1589 = vpop.permute.xlu0 %1588
    %1590 = vrot.lane.b32.xlu0 %v654, 111
    %v1591 = vpop.permute.xlu0 %1590
    %1592 = vrot.lane.b32.xlu0 %v656, 111
    %v1593 = vpop.permute.xlu0 %1592
    %1594 = vrot.lane.b32.xlu0 %v658, 111
    %v1595 = vpop.permute.xlu0 %1594
    %1596 = vrot.lane.b32.xlu0 %v660, 111
    %v1597 = vpop.permute.xlu0 %1596
    %1598 = vrot.lane.b32.xlu0 %v662, 111
    %v1599 = vpop.permute.xlu0 %1598
    %1600 = vrot.lane.b32.xlu0 %v664, 111
    %v1601 = vpop.permute.xlu0 %1600
    %1602 = vrot.lane.b32.xlu0 %v666, 111
    %v1603 = vpop.permute.xlu0 %1602
    %1604 = vrot.lane.b32.xlu0 %v668, 111
    %v1605 = vpop.permute.xlu0 %1604
    %1606 = vrot.lane.b32.xlu0 %v639, 111
    %v1607 = vpop.permute.xlu0 %1606
    %1608 = vrot.lane.b32.xlu0 %v641, 111
    %v1609 = vpop.permute.xlu0 %1608
    %1610 = vrot.lane.b32.xlu0 %v643, 111
    %v1611 = vpop.permute.xlu0 %1610
    %1612 = vrot.lane.b32.xlu0 %v645, 111
    %v1613 = vpop.permute.xlu0 %1612
    %1614 = vrot.lane.b32.xlu0 %v647, 111
    %v1615 = vpop.permute.xlu0 %1614
    %1616 = vrot.lane.b32.xlu0 %v649, 111
    %v1617 = vpop.permute.xlu0 %1616
    %1618 = vrot.lane.b32.xlu0 %v651, 111
    %v1619 = vpop.permute.xlu0 %1618
    %1620 = vrot.lane.b32.xlu0 %v653, 111
    %v1621 = vpop.permute.xlu0 %1620
    %1622 = vrot.lane.b32.xlu0 %v655, 111
    %v1623 = vpop.permute.xlu0 %1622
    %1624 = vrot.lane.b32.xlu0 %v657, 111
    %v1625 = vpop.permute.xlu0 %1624
    %1626 = vrot.lane.b32.xlu0 %v659, 111
    %v1627 = vpop.permute.xlu0 %1626
    %1628 = vrot.lane.b32.xlu0 %v661, 111
    %v1629 = vpop.permute.xlu0 %1628
    %1630 = vrot.lane.b32.xlu0 %v663, 111
    %v1631 = vpop.permute.xlu0 %1630
    %1632 = vrot.lane.b32.xlu0 %v665, 111
    %v1633 = vpop.permute.xlu0 %1632
    %1634 = vrot.lane.b32.xlu0 %v667, 111
    %v1635 = vpop.permute.xlu0 %1634
    %1636 = vrot.lane.b32.xlu0 %v669, 111
    %v1637 = vpop.permute.xlu0 %1636
    %v1638 = vsel %vm294, %v1575, %v1607
    %v1639 = vsel %vm294, %v1577, %v1609
    %v1640 = vsel %vm294, %v1579, %v1611
    %v1641 = vsel %vm294, %v1581, %v1613
    %v1642 = vsel %vm294, %v1583, %v1615
    %v1643 = vsel %vm294, %v1585, %v1617
    %v1644 = vsel %vm294, %v1587, %v1619
    %v1645 = vsel %vm294, %v1589, %v1621
    %v1646 = vsel %vm294, %v1591, %v1623
    %v1647 = vsel %vm294, %v1593, %v1625
    %v1648 = vsel %vm294, %v1595, %v1627
    %v1649 = vsel %vm294, %v1597, %v1629
    %v1650 = vsel %vm294, %v1599, %v1631
    %v1651 = vsel %vm294, %v1601, %v1633
    %v1652 = vsel %vm294, %v1603, %v1635
    %v1653 = vsel %vm294, %v1605, %v1637
    %v1654 = vsel %vm294, %v1607, %v1575
    %v1655 = vsel %vm294, %v1609, %v1577
    %v1656 = vsel %vm294, %v1611, %v1579
    %v1657 = vsel %vm294, %v1613, %v1581
    %v1658 = vsel %vm294, %v1615, %v1583
    %v1659 = vsel %vm294, %v1617, %v1585
    %v1660 = vsel %vm294, %v1619, %v1587
    %v1661 = vsel %vm294, %v1621, %v1589
    %v1662 = vsel %vm294, %v1623, %v1591
    %v1663 = vsel %vm294, %v1625, %v1593
    %v1664 = vsel %vm294, %v1627, %v1595
    %v1665 = vsel %vm294, %v1629, %v1597
    %v1666 = vsel %vm294, %v1631, %v1599
    %v1667 = vsel %vm294, %v1633, %v1601
    %v1668 = vsel %vm294, %v1635, %v1603
    %v1669 = vsel %vm294, %v1637, %v1605
    %v1670 = vsel %vm308, %v1638, 0.0
    %v1671 = vsel %vm309, %v1654, 0.0
    %v1672 = vsel %vm308, %v1639, 0.0
    %v1673 = vsel %vm309, %v1655, 0.0
    %v1674 = vsel %vm308, %v1640, 0.0
    %v1675 = vsel %vm309, %v1656, 0.0
    %v1676 = vsel %vm308, %v1641, 0.0
    %v1677 = vsel %vm309, %v1657, 0.0
    %v1678 = vsel %vm308, %v1642, 0.0
    %v1679 = vsel %vm309, %v1658, 0.0
    %v1680 = vsel %vm308, %v1643, 0.0
    %v1681 = vsel %vm309, %v1659, 0.0
    %v1682 = vsel %vm308, %v1644, 0.0
    %v1683 = vsel %vm309, %v1660, 0.0
    %v1684 = vsel %vm308, %v1645, 0.0
    %v1685 = vsel %vm309, %v1661, 0.0
    %v1686 = vsel %vm308, %v1646, 0.0
    %v1687 = vsel %vm309, %v1662, 0.0
    %v1688 = vsel %vm308, %v1647, 0.0
    %v1689 = vsel %vm309, %v1663, 0.0
    %v1690 = vsel %vm308, %v1648, 0.0
    %v1691 = vsel %vm309, %v1664, 0.0
    %v1692 = vsel %vm308, %v1649, 0.0
    %v1693 = vsel %vm309, %v1665, 0.0
    %v1694 = vsel %vm308, %v1650, 0.0
    %v1695 = vsel %vm309, %v1666, 0.0
    %v1696 = vsel %vm308, %v1651, 0.0
    %v1697 = vsel %vm309, %v1667, 0.0
    %v1698 = vsel %vm308, %v1652, 0.0
    %v1699 = vsel %vm309, %v1668, 0.0
    %v1700 = vsel %vm308, %v1653, 0.0
    %v1701 = vsel %vm309, %v1669, 0.0
    %v1702 = vpack.c.bf16 %v776, %v774
    %v1703 = vpack.c.bf16 %v777, %v775
    %v1704 = vpack.c.bf16 %v780, %v778
    %v1705 = vpack.c.bf16 %v781, %v779
    %v1706 = vpack.c.bf16 %v784, %v782
    %v1707 = vpack.c.bf16 %v785, %v783
    %v1708 = vpack.c.bf16 %v788, %v786
    %v1709 = vpack.c.bf16 %v789, %v787
    %v1710 = vpack.c.bf16 %v792, %v790
    %v1711 = vpack.c.bf16 %v793, %v791
    %v1712 = vpack.c.bf16 %v796, %v794
    %v1713 = vpack.c.bf16 %v797, %v795
    %v1714 = vpack.c.bf16 %v800, %v798
    %v1715 = vpack.c.bf16 %v801, %v799
    %v1716 = vpack.c.bf16 %v804, %v802
    %v1717 = vpack.c.bf16 %v805, %v803
    %v1718 = vpack.c.bf16 %v904, %v902
    %v1719 = vpack.c.bf16 %v905, %v903
    %v1720 = vpack.c.bf16 %v908, %v906
    %v1721 = vpack.c.bf16 %v909, %v907
    %v1722 = vpack.c.bf16 %v912, %v910
    %v1723 = vpack.c.bf16 %v913, %v911
    %v1724 = vpack.c.bf16 %v916, %v914
    %v1725 = vpack.c.bf16 %v917, %v915
    %v1726 = vpack.c.bf16 %v920, %v918
    %v1727 = vpack.c.bf16 %v921, %v919
    %v1728 = vpack.c.bf16 %v924, %v922
    %v1729 = vpack.c.bf16 %v925, %v923
    %v1730 = vpack.c.bf16 %v928, %v926
    %v1731 = vpack.c.bf16 %v929, %v927
    %v1732 = vpack.c.bf16 %v932, %v930
    %v1733 = vpack.c.bf16 %v933, %v931
    %v1734 = vpack.c.bf16 %v1032, %v1030
    %v1735 = vpack.c.bf16 %v1033, %v1031
    %v1736 = vpack.c.bf16 %v1036, %v1034
    %v1737 = vpack.c.bf16 %v1037, %v1035
    %v1738 = vpack.c.bf16 %v1040, %v1038
    %v1739 = vpack.c.bf16 %v1041, %v1039
    %v1740 = vpack.c.bf16 %v1044, %v1042
    %v1741 = vpack.c.bf16 %v1045, %v1043
    %v1742 = vpack.c.bf16 %v1048, %v1046
    %v1743 = vpack.c.bf16 %v1049, %v1047
    %v1744 = vpack.c.bf16 %v1052, %v1050
    %v1745 = vpack.c.bf16 %v1053, %v1051
    %v1746 = vpack.c.bf16 %v1056, %v1054
    %v1747 = vpack.c.bf16 %v1057, %v1055
    %v1748 = vpack.c.bf16 %v1060, %v1058
    %v1749 = vpack.c.bf16 %v1061, %v1059
    %v1750 = vpack.c.bf16 %v1160, %v1158
    %v1751 = vpack.c.bf16 %v1161, %v1159
    %v1752 = vpack.c.bf16 %v1164, %v1162
    %v1753 = vpack.c.bf16 %v1165, %v1163
    %v1754 = vpack.c.bf16 %v1168, %v1166
    %v1755 = vpack.c.bf16 %v1169, %v1167
    %v1756 = vpack.c.bf16 %v1172, %v1170
    %v1757 = vpack.c.bf16 %v1173, %v1171
    %v1758 = vpack.c.bf16 %v1176, %v1174
    %v1759 = vpack.c.bf16 %v1177, %v1175
    %v1760 = vpack.c.bf16 %v1180, %v1178
    %v1761 = vpack.c.bf16 %v1181, %v1179
    %v1762 = vpack.c.bf16 %v1184, %v1182
    %v1763 = vpack.c.bf16 %v1185, %v1183
    %v1764 = vpack.c.bf16 %v1188, %v1186
    %v1765 = vpack.c.bf16 %v1189, %v1187
    %v1766 = vpack.c.bf16 %v640, %v638
    %v1767 = vpack.c.bf16 %v641, %v639
    %v1768 = vpack.c.bf16 %v644, %v642
    %v1769 = vpack.c.bf16 %v645, %v643
    %v1770 = vpack.c.bf16 %v648, %v646
    %v1771 = vpack.c.bf16 %v649, %v647
    %v1772 = vpack.c.bf16 %v652, %v650
    %v1773 = vpack.c.bf16 %v653, %v651
    %v1774 = vpack.c.bf16 %v656, %v654
    %v1775 = vpack.c.bf16 %v657, %v655
    %v1776 = vpack.c.bf16 %v660, %v658
    %v1777 = vpack.c.bf16 %v661, %v659
    %v1778 = vpack.c.bf16 %v664, %v662
    %v1779 = vpack.c.bf16 %v665, %v663
    %v1780 = vpack.c.bf16 %v668, %v666
    %v1781 = vpack.c.bf16 %v669, %v667
    %v1782 = vpack.c.bf16 %v1288, %v1286
    %v1783 = vpack.c.bf16 %v1289, %v1287
    %v1784 = vpack.c.bf16 %v1292, %v1290
    %v1785 = vpack.c.bf16 %v1293, %v1291
    %v1786 = vpack.c.bf16 %v1296, %v1294
    %v1787 = vpack.c.bf16 %v1297, %v1295
    %v1788 = vpack.c.bf16 %v1300, %v1298
    %v1789 = vpack.c.bf16 %v1301, %v1299
    %v1790 = vpack.c.bf16 %v1304, %v1302
    %v1791 = vpack.c.bf16 %v1305, %v1303
    %v1792 = vpack.c.bf16 %v1308, %v1306
    %v1793 = vpack.c.bf16 %v1309, %v1307
    %v1794 = vpack.c.bf16 %v1312, %v1310
    %v1795 = vpack.c.bf16 %v1313, %v1311
    %v1796 = vpack.c.bf16 %v1316, %v1314
    %v1797 = vpack.c.bf16 %v1317, %v1315
    %v1798 = vpack.c.bf16 %v1416, %v1414
    %v1799 = vpack.c.bf16 %v1417, %v1415
    %v1800 = vpack.c.bf16 %v1420, %v1418
    %v1801 = vpack.c.bf16 %v1421, %v1419
    %v1802 = vpack.c.bf16 %v1424, %v1422
    %v1803 = vpack.c.bf16 %v1425, %v1423
    %v1804 = vpack.c.bf16 %v1428, %v1426
    %v1805 = vpack.c.bf16 %v1429, %v1427
    %v1806 = vpack.c.bf16 %v1432, %v1430
    %v1807 = vpack.c.bf16 %v1433, %v1431
    %v1808 = vpack.c.bf16 %v1436, %v1434
    %v1809 = vpack.c.bf16 %v1437, %v1435
    %v1810 = vpack.c.bf16 %v1440, %v1438
    %v1811 = vpack.c.bf16 %v1441, %v1439
    %v1812 = vpack.c.bf16 %v1444, %v1442
    %v1813 = vpack.c.bf16 %v1445, %v1443
    %v1814 = vpack.c.bf16 %v1544, %v1542
    %v1815 = vpack.c.bf16 %v1545, %v1543
    %v1816 = vpack.c.bf16 %v1548, %v1546
    %v1817 = vpack.c.bf16 %v1549, %v1547
    %v1818 = vpack.c.bf16 %v1552, %v1550
    %v1819 = vpack.c.bf16 %v1553, %v1551
    %v1820 = vpack.c.bf16 %v1556, %v1554
    %v1821 = vpack.c.bf16 %v1557, %v1555
    %v1822 = vpack.c.bf16 %v1560, %v1558
    %v1823 = vpack.c.bf16 %v1561, %v1559
    %v1824 = vpack.c.bf16 %v1564, %v1562
    %v1825 = vpack.c.bf16 %v1565, %v1563
    %v1826 = vpack.c.bf16 %v1568, %v1566
    %v1827 = vpack.c.bf16 %v1569, %v1567
    %v1828 = vpack.c.bf16 %v1572, %v1570
    %v1829 = vpack.c.bf16 %v1573, %v1571
    %v1830 = vpack.c.bf16 %v1672, %v1670
    %v1831 = vpack.c.bf16 %v1673, %v1671
    %v1832 = vpack.c.bf16 %v1676, %v1674
    %v1833 = vpack.c.bf16 %v1677, %v1675
    %v1834 = vpack.c.bf16 %v1680, %v1678
    %v1835 = vpack.c.bf16 %v1681, %v1679
    %v1836 = vpack.c.bf16 %v1684, %v1682
    %v1837 = vpack.c.bf16 %v1685, %v1683
    %v1838 = vpack.c.bf16 %v1688, %v1686
    %v1839 = vpack.c.bf16 %v1689, %v1687
    %v1840 = vpack.c.bf16 %v1692, %v1690
    %v1841 = vpack.c.bf16 %v1693, %v1691
    %v1842 = vpack.c.bf16 %v1696, %v1694
    %v1843 = vpack.c.bf16 %v1697, %v1695
    %v1844 = vpack.c.bf16 %v1700, %v1698
    %v1845 = vpack.c.bf16 %v1701, %v1699
    %v1846 = vld [vmem:[%s3] sm:$0xff]
    %v1847 = vld [vmem:[%s3 + $0x8] sm:$0xff]
    %v1848 = vld [vmem:[%s3 + $0x10] sm:$0xff]
    %v1849 = vld [vmem:[%s3 + $0x18] sm:$0xff]
    %v1850 = vld [vmem:[%s3 + $0x20] sm:$0xf]
    %v1851 = vld [vmem:[%s3 + $0x24] sm:$0xff]
    %v1852 = vld [vmem:[%s3 + $0x2c] sm:$0xff]
    %v1853 = vld [vmem:[%s3 + $0x34] sm:$0xff]
    %v1854 = vld [vmem:[%s3 + $0x3c] sm:$0xff]
    %v1855 = vld [vmem:[%s3 + $0x44] sm:$0xf]
    %v1856 = vld [vmem:[%s3 + $0x48] sm:$0xff]
    %v1857 = vld [vmem:[%s3 + $0x50] sm:$0xff]
    %v1858 = vld [vmem:[%s3 + $0x58] sm:$0xff]
    %v1859 = vld [vmem:[%s3 + $0x60] sm:$0xff]
    %v1860 = vld [vmem:[%s3 + $0x68] sm:$0xf]
    %v1861 = vld [vmem:[%s3 + $0x6c] sm:$0xff]
    %v1862 = vld [vmem:[%s3 + $0x74] sm:$0xff]
    %v1863 = vld [vmem:[%s3 + $0x7c] sm:$0xff]
    %v1864 = vld [vmem:[%s3 + $0x84] sm:$0xff]
    %v1865 = vld [vmem:[%s3 + $0x8c] sm:$0xf]
    %v1866 = vld [vmem:[%s3 + $0x90] sm:$0xff]
    %v1867 = vld [vmem:[%s3 + $0x98] sm:$0xff]
    %v1868 = vld [vmem:[%s3 + $0xa0] sm:$0xff]
    %v1869 = vld [vmem:[%s3 + $0xa8] sm:$0xff]
    %v1870 = vld [vmem:[%s3 + $0xb0] sm:$0xf]
    %v1871 = vld [vmem:[%s3 + $0xb4] sm:$0xff]
    %v1872 = vld [vmem:[%s3 + $0xbc] sm:$0xff]
    %v1873 = vld [vmem:[%s3 + $0xc4] sm:$0xff]
    %v1874 = vld [vmem:[%s3 + $0xcc] sm:$0xff]
    %v1875 = vld [vmem:[%s3 + $0xd4] sm:$0xf]
    %v1876 = vld [vmem:[%s3 + $0xd8] sm:$0xff]
    %v1877 = vld [vmem:[%s3 + $0xe0] sm:$0xff]
    %v1878 = vld [vmem:[%s3 + $0xe8] sm:$0xff]
    %v1879 = vld [vmem:[%s3 + $0xf0] sm:$0xff]
    %v1880 = vld [vmem:[%s3 + $0xf8] sm:$0xf]
    %v1881 = vld [vmem:[%s3 + $0xfc] sm:$0xff]
    %v1882 = vld [vmem:[%s3 + $0x104] sm:$0xff]
    %v1883 = vld [vmem:[%s3 + $0x10c] sm:$0xff]
    %v1884 = vld [vmem:[%s3 + $0x114] sm:$0xff]
    %v1885 = vld [vmem:[%s3 + $0x11c] sm:$0xf]
    %1887 = vset.pattern.permute.xlu0 0
    %1888 = vperm.xlu0 %1887, %v670
    %v1889 = vpop.permute.xlu0 %1888
    %1892 = vset.pattern.permute.xlu0 0
    %1893 = vperm.xlu0 %1892, %v671
    %v1894 = vpop.permute.xlu0 %1893
    %1897 = vset.pattern.permute.xlu0 0
    %1898 = vperm.xlu0 %1897, %v672
    %v1899 = vpop.permute.xlu0 %1898
    %1902 = vset.pattern.permute.xlu0 0
    %1903 = vperm.xlu0 %1902, %v673
    %v1904 = vpop.permute.xlu0 %1903
    %1907 = vset.pattern.permute.xlu0 0
    %1908 = vperm.xlu0 %1907, %v674
    %v1909 = vpop.permute.xlu0 %1908
    %1912 = vset.pattern.permute.xlu0 0
    %1913 = vperm.xlu0 %1912, %v675
    %v1914 = vpop.permute.xlu0 %1913
    %1917 = vset.pattern.permute.xlu0 0
    %1918 = vperm.xlu0 %1917, %v676
    %v1919 = vpop.permute.xlu0 %1918
    %1922 = vset.pattern.permute.xlu0 0
    %1923 = vperm.xlu0 %1922, %v677
    %v1924 = vpop.permute.xlu0 %1923
    %v1966 = vunpack.c.l.b16 %v1846
    %v1967 = vunpack.c.h.b16 %v1846
    %v1968 = vunpack.c.l.b16 %v1847
    %v1969 = vunpack.c.h.b16 %v1847
    %v1970 = vunpack.c.l.b16 %v1848
    %v1971 = vunpack.c.h.b16 %v1848
    %v1972 = vunpack.c.l.b16 %v1849
    %v1973 = vunpack.c.h.b16 %v1849
    %v1974 = vunpack.c.l.b16 %v1850
    %v1975 = vunpack.c.l.b16 %v1851
    %v1976 = vunpack.c.h.b16 %v1851
    %v1977 = vunpack.c.l.b16 %v1852
    %v1978 = vunpack.c.h.b16 %v1852
    %v1979 = vunpack.c.l.b16 %v1853
    %v1980 = vunpack.c.h.b16 %v1853
    %v1981 = vunpack.c.l.b16 %v1854
    %v1982 = vunpack.c.h.b16 %v1854
    %v1983 = vunpack.c.l.b16 %v1855
    %v1984 = vunpack.c.l.b16 %v1856
    %v1985 = vunpack.c.h.b16 %v1856
    %v1986 = vunpack.c.l.b16 %v1857
    %v1987 = vunpack.c.h.b16 %v1857
    %v1988 = vunpack.c.l.b16 %v1858
    %v1989 = vunpack.c.h.b16 %v1858
    %v1990 = vunpack.c.l.b16 %v1859
    %v1991 = vunpack.c.h.b16 %v1859
    %v1992 = vunpack.c.l.b16 %v1860
    %v1993 = vunpack.c.l.b16 %v1861
    %v1994 = vunpack.c.h.b16 %v1861
    %v1995 = vunpack.c.l.b16 %v1862
    %v1996 = vunpack.c.h.b16 %v1862
    %v1997 = vunpack.c.l.b16 %v1863
    %v1998 = vunpack.c.h.b16 %v1863
    %v1999 = vunpack.c.l.b16 %v1864
    %v2000 = vunpack.c.h.b16 %v1864
    %v2001 = vunpack.c.l.b16 %v1865
    %v2002 = vunpack.c.l.b16 %v1866
    %v2003 = vunpack.c.h.b16 %v1866
    %v2004 = vunpack.c.l.b16 %v1867
    %v2005 = vunpack.c.h.b16 %v1867
    %v2006 = vunpack.c.l.b16 %v1868
    %v2007 = vunpack.c.h.b16 %v1868
    %v2008 = vunpack.c.l.b16 %v1869
    %v2009 = vunpack.c.h.b16 %v1869
    %v2010 = vunpack.c.l.b16 %v1870
    %v2011 = vunpack.c.l.b16 %v1871
    %v2012 = vunpack.c.h.b16 %v1871
    %v2013 = vunpack.c.l.b16 %v1872
    %v2014 = vunpack.c.h.b16 %v1872
    %v2015 = vunpack.c.l.b16 %v1873
    %v2016 = vunpack.c.h.b16 %v1873
    %v2017 = vunpack.c.l.b16 %v1874
    %v2018 = vunpack.c.h.b16 %v1874
    %v2019 = vunpack.c.l.b16 %v1875
    %v2020 = vunpack.c.l.b16 %v1876
    %v2021 = vunpack.c.h.b16 %v1876
    %v2022 = vunpack.c.l.b16 %v1877
    %v2023 = vunpack.c.h.b16 %v1877
    %v2024 = vunpack.c.l.b16 %v1878
    %v2025 = vunpack.c.h.b16 %v1878
    %v2026 = vunpack.c.l.b16 %v1879
    %v2027 = vunpack.c.h.b16 %v1879
    %v2028 = vunpack.c.l.b16 %v1880
    %v2029 = vunpack.c.l.b16 %v1881
    %v2030 = vunpack.c.h.b16 %v1881
    %v2031 = vunpack.c.l.b16 %v1882
    %v2032 = vunpack.c.h.b16 %v1882
    %v2033 = vunpack.c.l.b16 %v1883
    %v2034 = vunpack.c.h.b16 %v1883
    %v2035 = vunpack.c.l.b16 %v1884
    %v2036 = vunpack.c.h.b16 %v1884
    %v2037 = vunpack.c.l.b16 %v1885
    %v2038 = vpack.c.b16 %v1975, %v1966
    %v2039 = vpack.c.b16 %v1976, %v1967
    %v2040 = vpack.c.b16 %v1977, %v1968
    %v2041 = vpack.c.b16 %v1978, %v1969
    %v2042 = vpack.c.b16 %v1979, %v1970
    %v2043 = vpack.c.b16 %v1980, %v1971
    %v2044 = vpack.c.b16 %v1981, %v1972
    %v2045 = vpack.c.b16 %v1982, %v1973
    %v2046 = vpack.c.b16 %v1983, %v1974
    %v2047 = vpack.c.b16 %v1993, %v1984
    %v2048 = vpack.c.b16 %v1994, %v1985
    %v2049 = vpack.c.b16 %v1995, %v1986
    %v2050 = vpack.c.b16 %v1996, %v1987
    %v2051 = vpack.c.b16 %v1997, %v1988
    %v2052 = vpack.c.b16 %v1998, %v1989
    %v2053 = vpack.c.b16 %v1999, %v1990
    %v2054 = vpack.c.b16 %v2000, %v1991
    %v2055 = vpack.c.b16 %v2001, %v1992
    %v2056 = vpack.c.b16 %v2011, %v2002
    %v2057 = vpack.c.b16 %v2012, %v2003
    %v2058 = vpack.c.b16 %v2013, %v2004
    %v2059 = vpack.c.b16 %v2014, %v2005
    %v2060 = vpack.c.b16 %v2015, %v2006
    %v2061 = vpack.c.b16 %v2016, %v2007
    %v2062 = vpack.c.b16 %v2017, %v2008
    %v2063 = vpack.c.b16 %v2018, %v2009
    %v2064 = vpack.c.b16 %v2019, %v2010
    %v2065 = vpack.c.b16 %v2029, %v2020
    %v2066 = vpack.c.b16 %v2030, %v2021
    %v2067 = vpack.c.b16 %v2031, %v2022
    %v2068 = vpack.c.b16 %v2032, %v2023
    %v2069 = vpack.c.b16 %v2033, %v2024
    %v2070 = vpack.c.b16 %v2034, %v2025
    %v2071 = vpack.c.b16 %v2035, %v2026
    %v2072 = vpack.c.b16 %v2036, %v2027
    %v2073 = vpack.c.b16 %v2037, %v2028
    %2110 = vmatprep.subr.bf16.mxu0 %v1703
    %2111 = vmatpush1.bf16.msra.mxu0 %v1702
    %2112 = vmatprep.subr.bf16.mxu0 %v1705
    %2113 = vmatpush1.bf16.msra.mxu0 %v1704
    %2114 = vmatprep.subr.bf16.mxu0 %v1707
    %2115 = vmatpush1.bf16.msra.mxu0 %v1706
    %2116 = vmatprep.subr.bf16.mxu0 %v1709
    %2117 = vmatpush1.bf16.msra.mxu0 %v1708
    %2118 = vmatprep.subr.bf16.mxu0 %v1711
    %2119 = vmatpush1.bf16.msra.mxu0 %v1710
    %2120 = vmatprep.subr.bf16.mxu0 %v1713
    %2121 = vmatpush1.bf16.msra.mxu0 %v1712
    %2122 = vmatprep.subr.bf16.mxu0 %v1715
    %2123 = vmatpush1.bf16.msra.mxu0 %v1714
    %2124 = vmatprep.subr.bf16.mxu0 %v1717
    %2125 = vmatpush1.bf16.msra.mxu0 %v1716
    %2126 = vmatprep.subr.bf16.mxu0 %v1719
    %2127 = vmatpush1.bf16.msra.mxu0 %v1718
    %2128 = vmatprep.subr.bf16.mxu0 %v1721
    %2129 = vmatpush1.bf16.msra.mxu0 %v1720
    %2130 = vmatprep.subr.bf16.mxu0 %v1723
    %2131 = vmatpush1.bf16.msra.mxu0 %v1722
    %2132 = vmatprep.subr.bf16.mxu0 %v1725
    %2133 = vmatpush1.bf16.msra.mxu0 %v1724
    %2134 = vmatprep.subr.bf16.mxu0 %v1727
    %2135 = vmatpush1.bf16.msra.mxu0 %v1726
    %2136 = vmatprep.subr.bf16.mxu0 %v1729
    %2137 = vmatpush1.bf16.msra.mxu0 %v1728
    %2138 = vmatprep.subr.bf16.mxu0 %v1731
    %2139 = vmatpush1.bf16.msra.mxu0 %v1730
    %2140 = vmatprep.subr.bf16.mxu0 %v1733
    %2141 = vmatpush1.bf16.msra.mxu0 %v1732
    %2142 = vmatprep.mubr.bf16.mxu0 %v2039
    %2143 = vmatmul.mubr.bf16.gmra.mrb[0].mxu0 %v2038
    %v2144 = vpop.f32.mrb[0].mxu0
    %v2145 = vadd.f32 %v1889, %v2144
    %v2146 = vpop.f32.mrb[0].mxu0
    %v2147 = vadd.f32 %v1889, %v2146
    %v2148 = vpop.f32.mrb[0].mxu0
    %v2149 = vadd.f32 %v1894, %v2148
    %v2150 = vpop.f32.mrb[0].mxu0
    %v2151 = vadd.f32 %v1894, %v2150
    %2152 = vmatprep.mubr.bf16.mxu0 %v2048
    %2153 = vmatmul.mubr.bf16.gmra.mrb[0].mxu0 %v2047
    %v2154 = vpop.f32.mrb[0].mxu0
    %v2155 = vadd.f32 %v1899, %v2154
    %v2156 = vpop.f32.mrb[0].mxu0
    %v2157 = vadd.f32 %v1899, %v2156
    %v2158 = vpop.f32.mrb[0].mxu0
    %v2159 = vadd.f32 %v1904, %v2158
    %v2160 = vpop.f32.mrb[0].mxu0
    %v2161 = vadd.f32 %v1904, %v2160
    %2162 = vmatprep.mubr.bf16.mxu0 %v2057
    %2163 = vmatmul.mubr.bf16.gmra.mrb[0].mxu0 %v2056
    %v2164 = vpop.f32.mrb[0].mxu0
    %v2165 = vadd.f32 %v1909, %v2164
    %v2166 = vpop.f32.mrb[0].mxu0
    %v2167 = vadd.f32 %v1909, %v2166
    %v2168 = vpop.f32.mrb[0].mxu0
    %v2169 = vadd.f32 %v1914, %v2168
    %v2170 = vpop.f32.mrb[0].mxu0
    %v2171 = vadd.f32 %v1914, %v2170
    %2172 = vmatprep.mubr.bf16.mxu0 %v2066
    %2173 = vmatmul.mubr.bf16.gmra.mrb[0].mxu0 %v2065
    %v2174 = vpop.f32.mrb[0].mxu0
    %v2175 = vadd.f32 %v1919, %v2174
    %v2176 = vpop.f32.mrb[0].mxu0
    %v2177 = vadd.f32 %v1919, %v2176
    %v2178 = vpop.f32.mrb[0].mxu0
    %v2179 = vadd.f32 %v1924, %v2178
    %v2180 = vpop.f32.mrb[0].mxu0
    %v2181 = vadd.f32 %v1924, %v2180
    %2182 = vdwg.mxu0
    %2183 = vmatprep.subr.bf16.mxu0 %v1735
    %2184 = vmatpush1.bf16.msra.mxu0 %v1734
    %2185 = vmatprep.subr.bf16.mxu0 %v1737
    %2186 = vmatpush1.bf16.msra.mxu0 %v1736
    %2187 = vmatprep.subr.bf16.mxu0 %v1739
    %2188 = vmatpush1.bf16.msra.mxu0 %v1738
    %2189 = vmatprep.subr.bf16.mxu0 %v1741
    %2190 = vmatpush1.bf16.msra.mxu0 %v1740
    %2191 = vmatprep.subr.bf16.mxu0 %v1743
    %2192 = vmatpush1.bf16.msra.mxu0 %v1742
    %2193 = vmatprep.subr.bf16.mxu0 %v1745
    %2194 = vmatpush1.bf16.msra.mxu0 %v1744
    %2195 = vmatprep.subr.bf16.mxu0 %v1747
    %2196 = vmatpush1.bf16.msra.mxu0 %v1746
    %2197 = vmatprep.subr.bf16.mxu0 %v1749
    %2198 = vmatpush1.bf16.msra.mxu0 %v1748
    %2199 = vmatprep.subr.bf16.mxu0 %v1751
    %2200 = vmatpush1.bf16.msra.mxu0 %v1750
    %2201 = vmatprep.subr.bf16.mxu0 %v1753
    %2202 = vmatpush1.bf16.msra.mxu0 %v1752
    %2203 = vmatprep.subr.bf16.mxu0 %v1755
    %2204 = vmatpush1.bf16.msra.mxu0 %v1754
    %2205 = vmatprep.subr.bf16.mxu0 %v1757
    %2206 = vmatpush1.bf16.msra.mxu0 %v1756
    %2207 = vmatprep.subr.bf16.mxu0 %v1759
    %2208 = vmatpush1.bf16.msra.mxu0 %v1758
    %2209 = vmatprep.subr.bf16.mxu0 %v1761
    %2210 = vmatpush1.bf16.msra.mxu0 %v1760
    %2211 = vmatprep.subr.bf16.mxu0 %v1763
    %2212 = vmatpush1.bf16.msra.mxu0 %v1762
    %2213 = vmatprep.subr.bf16.mxu0 %v1765
    %2214 = vmatpush1.bf16.msra.mxu0 %v1764
    %2215 = vmatprep.mubr.bf16.mxu0 %v2041
    %2216 = vmatmul.mubr.bf16.gmra.mrb[0].mxu0 %v2040
    %v2217 = vpop.f32.mrb[0].mxu0
    %v2218 = vadd.f32 %v2145, %v2217
    %v2219 = vpop.f32.mrb[0].mxu0
    %v2220 = vadd.f32 %v2147, %v2219
    %v2221 = vpop.f32.mrb[0].mxu0
    %v2222 = vadd.f32 %v2149, %v2221
    %v2223 = vpop.f32.mrb[0].mxu0
    %v2224 = vadd.f32 %v2151, %v2223
    %2225 = vmatprep.mubr.bf16.mxu0 %v2050
    %2226 = vmatmul.mubr.bf16.gmra.mrb[0].mxu0 %v2049
    %v2227 = vpop.f32.mrb[0].mxu0
    %v2228 = vadd.f32 %v2155, %v2227
    %v2229 = vpop.f32.mrb[0].mxu0
    %v2230 = vadd.f32 %v2157, %v2229
    %v2231 = vpop.f32.mrb[0].mxu0
    %v2232 = vadd.f32 %v2159, %v2231
    %v2233 = vpop.f32.mrb[0].mxu0
    %v2234 = vadd.f32 %v2161, %v2233
    %2235 = vmatprep.mubr.bf16.mxu0 %v2059
    %2236 = vmatmul.mubr.bf16.gmra.mrb[0].mxu0 %v2058
    %v2237 = vpop.f32.mrb[0].mxu0
    %v2238 = vadd.f32 %v2165, %v2237
    %v2239 = vpop.f32.mrb[0].mxu0
    %v2240 = vadd.f32 %v2167, %v2239
    %v2241 = vpop.f32.mrb[0].mxu0
    %v2242 = vadd.f32 %v2169, %v2241
    %v2243 = vpop.f32.mrb[0].mxu0
    %v2244 = vadd.f32 %v2171, %v2243
    %2245 = vmatprep.mubr.bf16.mxu0 %v2068
    %2246 = vmatmul.mubr.bf16.gmra.mrb[0].mxu0 %v2067
    %v2247 = vpop.f32.mrb[0].mxu0
    %v2248 = vadd.f32 %v2175, %v2247
    %v2249 = vpop.f32.mrb[0].mxu0
    %v2250 = vadd.f32 %v2177, %v2249
    %v2251 = vpop.f32.mrb[0].mxu0
    %v2252 = vadd.f32 %v2179, %v2251
    %v2253 = vpop.f32.mrb[0].mxu0
    %v2254 = vadd.f32 %v2181, %v2253
    %2255 = vdwg.mxu0
    %2256 = vmatprep.subr.bf16.mxu0 %v1767
    %2257 = vmatpush1.bf16.msra.mxu0 %v1766
    %2258 = vmatprep.subr.bf16.mxu0 %v1769
    %2259 = vmatpush1.bf16.msra.mxu0 %v1768
    %2260 = vmatprep.subr.bf16.mxu0 %v1771
    %2261 = vmatpush1.bf16.msra.mxu0 %v1770
    %2262 = vmatprep.subr.bf16.mxu0 %v1773
    %2263 = vmatpush1.bf16.msra.mxu0 %v1772
    %2264 = vmatprep.subr.bf16.mxu0 %v1775
    %2265 = vmatpush1.bf16.msra.mxu0 %v1774
    %2266 = vmatprep.subr.bf16.mxu0 %v1777
    %2267 = vmatpush1.bf16.msra.mxu0 %v1776
    %2268 = vmatprep.subr.bf16.mxu0 %v1779
    %2269 = vmatpush1.bf16.msra.mxu0 %v1778
    %2270 = vmatprep.subr.bf16.mxu0 %v1781
    %2271 = vmatpush1.bf16.msra.mxu0 %v1780
    %2272 = vmatprep.subr.bf16.mxu0 %v1783
    %2273 = vmatpush1.bf16.msra.mxu0 %v1782
    %2274 = vmatprep.subr.bf16.mxu0 %v1785
    %2275 = vmatpush1.bf16.msra.mxu0 %v1784
    %2276 = vmatprep.subr.bf16.mxu0 %v1787
    %2277 = vmatpush1.bf16.msra.mxu0 %v1786
    %2278 = vmatprep.subr.bf16.mxu0 %v1789
    %2279 = vmatpush1.bf16.msra.mxu0 %v1788
    %2280 = vmatprep.subr.bf16.mxu0 %v1791
    %2281 = vmatpush1.bf16.msra.mxu0 %v1790
    %2282 = vmatprep.subr.bf16.mxu0 %v1793
    %2283 = vmatpush1.bf16.msra.mxu0 %v1792
    %2284 = vmatprep.subr.bf16.mxu0 %v1795
    %2285 = vmatpush1.bf16.msra.mxu0 %v1794
    %2286 = vmatprep.subr.bf16.mxu0 %v1797
    %2287 = vmatpush1.bf16.msra.mxu0 %v1796
    %2288 = vmatprep.mubr.bf16.mxu0 %v2043
    %2289 = vmatmul.mubr.bf16.gmra.mrb[0].mxu0 %v2042
    %v2290 = vpop.f32.mrb[0].mxu0
    %v2291 = vadd.f32 %v2218, %v2290
    %v2292 = vpop.f32.mrb[0].mxu0
    %v2293 = vadd.f32 %v2220, %v2292
    %v2294 = vpop.f32.mrb[0].mxu0
    %v2295 = vadd.f32 %v2222, %v2294
    %v2296 = vpop.f32.mrb[0].mxu0
    %v2297 = vadd.f32 %v2224, %v2296
    %2298 = vmatprep.mubr.bf16.mxu0 %v2052
    %2299 = vmatmul.mubr.bf16.gmra.mrb[0].mxu0 %v2051
    %v2300 = vpop.f32.mrb[0].mxu0
    %v2301 = vadd.f32 %v2228, %v2300
    %v2302 = vpop.f32.mrb[0].mxu0
    %v2303 = vadd.f32 %v2230, %v2302
    %v2304 = vpop.f32.mrb[0].mxu0
    %v2305 = vadd.f32 %v2232, %v2304
    %v2306 = vpop.f32.mrb[0].mxu0
    %v2307 = vadd.f32 %v2234, %v2306
    %2308 = vmatprep.mubr.bf16.mxu0 %v2061
    %2309 = vmatmul.mubr.bf16.gmra.mrb[0].mxu0 %v2060
    %v2310 = vpop.f32.mrb[0].mxu0
    %v2311 = vadd.f32 %v2238, %v2310
    %v2312 = vpop.f32.mrb[0].mxu0
    %v2313 = vadd.f32 %v2240, %v2312
    %v2314 = vpop.f32.mrb[0].mxu0
    %v2315 = vadd.f32 %v2242, %v2314
    %v2316 = vpop.f32.mrb[0].mxu0
    %v2317 = vadd.f32 %v2244, %v2316
    %2318 = vmatprep.mubr.bf16.mxu0 %v2070
    %2319 = vmatmul.mubr.bf16.gmra.mrb[0].mxu0 %v2069
    %v2320 = vpop.f32.mrb[0].mxu0
    %v2321 = vadd.f32 %v2248, %v2320
    %v2322 = vpop.f32.mrb[0].mxu0
    %v2323 = vadd.f32 %v2250, %v2322
    %v2324 = vpop.f32.mrb[0].mxu0
    %v2325 = vadd.f32 %v2252, %v2324
    %v2326 = vpop.f32.mrb[0].mxu0
    %v2327 = vadd.f32 %v2254, %v2326
    %2328 = vdwg.mxu0
    %2329 = vmatprep.subr.bf16.mxu0 %v1799
    %2330 = vmatpush1.bf16.msra.mxu0 %v1798
    %2331 = vmatprep.subr.bf16.mxu0 %v1801
    %2332 = vmatpush1.bf16.msra.mxu0 %v1800
    %2333 = vmatprep.subr.bf16.mxu0 %v1803
    %2334 = vmatpush1.bf16.msra.mxu0 %v1802
    %2335 = vmatprep.subr.bf16.mxu0 %v1805
    %2336 = vmatpush1.bf16.msra.mxu0 %v1804
    %2337 = vmatprep.subr.bf16.mxu0 %v1807
    %2338 = vmatpush1.bf16.msra.mxu0 %v1806
    %2339 = vmatprep.subr.bf16.mxu0 %v1809
    %2340 = vmatpush1.bf16.msra.mxu0 %v1808
    %2341 = vmatprep.subr.bf16.mxu0 %v1811
    %2342 = vmatpush1.bf16.msra.mxu0 %v1810
    %2343 = vmatprep.subr.bf16.mxu0 %v1813
    %2344 = vmatpush1.bf16.msra.mxu0 %v1812
    %2345 = vmatprep.subr.bf16.mxu0 %v1815
    %2346 = vmatpush1.bf16.msra.mxu0 %v1814
    %2347 = vmatprep.subr.bf16.mxu0 %v1817
    %2348 = vmatpush1.bf16.msra.mxu0 %v1816
    %2349 = vmatprep.subr.bf16.mxu0 %v1819
    %2350 = vmatpush1.bf16.msra.mxu0 %v1818
    %2351 = vmatprep.subr.bf16.mxu0 %v1821
    %2352 = vmatpush1.bf16.msra.mxu0 %v1820
    %2353 = vmatprep.subr.bf16.mxu0 %v1823
    %2354 = vmatpush1.bf16.msra.mxu0 %v1822
    %2355 = vmatprep.subr.bf16.mxu0 %v1825
    %2356 = vmatpush1.bf16.msra.mxu0 %v1824
    %2357 = vmatprep.subr.bf16.mxu0 %v1827
    %2358 = vmatpush1.bf16.msra.mxu0 %v1826
    %2359 = vmatprep.subr.bf16.mxu0 %v1829
    %2360 = vmatpush1.bf16.msra.mxu0 %v1828
    %2361 = vmatprep.mubr.bf16.mxu0 %v2045
    %2362 = vmatmul.mubr.bf16.gmra.mrb[0].mxu0 %v2044
    %v2363 = vpop.f32.mrb[0].mxu0
    %v2364 = vadd.f32 %v2291, %v2363
    %v2365 = vpop.f32.mrb[0].mxu0
    %v2366 = vadd.f32 %v2293, %v2365
    %v2367 = vpop.f32.mrb[0].mxu0
    %v2368 = vadd.f32 %v2295, %v2367
    %v2369 = vpop.f32.mrb[0].mxu0
    %v2370 = vadd.f32 %v2297, %v2369
    %2371 = vmatprep.mubr.bf16.mxu0 %v2054
    %2372 = vmatmul.mubr.bf16.gmra.mrb[0].mxu0 %v2053
    %v2373 = vpop.f32.mrb[0].mxu0
    %v2374 = vadd.f32 %v2301, %v2373
    %v2375 = vpop.f32.mrb[0].mxu0
    %v2376 = vadd.f32 %v2303, %v2375
    %v2377 = vpop.f32.mrb[0].mxu0
    %v2378 = vadd.f32 %v2305, %v2377
    %v2379 = vpop.f32.mrb[0].mxu0
    %v2380 = vadd.f32 %v2307, %v2379
    %2381 = vmatprep.mubr.bf16.mxu0 %v2063
    %2382 = vmatmul.mubr.bf16.gmra.mrb[0].mxu0 %v2062
    %v2383 = vpop.f32.mrb[0].mxu0
    %v2384 = vadd.f32 %v2311, %v2383
    %v2385 = vpop.f32.mrb[0].mxu0
    %v2386 = vadd.f32 %v2313, %v2385
    %v2387 = vpop.f32.mrb[0].mxu0
    %v2388 = vadd.f32 %v2315, %v2387
    %v2389 = vpop.f32.mrb[0].mxu0
    %v2390 = vadd.f32 %v2317, %v2389
    %2391 = vmatprep.mubr.bf16.mxu0 %v2072
    %2392 = vmatmul.mubr.bf16.gmra.mrb[0].mxu0 %v2071
    %v2393 = vpop.f32.mrb[0].mxu0
    %v2394 = vadd.f32 %v2321, %v2393
    %v2395 = vpop.f32.mrb[0].mxu0
    %v2396 = vadd.f32 %v2323, %v2395
    %v2397 = vpop.f32.mrb[0].mxu0
    %v2398 = vadd.f32 %v2325, %v2397
    %v2399 = vpop.f32.mrb[0].mxu0
    %v2400 = vadd.f32 %v2327, %v2399
    %2401 = vdwg.mxu0
    %2402 = vmatprep.subr.bf16.mxu0 %v1831
    %2403 = vmatpush1.bf16.msra.mxu0 %v1830
    %2404 = vmatprep.subr.bf16.mxu0 %v1833
    %2405 = vmatpush1.bf16.msra.mxu0 %v1832
    %2406 = vmatprep.subr.bf16.mxu0 %v1835
    %2407 = vmatpush1.bf16.msra.mxu0 %v1834
    %2408 = vmatprep.subr.bf16.mxu0 %v1837
    %2409 = vmatpush1.bf16.msra.mxu0 %v1836
    %2410 = vmatprep.subr.bf16.mxu0 %v1839
    %2411 = vmatpush1.bf16.msra.mxu0 %v1838
    %2412 = vmatprep.subr.bf16.mxu0 %v1841
    %2413 = vmatpush1.bf16.msra.mxu0 %v1840
    %2414 = vmatprep.subr.bf16.mxu0 %v1843
    %2415 = vmatpush1.bf16.msra.mxu0 %v1842
    %2416 = vmatprep.subr.bf16.mxu0 %v1845
    %2417 = vmatpush1.bf16.msra.mxu0 %v1844
    %2418 = vmatprep.subr.bf16.mxu0 0
    %2419 = vmatpush1.bf16.msra.mxu0 0
    %2420 = vmatprep.subr.bf16.mxu0 0
    %2421 = vmatpush1.bf16.msra.mxu0 0
    %2422 = vmatprep.subr.bf16.mxu0 0
    %2423 = vmatpush1.bf16.msra.mxu0 0
    %2424 = vmatprep.subr.bf16.mxu0 0
    %2425 = vmatpush1.bf16.msra.mxu0 0
    %2426 = vmatprep.subr.bf16.mxu0 0
    %2427 = vmatpush1.bf16.msra.mxu0 0
    %2428 = vmatprep.subr.bf16.mxu0 0
    %2429 = vmatpush1.bf16.msra.mxu0 0
    %2430 = vmatprep.subr.bf16.mxu0 0
    %2431 = vmatpush1.bf16.msra.mxu0 0
    %2432 = vmatprep.subr.bf16.mxu0 0
    %2433 = vmatpush1.bf16.msra.mxu0 0
    %2434 = vmatprep.mubr.bf16.mxu0 0
    %2435 = vmatmul.mubr.bf16.gmra.mrb[0].mxu0 %v2046
    %v2436 = vpop.f32.mrb[0].mxu0
    %v2437 = vadd.f32 %v2364, %v2436
    %v2438 = vpop.f32.mrb[0].mxu0
    %v2439 = vadd.f32 %v2366, %v2438
    %v2440 = vpop.f32.mrb[0].mxu0
    %v2441 = vadd.f32 %v2368, %v2440
    %v2442 = vpop.f32.mrb[0].mxu0
    %v2443 = vadd.f32 %v2370, %v2442
    %2444 = vmatprep.mubr.bf16.mxu0 0
    %2445 = vmatmul.mubr.bf16.gmra.mrb[0].mxu0 %v2055
    %v2446 = vpop.f32.mrb[0].mxu0
    %v2447 = vadd.f32 %v2374, %v2446
    %v2448 = vpop.f32.mrb[0].mxu0
    %v2449 = vadd.f32 %v2376, %v2448
    %v2450 = vpop.f32.mrb[0].mxu0
    %v2451 = vadd.f32 %v2378, %v2450
    %v2452 = vpop.f32.mrb[0].mxu0
    %v2453 = vadd.f32 %v2380, %v2452
    %2454 = vmatprep.mubr.bf16.mxu0 0
    %2455 = vmatmul.mubr.bf16.gmra.mrb[0].mxu0 %v2064
    %v2456 = vpop.f32.mrb[0].mxu0
    %v2457 = vadd.f32 %v2384, %v2456
    %v2458 = vpop.f32.mrb[0].mxu0
    %v2459 = vadd.f32 %v2386, %v2458
    %v2460 = vpop.f32.mrb[0].mxu0
    %v2461 = vadd.f32 %v2388, %v2460
    %v2462 = vpop.f32.mrb[0].mxu0
    %v2463 = vadd.f32 %v2390, %v2462
    %2464 = vmatprep.mubr.bf16.mxu0 0
    %2465 = vmatmul.mubr.bf16.gmra.mrb[0].mxu0 %v2073
    %v2466 = vpop.f32.mrb[0].mxu0
    %v2467 = vadd.f32 %v2394, %v2466
    %v2468 = vpop.f32.mrb[0].mxu0
    %v2469 = vadd.f32 %v2396, %v2468
    %v2470 = vpop.f32.mrb[0].mxu0
    %v2471 = vadd.f32 %v2398, %v2470
    %v2472 = vpop.f32.mrb[0].mxu0
    %v2473 = vadd.f32 %v2400, %v2472
    %2474 = vdwg.mxu0
    %v2475 = vmax.f32 %v2437, 0.0
    %v2476 = vmax.f32 %v2439, 0.0
    %v2477 = vmax.f32 %v2441, 0.0
    %v2478 = vmax.f32 %v2443, 0.0
    %v2479 = vmax.f32 %v2447, 0.0
    %v2480 = vmax.f32 %v2449, 0.0
    %v2481 = vmax.f32 %v2451, 0.0
    %v2482 = vmax.f32 %v2453, 0.0
    %v2483 = vmax.f32 %v2457, 0.0
    %v2484 = vmax.f32 %v2459, 0.0
    %v2485 = vmax.f32 %v2461, 0.0
    %v2486 = vmax.f32 %v2463, 0.0
    %v2487 = vmax.f32 %v2467, 0.0
    %v2488 = vmax.f32 %v2469, 0.0
    %v2489 = vmax.f32 %v2471, 0.0
    %v2490 = vmax.f32 %v2473, 0.0
    %v2491 = vld [vmem:[%s6 + $0xc0] sm:$0xff]
    %v2492 = vld [vmem:[%s6 + $0xc8] sm:$0xff]
    %2493 = vrot.lane.b32.xlu0 %v2475, 17
    %v2494 = vpop.permute.xlu0 %2493
    %2495 = vrot.lane.b32.xlu0 %v2477, 17
    %v2496 = vpop.permute.xlu0 %2495
    %2497 = vrot.lane.b32.xlu0 %v2479, 17
    %v2498 = vpop.permute.xlu0 %2497
    %2499 = vrot.lane.b32.xlu0 %v2481, 17
    %v2500 = vpop.permute.xlu0 %2499
    %2501 = vrot.lane.b32.xlu0 %v2483, 17
    %v2502 = vpop.permute.xlu0 %2501
    %2503 = vrot.lane.b32.xlu0 %v2485, 17
    %v2504 = vpop.permute.xlu0 %2503
    %2505 = vrot.lane.b32.xlu0 %v2487, 17
    %v2506 = vpop.permute.xlu0 %2505
    %2507 = vrot.lane.b32.xlu0 %v2489, 17
    %v2508 = vpop.permute.xlu0 %2507
    %2509 = vrot.lane.b32.xlu0 %v2476, 17
    %v2510 = vpop.permute.xlu0 %2509
    %2511 = vrot.lane.b32.xlu0 %v2478, 17
    %v2512 = vpop.permute.xlu0 %2511
    %2513 = vrot.lane.b32.xlu0 %v2480, 17
    %v2514 = vpop.permute.xlu0 %2513
    %2515 = vrot.lane.b32.xlu0 %v2482, 17
    %v2516 = vpop.permute.xlu0 %2515
    %2517 = vrot.lane.b32.xlu0 %v2484, 17
    %v2518 = vpop.permute.xlu0 %2517
    %2519 = vrot.lane.b32.xlu0 %v2486, 17
    %v2520 = vpop.permute.xlu0 %2519
    %2521 = vrot.lane.b32.xlu0 %v2488, 17
    %v2522 = vpop.permute.xlu0 %2521
    %2523 = vrot.lane.b32.xlu0 %v2490, 17
    %v2524 = vpop.permute.xlu0 %2523
    %v2525 = vsel %vm98, %v2494, %v2510
    %v2526 = vsel %vm98, %v2496, %v2512
    %v2527 = vsel %vm98, %v2498, %v2514
    %v2528 = vsel %vm98, %v2500, %v2516
    %v2529 = vsel %vm98, %v2502, %v2518
    %v2530 = vsel %vm98, %v2504, %v2520
    %v2531 = vsel %vm98, %v2506, %v2522
    %v2532 = vsel %vm98, %v2508, %v2524
    %v2533 = vsel %vm98, %v2510, %v2494
    %v2534 = vsel %vm98, %v2512, %v2496
    %v2535 = vsel %vm98, %v2514, %v2498
    %v2536 = vsel %vm98, %v2516, %v2500
    %v2537 = vsel %vm98, %v2518, %v2502
    %v2538 = vsel %vm98, %v2520, %v2504
    %v2539 = vsel %vm98, %v2522, %v2506
    %v2540 = vsel %vm98, %v2524, %v2508
    %v2541 = vsel %vm112, %v2533, 0.0
    %v2542 = vsel %vm113, %v2525, 0.0
    %v2543 = vsel %vm112, %v2534, 0.0
    %v2544 = vsel %vm113, %v2526, 0.0
    %v2545 = vsel %vm112, %v2535, 0.0
    %v2546 = vsel %vm113, %v2527, 0.0
    %v2547 = vsel %vm112, %v2536, 0.0
    %v2548 = vsel %vm113, %v2528, 0.0
    %v2549 = vsel %vm112, %v2537, 0.0
    %v2550 = vsel %vm113, %v2529, 0.0
    %v2551 = vsel %vm112, %v2538, 0.0
    %v2552 = vsel %vm113, %v2530, 0.0
    %v2553 = vsel %vm112, %v2539, 0.0
    %v2554 = vsel %vm113, %v2531, 0.0
    %v2555 = vsel %vm112, %v2540, 0.0
    %v2556 = vsel %vm113, %v2532, 0.0
    %2557 = vrot.lane.b32.xlu0 %v2475, 16
    %v2558 = vpop.permute.xlu0 %2557
    %2559 = vrot.lane.b32.xlu0 %v2477, 16
    %v2560 = vpop.permute.xlu0 %2559
    %2561 = vrot.lane.b32.xlu0 %v2479, 16
    %v2562 = vpop.permute.xlu0 %2561
    %2563 = vrot.lane.b32.xlu0 %v2481, 16
    %v2564 = vpop.permute.xlu0 %2563
    %2565 = vrot.lane.b32.xlu0 %v2483, 16
    %v2566 = vpop.permute.xlu0 %2565
    %2567 = vrot.lane.b32.xlu0 %v2485, 16
    %v2568 = vpop.permute.xlu0 %2567
    %2569 = vrot.lane.b32.xlu0 %v2487, 16
    %v2570 = vpop.permute.xlu0 %2569
    %2571 = vrot.lane.b32.xlu0 %v2489, 16
    %v2572 = vpop.permute.xlu0 %2571
    %2573 = vrot.lane.b32.xlu0 %v2476, 16
    %v2574 = vpop.permute.xlu0 %2573
    %2575 = vrot.lane.b32.xlu0 %v2478, 16
    %v2576 = vpop.permute.xlu0 %2575
    %2577 = vrot.lane.b32.xlu0 %v2480, 16
    %v2578 = vpop.permute.xlu0 %2577
    %2579 = vrot.lane.b32.xlu0 %v2482, 16
    %v2580 = vpop.permute.xlu0 %2579
    %2581 = vrot.lane.b32.xlu0 %v2484, 16
    %v2582 = vpop.permute.xlu0 %2581
    %2583 = vrot.lane.b32.xlu0 %v2486, 16
    %v2584 = vpop.permute.xlu0 %2583
    %2585 = vrot.lane.b32.xlu0 %v2488, 16
    %v2586 = vpop.permute.xlu0 %2585
    %2587 = vrot.lane.b32.xlu0 %v2490, 16
    %v2588 = vpop.permute.xlu0 %2587
    %v2589 = vsel %vm126, %v2558, %v2574
    %v2590 = vsel %vm126, %v2560, %v2576
    %v2591 = vsel %vm126, %v2562, %v2578
    %v2592 = vsel %vm126, %v2564, %v2580
    %v2593 = vsel %vm126, %v2566, %v2582
    %v2594 = vsel %vm126, %v2568, %v2584
    %v2595 = vsel %vm126, %v2570, %v2586
    %v2596 = vsel %vm126, %v2572, %v2588
    %v2597 = vsel %vm126, %v2574, %v2558
    %v2598 = vsel %vm126, %v2576, %v2560
    %v2599 = vsel %vm126, %v2578, %v2562
    %v2600 = vsel %vm126, %v2580, %v2564
    %v2601 = vsel %vm126, %v2582, %v2566
    %v2602 = vsel %vm126, %v2584, %v2568
    %v2603 = vsel %vm126, %v2586, %v2570
    %v2604 = vsel %vm126, %v2588, %v2572
    %v2605 = vsel %vm140, %v2597, 0.0
    %v2606 = vsel %vm141, %v2589, 0.0
    %v2607 = vsel %vm140, %v2598, 0.0
    %v2608 = vsel %vm141, %v2590, 0.0
    %v2609 = vsel %vm140, %v2599, 0.0
    %v2610 = vsel %vm141, %v2591, 0.0
    %v2611 = vsel %vm140, %v2600, 0.0
    %v2612 = vsel %vm141, %v2592, 0.0
    %v2613 = vsel %vm140, %v2601, 0.0
    %v2614 = vsel %vm141, %v2593, 0.0
    %v2615 = vsel %vm140, %v2602, 0.0
    %v2616 = vsel %vm141, %v2594, 0.0
    %v2617 = vsel %vm140, %v2603, 0.0
    %v2618 = vsel %vm141, %v2595, 0.0
    %v2619 = vsel %vm140, %v2604, 0.0
    %v2620 = vsel %vm141, %v2596, 0.0
    %2621 = vrot.lane.b32.xlu0 %v2475, 15
    %v2622 = vpop.permute.xlu0 %2621
    %2623 = vrot.lane.b32.xlu0 %v2477, 15
    %v2624 = vpop.permute.xlu0 %2623
    %2625 = vrot.lane.b32.xlu0 %v2479, 15
    %v2626 = vpop.permute.xlu0 %2625
    %2627 = vrot.lane.b32.xlu0 %v2481, 15
    %v2628 = vpop.permute.xlu0 %2627
    %2629 = vrot.lane.b32.xlu0 %v2483, 15
    %v2630 = vpop.permute.xlu0 %2629
    %2631 = vrot.lane.b32.xlu0 %v2485, 15
    %v2632 = vpop.permute.xlu0 %2631
    %2633 = vrot.lane.b32.xlu0 %v2487, 15
    %v2634 = vpop.permute.xlu0 %2633
    %2635 = vrot.lane.b32.xlu0 %v2489, 15
    %v2636 = vpop.permute.xlu0 %2635
    %2637 = vrot.lane.b32.xlu0 %v2476, 15
    %v2638 = vpop.permute.xlu0 %2637
    %2639 = vrot.lane.b32.xlu0 %v2478, 15
    %v2640 = vpop.permute.xlu0 %2639
    %2641 = vrot.lane.b32.xlu0 %v2480, 15
    %v2642 = vpop.permute.xlu0 %2641
    %2643 = vrot.lane.b32.xlu0 %v2482, 15
    %v2644 = vpop.permute.xlu0 %2643
    %2645 = vrot.lane.b32.xlu0 %v2484, 15
    %v2646 = vpop.permute.xlu0 %2645
    %2647 = vrot.lane.b32.xlu0 %v2486, 15
    %v2648 = vpop.permute.xlu0 %2647
    %2649 = vrot.lane.b32.xlu0 %v2488, 15
    %v2650 = vpop.permute.xlu0 %2649
    %2651 = vrot.lane.b32.xlu0 %v2490, 15
    %v2652 = vpop.permute.xlu0 %2651
    %v2653 = vsel %vm154, %v2622, %v2638
    %v2654 = vsel %vm154, %v2624, %v2640
    %v2655 = vsel %vm154, %v2626, %v2642
    %v2656 = vsel %vm154, %v2628, %v2644
    %v2657 = vsel %vm154, %v2630, %v2646
    %v2658 = vsel %vm154, %v2632, %v2648
    %v2659 = vsel %vm154, %v2634, %v2650
    %v2660 = vsel %vm154, %v2636, %v2652
    %v2661 = vsel %vm154, %v2638, %v2622
    %v2662 = vsel %vm154, %v2640, %v2624
    %v2663 = vsel %vm154, %v2642, %v2626
    %v2664 = vsel %vm154, %v2644, %v2628
    %v2665 = vsel %vm154, %v2646, %v2630
    %v2666 = vsel %vm154, %v2648, %v2632
    %v2667 = vsel %vm154, %v2650, %v2634
    %v2668 = vsel %vm154, %v2652, %v2636
    %v2669 = vsel %vm168, %v2661, 0.0
    %v2670 = vsel %vm169, %v2653, 0.0
    %v2671 = vsel %vm168, %v2662, 0.0
    %v2672 = vsel %vm169, %v2654, 0.0
    %v2673 = vsel %vm168, %v2663, 0.0
    %v2674 = vsel %vm169, %v2655, 0.0
    %v2675 = vsel %vm168, %v2664, 0.0
    %v2676 = vsel %vm169, %v2656, 0.0
    %v2677 = vsel %vm168, %v2665, 0.0
    %v2678 = vsel %vm169, %v2657, 0.0
    %v2679 = vsel %vm168, %v2666, 0.0
    %v2680 = vsel %vm169, %v2658, 0.0
    %v2681 = vsel %vm168, %v2667, 0.0
    %v2682 = vsel %vm169, %v2659, 0.0
    %v2683 = vsel %vm168, %v2668, 0.0
    %v2684 = vsel %vm169, %v2660, 0.0
    %2685 = vrot.lane.b32.xlu0 %v2475, 1
    %v2686 = vpop.permute.xlu0 %2685
    %2687 = vrot.lane.b32.xlu0 %v2477, 1
    %v2688 = vpop.permute.xlu0 %2687
    %2689 = vrot.lane.b32.xlu0 %v2479, 1
    %v2690 = vpop.permute.xlu0 %2689
    %2691 = vrot.lane.b32.xlu0 %v2481, 1
    %v2692 = vpop.permute.xlu0 %2691
    %2693 = vrot.lane.b32.xlu0 %v2483, 1
    %v2694 = vpop.permute.xlu0 %2693
    %2695 = vrot.lane.b32.xlu0 %v2485, 1
    %v2696 = vpop.permute.xlu0 %2695
    %2697 = vrot.lane.b32.xlu0 %v2487, 1
    %v2698 = vpop.permute.xlu0 %2697
    %2699 = vrot.lane.b32.xlu0 %v2489, 1
    %v2700 = vpop.permute.xlu0 %2699
    %2701 = vrot.lane.b32.xlu0 %v2476, 1
    %v2702 = vpop.permute.xlu0 %2701
    %2703 = vrot.lane.b32.xlu0 %v2478, 1
    %v2704 = vpop.permute.xlu0 %2703
    %2705 = vrot.lane.b32.xlu0 %v2480, 1
    %v2706 = vpop.permute.xlu0 %2705
    %2707 = vrot.lane.b32.xlu0 %v2482, 1
    %v2708 = vpop.permute.xlu0 %2707
    %2709 = vrot.lane.b32.xlu0 %v2484, 1
    %v2710 = vpop.permute.xlu0 %2709
    %2711 = vrot.lane.b32.xlu0 %v2486, 1
    %v2712 = vpop.permute.xlu0 %2711
    %2713 = vrot.lane.b32.xlu0 %v2488, 1
    %v2714 = vpop.permute.xlu0 %2713
    %2715 = vrot.lane.b32.xlu0 %v2490, 1
    %v2716 = vpop.permute.xlu0 %2715
    %v2717 = vsel %vm182, %v2686, %v2702
    %v2718 = vsel %vm182, %v2688, %v2704
    %v2719 = vsel %vm182, %v2690, %v2706
    %v2720 = vsel %vm182, %v2692, %v2708
    %v2721 = vsel %vm182, %v2694, %v2710
    %v2722 = vsel %vm182, %v2696, %v2712
    %v2723 = vsel %vm182, %v2698, %v2714
    %v2724 = vsel %vm182, %v2700, %v2716
    %v2725 = vsel %vm182, %v2702, %v2686
    %v2726 = vsel %vm182, %v2704, %v2688
    %v2727 = vsel %vm182, %v2706, %v2690
    %v2728 = vsel %vm182, %v2708, %v2692
    %v2729 = vsel %vm182, %v2710, %v2694
    %v2730 = vsel %vm182, %v2712, %v2696
    %v2731 = vsel %vm182, %v2714, %v2698
    %v2732 = vsel %vm182, %v2716, %v2700
    %v2733 = vsel %vm196, %v2725, 0.0
    %v2734 = vsel %vm197, %v2717, 0.0
    %v2735 = vsel %vm196, %v2726, 0.0
    %v2736 = vsel %vm197, %v2718, 0.0
    %v2737 = vsel %vm196, %v2727, 0.0
    %v2738 = vsel %vm197, %v2719, 0.0
    %v2739 = vsel %vm196, %v2728, 0.0
    %v2740 = vsel %vm197, %v2720, 0.0
    %v2741 = vsel %vm196, %v2729, 0.0
    %v2742 = vsel %vm197, %v2721, 0.0
    %v2743 = vsel %vm196, %v2730, 0.0
    %v2744 = vsel %vm197, %v2722, 0.0
    %v2745 = vsel %vm196, %v2731, 0.0
    %v2746 = vsel %vm197, %v2723, 0.0
    %v2747 = vsel %vm196, %v2732, 0.0
    %v2748 = vsel %vm197, %v2724, 0.0
    %2749 = vrot.lane.b32.xlu0 %v2475, 127
    %v2750 = vpop.permute.xlu0 %2749
    %2751 = vrot.lane.b32.xlu0 %v2477, 127
    %v2752 = vpop.permute.xlu0 %2751
    %2753 = vrot.lane.b32.xlu0 %v2479, 127
    %v2754 = vpop.permute.xlu0 %2753
    %2755 = vrot.lane.b32.xlu0 %v2481, 127
    %v2756 = vpop.permute.xlu0 %2755
    %2757 = vrot.lane.b32.xlu0 %v2483, 127
    %v2758 = vpop.permute.xlu0 %2757
    %2759 = vrot.lane.b32.xlu0 %v2485, 127
    %v2760 = vpop.permute.xlu0 %2759
    %2761 = vrot.lane.b32.xlu0 %v2487, 127
    %v2762 = vpop.permute.xlu0 %2761
    %2763 = vrot.lane.b32.xlu0 %v2489, 127
    %v2764 = vpop.permute.xlu0 %2763
    %2765 = vrot.lane.b32.xlu0 %v2476, 127
    %v2766 = vpop.permute.xlu0 %2765
    %2767 = vrot.lane.b32.xlu0 %v2478, 127
    %v2768 = vpop.permute.xlu0 %2767
    %2769 = vrot.lane.b32.xlu0 %v2480, 127
    %v2770 = vpop.permute.xlu0 %2769
    %2771 = vrot.lane.b32.xlu0 %v2482, 127
    %v2772 = vpop.permute.xlu0 %2771
    %2773 = vrot.lane.b32.xlu0 %v2484, 127
    %v2774 = vpop.permute.xlu0 %2773
    %2775 = vrot.lane.b32.xlu0 %v2486, 127
    %v2776 = vpop.permute.xlu0 %2775
    %2777 = vrot.lane.b32.xlu0 %v2488, 127
    %v2778 = vpop.permute.xlu0 %2777
    %2779 = vrot.lane.b32.xlu0 %v2490, 127
    %v2780 = vpop.permute.xlu0 %2779
    %v2781 = vsel %vm210, %v2750, %v2766
    %v2782 = vsel %vm210, %v2752, %v2768
    %v2783 = vsel %vm210, %v2754, %v2770
    %v2784 = vsel %vm210, %v2756, %v2772
    %v2785 = vsel %vm210, %v2758, %v2774
    %v2786 = vsel %vm210, %v2760, %v2776
    %v2787 = vsel %vm210, %v2762, %v2778
    %v2788 = vsel %vm210, %v2764, %v2780
    %v2789 = vsel %vm210, %v2766, %v2750
    %v2790 = vsel %vm210, %v2768, %v2752
    %v2791 = vsel %vm210, %v2770, %v2754
    %v2792 = vsel %vm210, %v2772, %v2756
    %v2793 = vsel %vm210, %v2774, %v2758
    %v2794 = vsel %vm210, %v2776, %v2760
    %v2795 = vsel %vm210, %v2778, %v2762
    %v2796 = vsel %vm210, %v2780, %v2764
    %v2797 = vsel %vm224, %v2781, 0.0
    %v2798 = vsel %vm225, %v2789, 0.0
    %v2799 = vsel %vm224, %v2782, 0.0
    %v2800 = vsel %vm225, %v2790, 0.0
    %v2801 = vsel %vm224, %v2783, 0.0
    %v2802 = vsel %vm225, %v2791, 0.0
    %v2803 = vsel %vm224, %v2784, 0.0
    %v2804 = vsel %vm225, %v2792, 0.0
    %v2805 = vsel %vm224, %v2785, 0.0
    %v2806 = vsel %vm225, %v2793, 0.0
    %v2807 = vsel %vm224, %v2786, 0.0
    %v2808 = vsel %vm225, %v2794, 0.0
    %v2809 = vsel %vm224, %v2787, 0.0
    %v2810 = vsel %vm225, %v2795, 0.0
    %v2811 = vsel %vm224, %v2788, 0.0
    %v2812 = vsel %vm225, %v2796, 0.0
    %2813 = vrot.lane.b32.xlu0 %v2475, 113
    %v2814 = vpop.permute.xlu0 %2813
    %2815 = vrot.lane.b32.xlu0 %v2477, 113
    %v2816 = vpop.permute.xlu0 %2815
    %2817 = vrot.lane.b32.xlu0 %v2479, 113
    %v2818 = vpop.permute.xlu0 %2817
    %2819 = vrot.lane.b32.xlu0 %v2481, 113
    %v2820 = vpop.permute.xlu0 %2819
    %2821 = vrot.lane.b32.xlu0 %v2483, 113
    %v2822 = vpop.permute.xlu0 %2821
    %2823 = vrot.lane.b32.xlu0 %v2485, 113
    %v2824 = vpop.permute.xlu0 %2823
    %2825 = vrot.lane.b32.xlu0 %v2487, 113
    %v2826 = vpop.permute.xlu0 %2825
    %2827 = vrot.lane.b32.xlu0 %v2489, 113
    %v2828 = vpop.permute.xlu0 %2827
    %2829 = vrot.lane.b32.xlu0 %v2476, 113
    %v2830 = vpop.permute.xlu0 %2829
    %2831 = vrot.lane.b32.xlu0 %v2478, 113
    %v2832 = vpop.permute.xlu0 %2831
    %2833 = vrot.lane.b32.xlu0 %v2480, 113
    %v2834 = vpop.permute.xlu0 %2833
    %2835 = vrot.lane.b32.xlu0 %v2482, 113
    %v2836 = vpop.permute.xlu0 %2835
    %2837 = vrot.lane.b32.xlu0 %v2484, 113
    %v2838 = vpop.permute.xlu0 %2837
    %2839 = vrot.lane.b32.xlu0 %v2486, 113
    %v2840 = vpop.permute.xlu0 %2839
    %2841 = vrot.lane.b32.xlu0 %v2488, 113
    %v2842 = vpop.permute.xlu0 %2841
    %2843 = vrot.lane.b32.xlu0 %v2490, 113
    %v2844 = vpop.permute.xlu0 %2843
    %v2845 = vsel %vm238, %v2814, %v2830
    %v2846 = vsel %vm238, %v2816, %v2832
    %v2847 = vsel %vm238, %v2818, %v2834
    %v2848 = vsel %vm238, %v2820, %v2836
    %v2849 = vsel %vm238, %v2822, %v2838
    %v2850 = vsel %vm238, %v2824, %v2840
    %v2851 = vsel %vm238, %v2826, %v2842
    %v2852 = vsel %vm238, %v2828, %v2844
    %v2853 = vsel %vm238, %v2830, %v2814
    %v2854 = vsel %vm238, %v2832, %v2816
    %v2855 = vsel %vm238, %v2834, %v2818
    %v2856 = vsel %vm238, %v2836, %v2820
    %v2857 = vsel %vm238, %v2838, %v2822
    %v2858 = vsel %vm238, %v2840, %v2824
    %v2859 = vsel %vm238, %v2842, %v2826
    %v2860 = vsel %vm238, %v2844, %v2828
    %v2861 = vsel %vm252, %v2845, 0.0
    %v2862 = vsel %vm253, %v2853, 0.0
    %v2863 = vsel %vm252, %v2846, 0.0
    %v2864 = vsel %vm253, %v2854, 0.0
    %v2865 = vsel %vm252, %v2847, 0.0
    %v2866 = vsel %vm253, %v2855, 0.0
    %v2867 = vsel %vm252, %v2848, 0.0
    %v2868 = vsel %vm253, %v2856, 0.0
    %v2869 = vsel %vm252, %v2849, 0.0
    %v2870 = vsel %vm253, %v2857, 0.0
    %v2871 = vsel %vm252, %v2850, 0.0
    %v2872 = vsel %vm253, %v2858, 0.0
    %v2873 = vsel %vm252, %v2851, 0.0
    %v2874 = vsel %vm253, %v2859, 0.0
    %v2875 = vsel %vm252, %v2852, 0.0
    %v2876 = vsel %vm253, %v2860, 0.0
    %2877 = vrot.lane.b32.xlu0 %v2475, 112
    %v2878 = vpop.permute.xlu0 %2877
    %2879 = vrot.lane.b32.xlu0 %v2477, 112
    %v2880 = vpop.permute.xlu0 %2879
    %2881 = vrot.lane.b32.xlu0 %v2479, 112
    %v2882 = vpop.permute.xlu0 %2881
    %2883 = vrot.lane.b32.xlu0 %v2481, 112
    %v2884 = vpop.permute.xlu0 %2883
    %2885 = vrot.lane.b32.xlu0 %v2483, 112
    %v2886 = vpop.permute.xlu0 %2885
    %2887 = vrot.lane.b32.xlu0 %v2485, 112
    %v2888 = vpop.permute.xlu0 %2887
    %2889 = vrot.lane.b32.xlu0 %v2487, 112
    %v2890 = vpop.permute.xlu0 %2889
    %2891 = vrot.lane.b32.xlu0 %v2489, 112
    %v2892 = vpop.permute.xlu0 %2891
    %2893 = vrot.lane.b32.xlu0 %v2476, 112
    %v2894 = vpop.permute.xlu0 %2893
    %2895 = vrot.lane.b32.xlu0 %v2478, 112
    %v2896 = vpop.permute.xlu0 %2895
    %2897 = vrot.lane.b32.xlu0 %v2480, 112
    %v2898 = vpop.permute.xlu0 %2897
    %2899 = vrot.lane.b32.xlu0 %v2482, 112
    %v2900 = vpop.permute.xlu0 %2899
    %2901 = vrot.lane.b32.xlu0 %v2484, 112
    %v2902 = vpop.permute.xlu0 %2901
    %2903 = vrot.lane.b32.xlu0 %v2486, 112
    %v2904 = vpop.permute.xlu0 %2903
    %2905 = vrot.lane.b32.xlu0 %v2488, 112
    %v2906 = vpop.permute.xlu0 %2905
    %2907 = vrot.lane.b32.xlu0 %v2490, 112
    %v2908 = vpop.permute.xlu0 %2907
    %v2909 = vsel %vm266, %v2878, %v2894
    %v2910 = vsel %vm266, %v2880, %v2896
    %v2911 = vsel %vm266, %v2882, %v2898
    %v2912 = vsel %vm266, %v2884, %v2900
    %v2913 = vsel %vm266, %v2886, %v2902
    %v2914 = vsel %vm266, %v2888, %v2904
    %v2915 = vsel %vm266, %v2890, %v2906
    %v2916 = vsel %vm266, %v2892, %v2908
    %v2917 = vsel %vm266, %v2894, %v2878
    %v2918 = vsel %vm266, %v2896, %v2880
    %v2919 = vsel %vm266, %v2898, %v2882
    %v2920 = vsel %vm266, %v2900, %v2884
    %v2921 = vsel %vm266, %v2902, %v2886
    %v2922 = vsel %vm266, %v2904, %v2888
    %v2923 = vsel %vm266, %v2906, %v2890
    %v2924 = vsel %vm266, %v2908, %v2892
    %v2925 = vsel %vm280, %v2909, 0.0
    %v2926 = vsel %vm281, %v2917, 0.0
    %v2927 = vsel %vm280, %v2910, 0.0
    %v2928 = vsel %vm281, %v2918, 0.0
    %v2929 = vsel %vm280, %v2911, 0.0
    %v2930 = vsel %vm281, %v2919, 0.0
    %v2931 = vsel %vm280, %v2912, 0.0
    %v2932 = vsel %vm281, %v2920, 0.0
    %v2933 = vsel %vm280, %v2913, 0.0
    %v2934 = vsel %vm281, %v2921, 0.0
    %v2935 = vsel %vm280, %v2914, 0.0
    %v2936 = vsel %vm281, %v2922, 0.0
    %v2937 = vsel %vm280, %v2915, 0.0
    %v2938 = vsel %vm281, %v2923, 0.0
    %v2939 = vsel %vm280, %v2916, 0.0
    %v2940 = vsel %vm281, %v2924, 0.0
    %2941 = vrot.lane.b32.xlu0 %v2475, 111
    %v2942 = vpop.permute.xlu0 %2941
    %2943 = vrot.lane.b32.xlu0 %v2477, 111
    %v2944 = vpop.permute.xlu0 %2943
    %2945 = vrot.lane.b32.xlu0 %v2479, 111
    %v2946 = vpop.permute.xlu0 %2945
    %2947 = vrot.lane.b32.xlu0 %v2481, 111
    %v2948 = vpop.permute.xlu0 %2947
    %2949 = vrot.lane.b32.xlu0 %v2483, 111
    %v2950 = vpop.permute.xlu0 %2949
    %2951 = vrot.lane.b32.xlu0 %v2485, 111
    %v2952 = vpop.permute.xlu0 %2951
    %2953 = vrot.lane.b32.xlu0 %v2487, 111
    %v2954 = vpop.permute.xlu0 %2953
    %2955 = vrot.lane.b32.xlu0 %v2489, 111
    %v2956 = vpop.permute.xlu0 %2955
    %2957 = vrot.lane.b32.xlu0 %v2476, 111
    %v2958 = vpop.permute.xlu0 %2957
    %2959 = vrot.lane.b32.xlu0 %v2478, 111
    %v2960 = vpop.permute.xlu0 %2959
    %2961 = vrot.lane.b32.xlu0 %v2480, 111
    %v2962 = vpop.permute.xlu0 %2961
    %2963 = vrot.lane.b32.xlu0 %v2482, 111
    %v2964 = vpop.permute.xlu0 %2963
    %2965 = vrot.lane.b32.xlu0 %v2484, 111
    %v2966 = vpop.permute.xlu0 %2965
    %2967 = vrot.lane.b32.xlu0 %v2486, 111
    %v2968 = vpop.permute.xlu0 %2967
    %2969 = vrot.lane.b32.xlu0 %v2488, 111
    %v2970 = vpop.permute.xlu0 %2969
    %2971 = vrot.lane.b32.xlu0 %v2490, 111
    %v2972 = vpop.permute.xlu0 %2971
    %v2973 = vsel %vm294, %v2942, %v2958
    %v2974 = vsel %vm294, %v2944, %v2960
    %v2975 = vsel %vm294, %v2946, %v2962
    %v2976 = vsel %vm294, %v2948, %v2964
    %v2977 = vsel %vm294, %v2950, %v2966
    %v2978 = vsel %vm294, %v2952, %v2968
    %v2979 = vsel %vm294, %v2954, %v2970
    %v2980 = vsel %vm294, %v2956, %v2972
    %v2981 = vsel %vm294, %v2958, %v2942
    %v2982 = vsel %vm294, %v2960, %v2944
    %v2983 = vsel %vm294, %v2962, %v2946
    %v2984 = vsel %vm294, %v2964, %v2948
    %v2985 = vsel %vm294, %v2966, %v2950
    %v2986 = vsel %vm294, %v2968, %v2952
    %v2987 = vsel %vm294, %v2970, %v2954
    %v2988 = vsel %vm294, %v2972, %v2956
    %v2989 = vsel %vm308, %v2973, 0.0
    %v2990 = vsel %vm309, %v2981, 0.0
    %v2991 = vsel %vm308, %v2974, 0.0
    %v2992 = vsel %vm309, %v2982, 0.0
    %v2993 = vsel %vm308, %v2975, 0.0
    %v2994 = vsel %vm309, %v2983, 0.0
    %v2995 = vsel %vm308, %v2976, 0.0
    %v2996 = vsel %vm309, %v2984, 0.0
    %v2997 = vsel %vm308, %v2977, 0.0
    %v2998 = vsel %vm309, %v2985, 0.0
    %v2999 = vsel %vm308, %v2978, 0.0
    %v3000 = vsel %vm309, %v2986, 0.0
    %v3001 = vsel %vm308, %v2979, 0.0
    %v3002 = vsel %vm309, %v2987, 0.0
    %v3003 = vsel %vm308, %v2980, 0.0
    %v3004 = vsel %vm309, %v2988, 0.0
    %v3005 = vpack.c.bf16 %v2543, %v2541
    %v3006 = vpack.c.bf16 %v2544, %v2542
    %v3007 = vpack.c.bf16 %v2547, %v2545
    %v3008 = vpack.c.bf16 %v2548, %v2546
    %v3009 = vpack.c.bf16 %v2551, %v2549
    %v3010 = vpack.c.bf16 %v2552, %v2550
    %v3011 = vpack.c.bf16 %v2555, %v2553
    %v3012 = vpack.c.bf16 %v2556, %v2554
    %v3013 = vpack.c.bf16 %v2607, %v2605
    %v3014 = vpack.c.bf16 %v2608, %v2606
    %v3015 = vpack.c.bf16 %v2611, %v2609
    %v3016 = vpack.c.bf16 %v2612, %v2610
    %v3017 = vpack.c.bf16 %v2615, %v2613
    %v3018 = vpack.c.bf16 %v2616, %v2614
    %v3019 = vpack.c.bf16 %v2619, %v2617
    %v3020 = vpack.c.bf16 %v2620, %v2618
    %v3021 = vpack.c.bf16 %v2671, %v2669
    %v3022 = vpack.c.bf16 %v2672, %v2670
    %v3023 = vpack.c.bf16 %v2675, %v2673
    %v3024 = vpack.c.bf16 %v2676, %v2674
    %v3025 = vpack.c.bf16 %v2679, %v2677
    %v3026 = vpack.c.bf16 %v2680, %v2678
    %v3027 = vpack.c.bf16 %v2683, %v2681
    %v3028 = vpack.c.bf16 %v2684, %v2682
    %v3029 = vpack.c.bf16 %v2735, %v2733
    %v3030 = vpack.c.bf16 %v2736, %v2734
    %v3031 = vpack.c.bf16 %v2739, %v2737
    %v3032 = vpack.c.bf16 %v2740, %v2738
    %v3033 = vpack.c.bf16 %v2743, %v2741
    %v3034 = vpack.c.bf16 %v2744, %v2742
    %v3035 = vpack.c.bf16 %v2747, %v2745
    %v3036 = vpack.c.bf16 %v2748, %v2746
    %v3037 = vpack.c.bf16 %v2477, %v2475
    %v3038 = vpack.c.bf16 %v2478, %v2476
    %v3039 = vpack.c.bf16 %v2481, %v2479
    %v3040 = vpack.c.bf16 %v2482, %v2480
    %v3041 = vpack.c.bf16 %v2485, %v2483
    %v3042 = vpack.c.bf16 %v2486, %v2484
    %v3043 = vpack.c.bf16 %v2489, %v2487
    %v3044 = vpack.c.bf16 %v2490, %v2488
    %v3045 = vpack.c.bf16 %v2799, %v2797
    %v3046 = vpack.c.bf16 %v2800, %v2798
    %v3047 = vpack.c.bf16 %v2803, %v2801
    %v3048 = vpack.c.bf16 %v2804, %v2802
    %v3049 = vpack.c.bf16 %v2807, %v2805
    %v3050 = vpack.c.bf16 %v2808, %v2806
    %v3051 = vpack.c.bf16 %v2811, %v2809
    %v3052 = vpack.c.bf16 %v2812, %v2810
    %v3053 = vpack.c.bf16 %v2863, %v2861
    %v3054 = vpack.c.bf16 %v2864, %v2862
    %v3055 = vpack.c.bf16 %v2867, %v2865
    %v3056 = vpack.c.bf16 %v2868, %v2866
    %v3057 = vpack.c.bf16 %v2871, %v2869
    %v3058 = vpack.c.bf16 %v2872, %v2870
    %v3059 = vpack.c.bf16 %v2875, %v2873
    %v3060 = vpack.c.bf16 %v2876, %v2874
    %v3061 = vpack.c.bf16 %v2927, %v2925
    %v3062 = vpack.c.bf16 %v2928, %v2926
    %v3063 = vpack.c.bf16 %v2931, %v2929
    %v3064 = vpack.c.bf16 %v2932, %v2930
    %v3065 = vpack.c.bf16 %v2935, %v2933
    %v3066 = vpack.c.bf16 %v2936, %v2934
    %v3067 = vpack.c.bf16 %v2939, %v2937
    %v3068 = vpack.c.bf16 %v2940, %v2938
    %v3069 = vpack.c.bf16 %v2991, %v2989
    %v3070 = vpack.c.bf16 %v2992, %v2990
    %v3071 = vpack.c.bf16 %v2995, %v2993
    %v3072 = vpack.c.bf16 %v2996, %v2994
    %v3073 = vpack.c.bf16 %v2999, %v2997
    %v3074 = vpack.c.bf16 %v3000, %v2998
    %v3075 = vpack.c.bf16 %v3003, %v3001
    %v3076 = vpack.c.bf16 %v3004, %v3002
    %v3077 = vld [vmem:[%s4] sm:$0xff]
    %v3078 = vld [vmem:[%s4 + $0x8] sm:$0xff]
    %v3079 = vld [vmem:[%s4 + $0x10] sm:$0xf]
    %v3080 = vld [vmem:[%s4 + $0x14] sm:$0xff]
    %v3081 = vld [vmem:[%s4 + $0x1c] sm:$0xff]
    %v3082 = vld [vmem:[%s4 + $0x24] sm:$0xf]
    %3084 = vset.pattern.permute.xlu0 0
    %3085 = vperm.xlu0 %3084, %v2491
    %v3086 = vpop.permute.xlu0 %3085
    %3089 = vset.pattern.permute.xlu0 0
    %3090 = vperm.xlu0 %3089, %v2492
    %v3091 = vpop.permute.xlu0 %3090
    %v3099 = vunpack.c.l.b16 %v3077
    %v3100 = vunpack.c.h.b16 %v3077
    %v3101 = vunpack.c.l.b16 %v3078
    %v3102 = vunpack.c.h.b16 %v3078
    %v3103 = vunpack.c.l.b16 %v3079
    %v3104 = vunpack.c.l.b16 %v3080
    %v3105 = vunpack.c.h.b16 %v3080
    %v3106 = vunpack.c.l.b16 %v3081
    %v3107 = vunpack.c.h.b16 %v3081
    %v3108 = vunpack.c.l.b16 %v3082
    %v3109 = vpack.c.b16 %v3104, %v3099
    %v3110 = vpack.c.b16 %v3105, %v3100
    %v3111 = vpack.c.b16 %v3106, %v3101
    %v3112 = vpack.c.b16 %v3107, %v3102
    %v3113 = vpack.c.b16 %v3108, %v3103
    %vm3118 = vcmask 523264
    %v3120 = vsel %vm3118, %v3113, 0
    %3122 = vmatprep.subr.bf16.mxu0 %v3006
    %3123 = vmatpush1.bf16.msra.mxu0 %v3005
    %3124 = vmatprep.subr.bf16.mxu0 %v3008
    %3125 = vmatpush1.bf16.msra.mxu0 %v3007
    %3126 = vmatprep.subr.bf16.mxu0 %v3010
    %3127 = vmatpush1.bf16.msra.mxu0 %v3009
    %3128 = vmatprep.subr.bf16.mxu0 %v3012
    %3129 = vmatpush1.bf16.msra.mxu0 %v3011
    %3130 = vmatprep.subr.bf16.mxu0 %v3014
    %3131 = vmatpush1.bf16.msra.mxu0 %v3013
    %3132 = vmatprep.subr.bf16.mxu0 %v3016
    %3133 = vmatpush1.bf16.msra.mxu0 %v3015
    %3134 = vmatprep.subr.bf16.mxu0 %v3018
    %3135 = vmatpush1.bf16.msra.mxu0 %v3017
    %3136 = vmatprep.subr.bf16.mxu0 %v3020
    %3137 = vmatpush1.bf16.msra.mxu0 %v3019
    %3138 = vmatprep.subr.bf16.mxu0 %v3022
    %3139 = vmatpush1.bf16.msra.mxu0 %v3021
    %3140 = vmatprep.subr.bf16.mxu0 %v3024
    %3141 = vmatpush1.bf16.msra.mxu0 %v3023
    %3142 = vmatprep.subr.bf16.mxu0 %v3026
    %3143 = vmatpush1.bf16.msra.mxu0 %v3025
    %3144 = vmatprep.subr.bf16.mxu0 %v3028
    %3145 = vmatpush1.bf16.msra.mxu0 %v3027
    %3146 = vmatprep.subr.bf16.mxu0 %v3030
    %3147 = vmatpush1.bf16.msra.mxu0 %v3029
    %3148 = vmatprep.subr.bf16.mxu0 %v3032
    %3149 = vmatpush1.bf16.msra.mxu0 %v3031
    %3150 = vmatprep.subr.bf16.mxu0 %v3034
    %3151 = vmatpush1.bf16.msra.mxu0 %v3033
    %3152 = vmatprep.subr.bf16.mxu0 %v3036
    %3153 = vmatpush1.bf16.msra.mxu0 %v3035
    %3154 = vmatprep.mubr.bf16.mxu0 %v3110
    %3155 = vmatmul.mubr.bf16.gmra.mrb[0].mxu0 %v3109
    %v3156 = vpop.f32.mrb[0].mxu0
    %v3157 = vadd.f32 %v3086, %v3156
    %v3158 = vpop.f32.mrb[0].mxu0
    %v3159 = vadd.f32 %v3086, %v3158
    %v3160 = vpop.f32.mrb[0].mxu0
    %v3161 = vadd.f32 %v3091, %v3160
    %v3162 = vpop.f32.mrb[0].mxu0
    %v3163 = vadd.f32 %v3091, %v3162
    %3164 = vdwg.mxu0
    %3165 = vmatprep.subr.bf16.mxu0 %v3038
    %3166 = vmatpush1.bf16.msra.mxu0 %v3037
    %3167 = vmatprep.subr.bf16.mxu0 %v3040
    %3168 = vmatpush1.bf16.msra.mxu0 %v3039
    %3169 = vmatprep.subr.bf16.mxu0 %v3042
    %3170 = vmatpush1.bf16.msra.mxu0 %v3041
    %3171 = vmatprep.subr.bf16.mxu0 %v3044
    %3172 = vmatpush1.bf16.msra.mxu0 %v3043
    %3173 = vmatprep.subr.bf16.mxu0 %v3046
    %3174 = vmatpush1.bf16.msra.mxu0 %v3045
    %3175 = vmatprep.subr.bf16.mxu0 %v3048
    %3176 = vmatpush1.bf16.msra.mxu0 %v3047
    %3177 = vmatprep.subr.bf16.mxu0 %v3050
    %3178 = vmatpush1.bf16.msra.mxu0 %v3049
    %3179 = vmatprep.subr.bf16.mxu0 %v3052
    %3180 = vmatpush1.bf16.msra.mxu0 %v3051
    %3181 = vmatprep.subr.bf16.mxu0 %v3054
    %3182 = vmatpush1.bf16.msra.mxu0 %v3053
    %3183 = vmatprep.subr.bf16.mxu0 %v3056
    %3184 = vmatpush1.bf16.msra.mxu0 %v3055
    %3185 = vmatprep.subr.bf16.mxu0 %v3058
    %3186 = vmatpush1.bf16.msra.mxu0 %v3057
    %3187 = vmatprep.subr.bf16.mxu0 %v3060
    %3188 = vmatpush1.bf16.msra.mxu0 %v3059
    %3189 = vmatprep.subr.bf16.mxu0 %v3062
    %3190 = vmatpush1.bf16.msra.mxu0 %v3061
    %3191 = vmatprep.subr.bf16.mxu0 %v3064
    %3192 = vmatpush1.bf16.msra.mxu0 %v3063
    %3193 = vmatprep.subr.bf16.mxu0 %v3066
    %3194 = vmatpush1.bf16.msra.mxu0 %v3065
    %3195 = vmatprep.subr.bf16.mxu0 %v3068
    %3196 = vmatpush1.bf16.msra.mxu0 %v3067
    %3197 = vmatprep.mubr.bf16.mxu0 %v3112
    %3198 = vmatmul.mubr.bf16.gmra.mrb[0].mxu0 %v3111
    %v3199 = vpop.f32.mrb[0].mxu0
    %v3200 = vadd.f32 %v3157, %v3199
    %v3201 = vpop.f32.mrb[0].mxu0
    %v3202 = vadd.f32 %v3159, %v3201
    %v3203 = vpop.f32.mrb[0].mxu0
    %v3204 = vadd.f32 %v3161, %v3203
    %v3205 = vpop.f32.mrb[0].mxu0
    %v3206 = vadd.f32 %v3163, %v3205
    %3207 = vdwg.mxu0
    %3208 = vmatprep.subr.bf16.mxu0 %v3070
    %3209 = vmatpush1.bf16.msra.mxu0 %v3069
    %3210 = vmatprep.subr.bf16.mxu0 %v3072
    %3211 = vmatpush1.bf16.msra.mxu0 %v3071
    %3212 = vmatprep.subr.bf16.mxu0 %v3074
    %3213 = vmatpush1.bf16.msra.mxu0 %v3073
    %3214 = vmatprep.subr.bf16.mxu0 %v3076
    %3215 = vmatpush1.bf16.msra.mxu0 %v3075
    %3216 = vmatprep.subr.bf16.mxu0 0
    %3217 = vmatpush1.bf16.msra.mxu0 0
    %3218 = vmatprep.subr.bf16.mxu0 0
    %3219 = vmatpush1.bf16.msra.mxu0 0
    %3220 = vmatprep.subr.bf16.mxu0 0
    %3221 = vmatpush1.bf16.msra.mxu0 0
    %3222 = vmatprep.subr.bf16.mxu0 0
    %3223 = vmatpush1.bf16.msra.mxu0 0
    %3224 = vmatprep.subr.bf16.mxu0 0
    %3225 = vmatpush1.bf16.msra.mxu0 0
    %3226 = vmatprep.subr.bf16.mxu0 0
    %3227 = vmatpush1.bf16.msra.mxu0 0
    %3228 = vmatprep.subr.bf16.mxu0 0
    %3229 = vmatpush1.bf16.msra.mxu0 0
    %3230 = vmatprep.subr.bf16.mxu0 0
    %3231 = vmatpush1.bf16.msra.mxu0 0
    %3232 = vmatprep.subr.bf16.mxu0 0
    %3233 = vmatpush1.bf16.msra.mxu0 0
    %3234 = vmatprep.subr.bf16.mxu0 0
    %3235 = vmatpush1.bf16.msra.mxu0 0
    %3236 = vmatprep.subr.bf16.mxu0 0
    %3237 = vmatpush1.bf16.msra.mxu0 0
    %3238 = vmatprep.subr.bf16.mxu0 0
    %3239 = vmatpush1.bf16.msra.mxu0 0
    %3240 = vmatprep.mubr.bf16.mxu0 0
    %3241 = vmatmul.mubr.bf16.gmra.mrb[0].mxu0 %v3120
    %v3242 = vpop.f32.mrb[0].mxu0
    %v3243 = vadd.f32 %v3200, %v3242
    %v3244 = vpop.f32.mrb[0].mxu0
    %v3245 = vadd.f32 %v3202, %v3244
    %v3246 = vpop.f32.mrb[0].mxu0
    %v3247 = vadd.f32 %v3204, %v3246
    %v3248 = vpop.f32.mrb[0].mxu0
    %v3249 = vadd.f32 %v3206, %v3248
    %3250 = vdwg.mxu0
    %v3251 = vmax.f32 %v3243, 0.0
    %v3252 = vmax.f32 %v3245, 0.0
    %v3253 = vmax.f32 %v3247, 0.0
    %v3254 = vmax.f32 %v3249, 0.0
    %v3255 = vld [vmem:[%s6 + $0xd0] sm:$0xf]
    %3256 = vrot.lane.b32.xlu0 %v3251, 17
    %v3257 = vpop.permute.xlu0 %3256
    %3258 = vrot.lane.b32.xlu0 %v3253, 17
    %v3259 = vpop.permute.xlu0 %3258
    %3260 = vrot.lane.b32.xlu0 %v3252, 17
    %v3261 = vpop.permute.xlu0 %3260
    %3262 = vrot.lane.b32.xlu0 %v3254, 17
    %v3263 = vpop.permute.xlu0 %3262
    %v3264 = vsel %vm98, %v3257, %v3261
    %v3265 = vsel %vm98, %v3259, %v3263
    %v3266 = vsel %vm98, %v3261, %v3257
    %v3267 = vsel %vm98, %v3263, %v3259
    %v3268 = vsel %vm112, %v3266, 0.0
    %v3269 = vsel %vm113, %v3264, 0.0
    %v3270 = vsel %vm112, %v3267, 0.0
    %v3271 = vsel %vm113, %v3265, 0.0
    %3272 = vrot.lane.b32.xlu0 %v3251, 16
    %v3273 = vpop.permute.xlu0 %3272
    %3274 = vrot.lane.b32.xlu0 %v3253, 16
    %v3275 = vpop.permute.xlu0 %3274
    %3276 = vrot.lane.b32.xlu0 %v3252, 16
    %v3277 = vpop.permute.xlu0 %3276
    %3278 = vrot.lane.b32.xlu0 %v3254, 16
    %v3279 = vpop.permute.xlu0 %3278
    %v3280 = vsel %vm126, %v3273, %v3277
    %v3281 = vsel %vm126, %v3275, %v3279
    %v3282 = vsel %vm126, %v3277, %v3273
    %v3283 = vsel %vm126, %v3279, %v3275
    %v3284 = vsel %vm140, %v3282, 0.0
    %v3285 = vsel %vm141, %v3280, 0.0
    %v3286 = vsel %vm140, %v3283, 0.0
    %v3287 = vsel %vm141, %v3281, 0.0
    %3288 = vrot.lane.b32.xlu0 %v3251, 15
    %v3289 = vpop.permute.xlu0 %3288
    %3290 = vrot.lane.b32.xlu0 %v3253, 15
    %v3291 = vpop.permute.xlu0 %3290
    %3292 = vrot.lane.b32.xlu0 %v3252, 15
    %v3293 = vpop.permute.xlu0 %3292
    %3294 = vrot.lane.b32.xlu0 %v3254, 15
    %v3295 = vpop.permute.xlu0 %3294
    %v3296 = vsel %vm154, %v3289, %v3293
    %v3297 = vsel %vm154, %v3291, %v3295
    %v3298 = vsel %vm154, %v3293, %v3289
    %v3299 = vsel %vm154, %v3295, %v3291
    %v3300 = vsel %vm168, %v3298, 0.0
    %v3301 = vsel %vm169, %v3296, 0.0
    %v3302 = vsel %vm168, %v3299, 0.0
    %v3303 = vsel %vm169, %v3297, 0.0
    %3304 = vrot.lane.b32.xlu0 %v3251, 1
    %v3305 = vpop.permute.xlu0 %3304
    %3306 = vrot.lane.b32.xlu0 %v3253, 1
    %v3307 = vpop.permute.xlu0 %3306
    %3308 = vrot.lane.b32.xlu0 %v3252, 1
    %v3309 = vpop.permute.xlu0 %3308
    %3310 = vrot.lane.b32.xlu0 %v3254, 1
    %v3311 = vpop.permute.xlu0 %3310
    %v3312 = vsel %vm182, %v3305, %v3309
    %v3313 = vsel %vm182, %v3307, %v3311
    %v3314 = vsel %vm182, %v3309, %v3305
    %v3315 = vsel %vm182, %v3311, %v3307
    %v3316 = vsel %vm196, %v3314, 0.0
    %v3317 = vsel %vm197, %v3312, 0.0
    %v3318 = vsel %vm196, %v3315, 0.0
    %v3319 = vsel %vm197, %v3313, 0.0
    %3320 = vrot.lane.b32.xlu0 %v3251, 127
    %v3321 = vpop.permute.xlu0 %3320
    %3322 = vrot.lane.b32.xlu0 %v3253, 127
    %v3323 = vpop.permute.xlu0 %3322
    %3324 = vrot.lane.b32.xlu0 %v3252, 127
    %v3325 = vpop.permute.xlu0 %3324
    %3326 = vrot.lane.b32.xlu0 %v3254, 127
    %v3327 = vpop.permute.xlu0 %3326
    %v3328 = vsel %vm210, %v3321, %v3325
    %v3329 = vsel %vm210, %v3323, %v3327
    %v3330 = vsel %vm210, %v3325, %v3321
    %v3331 = vsel %vm210, %v3327, %v3323
    %v3332 = vsel %vm224, %v3328, 0.0
    %v3333 = vsel %vm225, %v3330, 0.0
    %v3334 = vsel %vm224, %v3329, 0.0
    %v3335 = vsel %vm225, %v3331, 0.0
    %3336 = vrot.lane.b32.xlu0 %v3251, 113
    %v3337 = vpop.permute.xlu0 %3336
    %3338 = vrot.lane.b32.xlu0 %v3253, 113
    %v3339 = vpop.permute.xlu0 %3338
    %3340 = vrot.lane.b32.xlu0 %v3252, 113
    %v3341 = vpop.permute.xlu0 %3340
    %3342 = vrot.lane.b32.xlu0 %v3254, 113
    %v3343 = vpop.permute.xlu0 %3342
    %v3344 = vsel %vm238, %v3337, %v3341
    %v3345 = vsel %vm238, %v3339, %v3343
    %v3346 = vsel %vm238, %v3341, %v3337
    %v3347 = vsel %vm238, %v3343, %v3339
    %v3348 = vsel %vm252, %v3344, 0.0
    %v3349 = vsel %vm253, %v3346, 0.0
    %v3350 = vsel %vm252, %v3345, 0.0
    %v3351 = vsel %vm253, %v3347, 0.0
    %3352 = vrot.lane.b32.xlu0 %v3251, 112
    %v3353 = vpop.permute.xlu0 %3352
    %3354 = vrot.lane.b32.xlu0 %v3253, 112
    %v3355 = vpop.permute.xlu0 %3354
    %3356 = vrot.lane.b32.xlu0 %v3252, 112
    %v3357 = vpop.permute.xlu0 %3356
    %3358 = vrot.lane.b32.xlu0 %v3254, 112
    %v3359 = vpop.permute.xlu0 %3358
    %v3360 = vsel %vm266, %v3353, %v3357
    %v3361 = vsel %vm266, %v3355, %v3359
    %v3362 = vsel %vm266, %v3357, %v3353
    %v3363 = vsel %vm266, %v3359, %v3355
    %v3364 = vsel %vm280, %v3360, 0.0
    %v3365 = vsel %vm281, %v3362, 0.0
    %v3366 = vsel %vm280, %v3361, 0.0
    %v3367 = vsel %vm281, %v3363, 0.0
    %3368 = vrot.lane.b32.xlu0 %v3251, 111
    %v3369 = vpop.permute.xlu0 %3368
    %3370 = vrot.lane.b32.xlu0 %v3253, 111
    %v3371 = vpop.permute.xlu0 %3370
    %3372 = vrot.lane.b32.xlu0 %v3252, 111
    %v3373 = vpop.permute.xlu0 %3372
    %3374 = vrot.lane.b32.xlu0 %v3254, 111
    %v3375 = vpop.permute.xlu0 %3374
    %v3376 = vsel %vm294, %v3369, %v3373
    %v3377 = vsel %vm294, %v3371, %v3375
    %v3378 = vsel %vm294, %v3373, %v3369
    %v3379 = vsel %vm294, %v3375, %v3371
    %v3380 = vsel %vm308, %v3376, 0.0
    %v3381 = vsel %vm309, %v3378, 0.0
    %v3382 = vsel %vm308, %v3377, 0.0
    %v3383 = vsel %vm309, %v3379, 0.0
    %v3384 = vpack.c.bf16 %v3270, %v3268
    %v3385 = vpack.c.bf16 %v3271, %v3269
    %v3386 = vpack.c.bf16 %v3286, %v3284
    %v3387 = vpack.c.bf16 %v3287, %v3285
    %v3388 = vpack.c.bf16 %v3302, %v3300
    %v3389 = vpack.c.bf16 %v3303, %v3301
    %v3390 = vpack.c.bf16 %v3318, %v3316
    %v3391 = vpack.c.bf16 %v3319, %v3317
    %v3392 = vpack.c.bf16 %v3253, %v3251
    %v3393 = vpack.c.bf16 %v3254, %v3252
    %v3394 = vpack.c.bf16 %v3334, %v3332
    %v3395 = vpack.c.bf16 %v3335, %v3333
    %v3396 = vpack.c.bf16 %v3350, %v3348
    %v3397 = vpack.c.bf16 %v3351, %v3349
    %v3398 = vpack.c.bf16 %v3366, %v3364
    %v3399 = vpack.c.bf16 %v3367, %v3365
    %v3400 = vpack.c.bf16 %v3382, %v3380
    %v3401 = vpack.c.bf16 %v3383, %v3381
    %v3402 = vld [vmem:[%s5] sm:$0xf]
    %3404 = vset.pattern.permute.xlu0 0
    %3405 = vperm.xlu0 %3404, %v3255
    %v3406 = vpop.permute.xlu0 %3405
    %v3410 = vunpack.c.l.s4 1983009808
    %v3411 = vunpack.c.0.s8 %v3410
    %v3412 = vlaneseq
    %v3413 = vshrl.u32 %v3412, 7
    %v3414 = vsub.s32 %v3411, %v3413
    %v3415 = vrot.slane %v3402, %v3414
    %v3416 = vcombine.high %v3415, %v3415
    %v3419 = vsel %vm500, %v3416, 0
    %3421 = vmatprep.subr.bf16.mxu0 %v3385
    %3422 = vmatpush1.bf16.msra.mxu0 %v3384
    %3423 = vmatprep.subr.bf16.mxu0 %v3387
    %3424 = vmatpush1.bf16.msra.mxu0 %v3386
    %3425 = vmatprep.subr.bf16.mxu0 %v3389
    %3426 = vmatpush1.bf16.msra.mxu0 %v3388
    %3427 = vmatprep.subr.bf16.mxu0 %v3391
    %3428 = vmatpush1.bf16.msra.mxu0 %v3390
    %3429 = vmatprep.subr.bf16.mxu0 %v3393
    %3430 = vmatpush1.bf16.msra.mxu0 %v3392
    %3431 = vmatprep.subr.bf16.mxu0 %v3395
    %3432 = vmatpush1.bf16.msra.mxu0 %v3394
    %3433 = vmatprep.subr.bf16.mxu0 %v3397
    %3434 = vmatpush1.bf16.msra.mxu0 %v3396
    %3435 = vmatprep.subr.bf16.mxu0 %v3399
    %3436 = vmatpush1.bf16.msra.mxu0 %v3398
    %3437 = vmatprep.subr.bf16.mxu0 %v3401
    %3438 = vmatpush1.bf16.msra.mxu0 %v3400
    %3439 = vmatprep.subr.bf16.mxu0 0
    %3440 = vmatpush1.bf16.msra.mxu0 0
    %3441 = vmatprep.subr.bf16.mxu0 0
    %3442 = vmatpush1.bf16.msra.mxu0 0
    %3443 = vmatprep.subr.bf16.mxu0 0
    %3444 = vmatpush1.bf16.msra.mxu0 0
    %3445 = vmatprep.subr.bf16.mxu0 0
    %3446 = vmatpush1.bf16.msra.mxu0 0
    %3447 = vmatprep.subr.bf16.mxu0 0
    %3448 = vmatpush1.bf16.msra.mxu0 0
    %3449 = vmatprep.subr.bf16.mxu0 0
    %3450 = vmatpush1.bf16.msra.mxu0 0
    %3451 = vmatprep.subr.bf16.mxu0 0
    %3452 = vmatpush1.bf16.msra.mxu0 0
    %3453 = vmatprep.mubr.bf16.mxu0 %v3419
    %3454 = vmatmul.mubr.bf16.gmra.mrb[0].mxu0 %v3415
    %v3455 = vpop.f32.mrb[0].mxu0
    %v3456 = vadd.f32 %v3406, %v3455
    %v3457 = vpop.f32.mrb[0].mxu0
    %v3458 = vadd.f32 %v3406, %v3457
    %v3459 = vpop.f32.mrb[0].mxu0
    %v3460 = vpop.f32.mrb[0].mxu0
    %3461 = vdwg.mxu0
    %v3462 = vmax.f32 %v3456, 0.0
    %v3463 = vmax.f32 %v3458, 0.0
    %v3466 = vcombine.low %v3251, %v3252
    %3468 = vst [vmem:[#allocation4] sm:$0xff] %v3466
    %v3471 = vcombine.low %v3462, %v3463
    %3473 = vst [vmem:[%s13] sm:$0xff] %v3471
    %v3474 = vld [vmem:[%s7] sm:$0xff]
    %v3475 = vld [vmem:[%s7 + $0x8] sm:$0xff]
    %v3476 = vld [vmem:[%s7 + $0x10] sm:$0xff]
    %v3477 = vld [vmem:[%s7 + $0x18] sm:$0xff]
    %v3478 = vld [vmem:[%s7 + $0x20] sm:$0xff]
    %v3479 = vld [vmem:[%s7 + $0x28] sm:$0xff]
    %v3480 = vld [vmem:[%s7 + $0x30] sm:$0xff]
    %v3481 = vld [vmem:[%s7 + $0x38] sm:$0xff]
    %v3482 = vld [vmem:[%s7 + $0x40] sm:$0xff]
    %v3483 = vld [vmem:[%s7 + $0x48] sm:$0xff]
    %v3484 = vld [vmem:[%s7 + $0x50] sm:$0xff]
    %v3485 = vld [vmem:[%s7 + $0x58] sm:$0xff]
    %v3486 = vld [vmem:[%s7 + $0x60] sm:$0xff]
    %v3487 = vld [vmem:[%s7 + $0x68] sm:$0xff]
    %v3488 = vld [vmem:[%s7 + $0x70] sm:$0xff]
    %v3489 = vld [vmem:[%s7 + $0x78] sm:$0xff]
    %v3490 = vld [vmem:[%s7 + $0x80] sm:$0xff]
    %v3491 = vld [vmem:[%s7 + $0x88] sm:$0xff]
    %v3492 = vld [vmem:[%s7 + $0x90] sm:$0xff]
    %v3493 = vld [vmem:[%s7 + $0x98] sm:$0xff]
    %v3494 = vld [vmem:[%s7 + $0xa0] sm:$0xff]
    %v3495 = vld [vmem:[%s7 + $0xa8] sm:$0xff]
    %v3496 = vld [vmem:[%s7 + $0xb0] sm:$0xff]
    %v3497 = vld [vmem:[%s7 + $0xb8] sm:$0xff]
    %v3498 = vld [vmem:[%s7 + $0xc0] sm:$0xff]
    %v3499 = vld [vmem:[%s7 + $0xc8] sm:$0xff]
    %v3500 = vld [vmem:[%s7 + $0xd0] sm:$0xff]
    %v3501 = vld [vmem:[%s7 + $0xd8] sm:$0xff]
    %v3502 = vld [vmem:[%s7 + $0xe0] sm:$0xff]
    %v3503 = vld [vmem:[%s7 + $0xe8] sm:$0xff]
    %v3504 = vld [vmem:[%s7 + $0xf0] sm:$0xff]
    %v3505 = vld [vmem:[%s7 + $0xf8] sm:$0xff]
    %v3506 = vld [vmem:[%s10] sm:$0x1]
    %v3507 = vlaneseq
    %v3508 = vshrl.u32 %v3507, 7
    %v3509 = vsub.s32 0, %v3508
    %v3510 = vrot.slane %v3506, %v3509
    %3511 = vmatprep.subr.mxu0 0.0
    %3512 = vmatpush1.msra.mxu0 %v3474
    %3513 = vmatprep.subr.mxu0 0.0
    %3514 = vmatpush1.msra.mxu0 %v3475
    %3515 = vmatprep.subr.mxu0 0.0
    %3516 = vmatpush1.msra.mxu0 %v3476
    %3517 = vmatprep.subr.mxu0 0.0
    %3518 = vmatpush1.msra.mxu0 %v3477
    %3519 = vmatprep.subr.mxu0 0.0
    %3520 = vmatpush1.msra.mxu0 %v3478
    %3521 = vmatprep.subr.mxu0 0.0
    %3522 = vmatpush1.msra.mxu0 %v3479
    %3523 = vmatprep.subr.mxu0 0.0
    %3524 = vmatpush1.msra.mxu0 %v3480
    %3525 = vmatprep.subr.mxu0 0.0
    %3526 = vmatpush1.msra.mxu0 %v3481
    %3527 = vmatprep.subr.mxu0 0.0
    %3528 = vmatpush1.msra.mxu0 %v3482
    %3529 = vmatprep.subr.mxu0 0.0
    %3530 = vmatpush1.msra.mxu0 %v3483
    %3531 = vmatprep.subr.mxu0 0.0
    %3532 = vmatpush1.msra.mxu0 %v3484
    %3533 = vmatprep.subr.mxu0 0.0
    %3534 = vmatpush1.msra.mxu0 %v3485
    %3535 = vmatprep.subr.mxu0 0.0
    %3536 = vmatpush1.msra.mxu0 %v3486
    %3537 = vmatprep.subr.mxu0 0.0
    %3538 = vmatpush1.msra.mxu0 %v3487
    %3539 = vmatprep.subr.mxu0 0.0
    %3540 = vmatpush1.msra.mxu0 %v3488
    %3541 = vmatprep.subr.mxu0 0.0
    %3542 = vmatpush1.msra.mxu0 %v3489
    %3543 = vmatprep.subr.mxu0 0.0
    %3544 = vmatpush1.msra.mxu0 %v3490
    %3545 = vmatprep.subr.mxu0 0.0
    %3546 = vmatpush1.msra.mxu0 %v3491
    %3547 = vmatprep.subr.mxu0 0.0
    %3548 = vmatpush1.msra.mxu0 %v3492
    %3549 = vmatprep.subr.mxu0 0.0
    %3550 = vmatpush1.msra.mxu0 %v3493
    %3551 = vmatprep.subr.mxu0 0.0
    %3552 = vmatpush1.msra.mxu0 %v3494
    %3553 = vmatprep.subr.mxu0 0.0
    %3554 = vmatpush1.msra.mxu0 %v3495
    %3555 = vmatprep.subr.mxu0 0.0
    %3556 = vmatpush1.msra.mxu0 %v3496
    %3557 = vmatprep.subr.mxu0 0.0
    %3558 = vmatpush1.msra.mxu0 %v3497
    %3559 = vmatprep.subr.mxu0 0.0
    %3560 = vmatpush1.msra.mxu0 %v3498
    %3561 = vmatprep.subr.mxu0 0.0
    %3562 = vmatpush1.msra.mxu0 %v3499
    %3563 = vmatprep.subr.mxu0 0.0
    %3564 = vmatpush1.msra.mxu0 %v3500
    %3565 = vmatprep.subr.mxu0 0.0
    %3566 = vmatpush1.msra.mxu0 %v3501
    %3567 = vmatprep.subr.mxu0 0.0
    %3568 = vmatpush1.msra.mxu0 %v3502
    %3569 = vmatprep.subr.mxu0 0.0
    %3570 = vmatpush1.msra.mxu0 %v3503
    %3571 = vmatprep.subr.mxu0 0.0
    %3572 = vmatpush1.msra.mxu0 %v3504
    %3573 = vmatprep.subr.mxu0 0.0
    %3574 = vmatpush1.msra.mxu0 %v3505
    %3575 = vmatprep.mubr.f32.mxu0 %v3463
    %3576 = vmatmul.mubr.f32.gmra.mrb[0].mxu0 %v3462
    %v3577 = vpop.f32.mrb[0].mxu0
    %v3578 = vadd.f32 %v3510, %v3577
    %v3579 = vpop.f32.mrb[0].mxu0
    %3580 = vdwg.mxu0
    %v3581 = vxor.u32 %v3578, 2147483648
    %v3582 = vmul.f32 %v3581, 1.442695
    %v3583 = vpow.pop %v3582
    %v3584 = vadd.f32 %v3583, 1.0
    %v3585 = vrcp.pop %v3584
    %v3586 = vmul.f32 1.0, %v3585
    %v3587 = vld [vmem:[%s8] sm:$0xff]
    %v3588 = vld [vmem:[%s8 + $0x8] sm:$0xff]
    %v3589 = vld [vmem:[%s8 + $0x10] sm:$0xff]
    %v3590 = vld [vmem:[%s8 + $0x18] sm:$0xff]
    %v3591 = vld [vmem:[%s8 + $0x20] sm:$0xff]
    %v3592 = vld [vmem:[%s8 + $0x28] sm:$0xff]
    %v3593 = vld [vmem:[%s8 + $0x30] sm:$0xff]
    %v3594 = vld [vmem:[%s8 + $0x38] sm:$0xff]
    %v3595 = vld [vmem:[%s8 + $0x40] sm:$0xff]
    %v3596 = vld [vmem:[%s8 + $0x48] sm:$0xff]
    %v3597 = vld [vmem:[%s8 + $0x50] sm:$0xff]
    %v3598 = vld [vmem:[%s8 + $0x58] sm:$0xff]
    %v3599 = vld [vmem:[%s8 + $0x60] sm:$0xff]
    %v3600 = vld [vmem:[%s8 + $0x68] sm:$0xff]
    %v3601 = vld [vmem:[%s8 + $0x70] sm:$0xff]
    %v3602 = vld [vmem:[%s8 + $0x78] sm:$0xff]
    %v3603 = vld [vmem:[%s10 + $0x1] sm:$0x1]
    %v3604 = vlaneseq
    %v3605 = vshrl.u32 %v3604, 7
    %v3606 = vsub.s32 0, %v3605
    %v3607 = vrot.slane %v3603, %v3606
    %3608 = vmatprep.subr.mxu0 0.0
    %3609 = vmatpush1.msra.mxu0 %v3587
    %3610 = vmatprep.subr.mxu0 0.0
    %3611 = vmatpush1.msra.mxu0 %v3588
    %3612 = vmatprep.subr.mxu0 0.0
    %3613 = vmatpush1.msra.mxu0 %v3589
    %3614 = vmatprep.subr.mxu0 0.0
    %3615 = vmatpush1.msra.mxu0 %v3590
    %3616 = vmatprep.subr.mxu0 0.0
    %3617 = vmatpush1.msra.mxu0 %v3591
    %3618 = vmatprep.subr.mxu0 0.0
    %3619 = vmatpush1.msra.mxu0 %v3592
    %3620 = vmatprep.subr.mxu0 0.0
    %3621 = vmatpush1.msra.mxu0 %v3593
    %3622 = vmatprep.subr.mxu0 0.0
    %3623 = vmatpush1.msra.mxu0 %v3594
    %3624 = vmatprep.subr.mxu0 0.0
    %3625 = vmatpush1.msra.mxu0 %v3595
    %3626 = vmatprep.subr.mxu0 0.0
    %3627 = vmatpush1.msra.mxu0 %v3596
    %3628 = vmatprep.subr.mxu0 0.0
    %3629 = vmatpush1.msra.mxu0 %v3597
    %3630 = vmatprep.subr.mxu0 0.0
    %3631 = vmatpush1.msra.mxu0 %v3598
    %3632 = vmatprep.subr.mxu0 0.0
    %3633 = vmatpush1.msra.mxu0 %v3599
    %3634 = vmatprep.subr.mxu0 0.0
    %3635 = vmatpush1.msra.mxu0 %v3600
    %3636 = vmatprep.subr.mxu0 0.0
    %3637 = vmatpush1.msra.mxu0 %v3601
    %3638 = vmatprep.subr.mxu0 0.0
    %3639 = vmatpush1.msra.mxu0 %v3602
    %3640 = vmatprep.subr.mxu0 0.0
    %3641 = vmatpush1.msra.mxu0 0.0
    %3642 = vmatprep.subr.mxu0 0.0
    %3643 = vmatpush1.msra.mxu0 0.0
    %3644 = vmatprep.subr.mxu0 0.0
    %3645 = vmatpush1.msra.mxu0 0.0
    %3646 = vmatprep.subr.mxu0 0.0
    %3647 = vmatpush1.msra.mxu0 0.0
    %3648 = vmatprep.subr.mxu0 0.0
    %3649 = vmatpush1.msra.mxu0 0.0
    %3650 = vmatprep.subr.mxu0 0.0
    %3651 = vmatpush1.msra.mxu0 0.0
    %3652 = vmatprep.subr.mxu0 0.0
    %3653 = vmatpush1.msra.mxu0 0.0
    %3654 = vmatprep.subr.mxu0 0.0
    %3655 = vmatpush1.msra.mxu0 0.0
    %3656 = vmatprep.subr.mxu0 0.0
    %3657 = vmatpush1.msra.mxu0 0.0
    %3658 = vmatprep.subr.mxu0 0.0
    %3659 = vmatpush1.msra.mxu0 0.0
    %3660 = vmatprep.subr.mxu0 0.0
    %3661 = vmatpush1.msra.mxu0 0.0
    %3662 = vmatprep.subr.mxu0 0.0
    %3663 = vmatpush1.msra.mxu0 0.0
    %3664 = vmatprep.subr.mxu0 0.0
    %3665 = vmatpush1.msra.mxu0 0.0
    %3666 = vmatprep.subr.mxu0 0.0
    %3667 = vmatpush1.msra.mxu0 0.0
    %3668 = vmatprep.subr.mxu0 0.0
    %3669 = vmatpush1.msra.mxu0 0.0
    %3670 = vmatprep.subr.mxu0 0.0
    %3671 = vmatpush1.msra.mxu0 0.0
    %3672 = vmatprep.mubr.f32.mxu0 0.0
    %3673 = vmatmul.mubr.f32.gmra.mrb[0].mxu0 %v3586
    %v3674 = vpop.f32.mrb[0].mxu0
    %v3675 = vadd.f32 %v3607, %v3674
    %v3676 = vpop.f32.mrb[0].mxu0
    %3677 = vdwg.mxu0
    %v3678 = vxor.u32 %v3675, 2147483648
    %v3679 = vmul.f32 %v3678, 1.442695
    %v3680 = vpow.pop %v3679
    %v3681 = vadd.f32 %v3680, 1.0
    %v3682 = vrcp.pop %v3681
    %v3683 = vmul.f32 1.0, %v3682
    %v3684 = vld [vmem:[%s9] sm:$0xff]
    %v3685 = vld [vmem:[%s9 + $0x8] sm:$0xff]
    %v3686 = vld [vmem:[%s9 + $0x10] sm:$0xff]
    %v3687 = vld [vmem:[%s9 + $0x18] sm:$0xff]
    %v3688 = vld [vmem:[%s9 + $0x20] sm:$0xff]
    %v3689 = vld [vmem:[%s9 + $0x28] sm:$0xff]
    %v3690 = vld [vmem:[%s9 + $0x30] sm:$0xff]
    %v3691 = vld [vmem:[%s9 + $0x38] sm:$0xff]
    %v3692 = vld [vmem:[%s9 + $0x40] sm:$0xff]
    %v3693 = vld [vmem:[%s9 + $0x48] sm:$0xff]
    %v3694 = vld [vmem:[%s9 + $0x50] sm:$0xff]
    %v3695 = vld [vmem:[%s9 + $0x58] sm:$0xff]
    %v3696 = vld [vmem:[%s9 + $0x60] sm:$0xff]
    %v3697 = vld [vmem:[%s9 + $0x68] sm:$0xff]
    %v3698 = vld [vmem:[%s9 + $0x70] sm:$0xff]
    %v3699 = vld [vmem:[%s9 + $0x78] sm:$0xff]
    %v3700 = vld [vmem:[%s10 + $0x2] sm:$0x1]
    %v3701 = vlaneseq
    %v3702 = vshrl.u32 %v3701, 7
    %v3703 = vsub.s32 0, %v3702
    %v3704 = vrot.slane %v3700, %v3703
    %3705 = vmatprep.subr.mxu0 0.0
    %3706 = vmatpush1.msra.mxu0 %v3684
    %3707 = vmatprep.subr.mxu0 0.0
    %3708 = vmatpush1.msra.mxu0 %v3685
    %3709 = vmatprep.subr.mxu0 0.0
    %3710 = vmatpush1.msra.mxu0 %v3686
    %3711 = vmatprep.subr.mxu0 0.0
    %3712 = vmatpush1.msra.mxu0 %v3687
    %3713 = vmatprep.subr.mxu0 0.0
    %3714 = vmatpush1.msra.mxu0 %v3688
    %3715 = vmatprep.subr.mxu0 0.0
    %3716 = vmatpush1.msra.mxu0 %v3689
    %3717 = vmatprep.subr.mxu0 0.0
    %3718 = vmatpush1.msra.mxu0 %v3690
    %3719 = vmatprep.subr.mxu0 0.0
    %3720 = vmatpush1.msra.mxu0 %v3691
    %3721 = vmatprep.subr.mxu0 0.0
    %3722 = vmatpush1.msra.mxu0 %v3692
    %3723 = vmatprep.subr.mxu0 0.0
    %3724 = vmatpush1.msra.mxu0 %v3693
    %3725 = vmatprep.subr.mxu0 0.0
    %3726 = vmatpush1.msra.mxu0 %v3694
    %3727 = vmatprep.subr.mxu0 0.0
    %3728 = vmatpush1.msra.mxu0 %v3695
    %3729 = vmatprep.subr.mxu0 0.0
    %3730 = vmatpush1.msra.mxu0 %v3696
    %3731 = vmatprep.subr.mxu0 0.0
    %3732 = vmatpush1.msra.mxu0 %v3697
    %3733 = vmatprep.subr.mxu0 0.0
    %3734 = vmatpush1.msra.mxu0 %v3698
    %3735 = vmatprep.subr.mxu0 0.0
    %3736 = vmatpush1.msra.mxu0 %v3699
    %3737 = vmatprep.subr.mxu0 0.0
    %3738 = vmatpush1.msra.mxu0 0.0
    %3739 = vmatprep.subr.mxu0 0.0
    %3740 = vmatpush1.msra.mxu0 0.0
    %3741 = vmatprep.subr.mxu0 0.0
    %3742 = vmatpush1.msra.mxu0 0.0
    %3743 = vmatprep.subr.mxu0 0.0
    %3744 = vmatpush1.msra.mxu0 0.0
    %3745 = vmatprep.subr.mxu0 0.0
    %3746 = vmatpush1.msra.mxu0 0.0
    %3747 = vmatprep.subr.mxu0 0.0
    %3748 = vmatpush1.msra.mxu0 0.0
    %3749 = vmatprep.subr.mxu0 0.0
    %3750 = vmatpush1.msra.mxu0 0.0
    %3751 = vmatprep.subr.mxu0 0.0
    %3752 = vmatpush1.msra.mxu0 0.0
    %3753 = vmatprep.subr.mxu0 0.0
    %3754 = vmatpush1.msra.mxu0 0.0
    %3755 = vmatprep.subr.mxu0 0.0
    %3756 = vmatpush1.msra.mxu0 0.0
    %3757 = vmatprep.subr.mxu0 0.0
    %3758 = vmatpush1.msra.mxu0 0.0
    %3759 = vmatprep.subr.mxu0 0.0
    %3760 = vmatpush1.msra.mxu0 0.0
    %3761 = vmatprep.subr.mxu0 0.0
    %3762 = vmatpush1.msra.mxu0 0.0
    %3763 = vmatprep.subr.mxu0 0.0
    %3764 = vmatpush1.msra.mxu0 0.0
    %3765 = vmatprep.subr.mxu0 0.0
    %3766 = vmatpush1.msra.mxu0 0.0
    %3767 = vmatprep.subr.mxu0 0.0
    %3768 = vmatpush1.msra.mxu0 0.0
    %3769 = vmatprep.mubr.f32.mxu0 0.0
    %3770 = vmatmul.mubr.f32.gmra.mrb[0].mxu0 %v3683
    %v3771 = vpop.f32.mrb[0].mxu0
    %v3772 = vadd.f32 %v3704, %v3771
    %v3773 = vpop.f32.mrb[0].mxu0
    %3774 = vdwg.mxu0
    %v3775 = vxor.u32 %v3772, 2147483648
    %v3776 = vmul.f32 %v3775, 1.442695
    %v3777 = vpow.pop %v3776
    %v3778 = vadd.f32 %v3777, 1.0
    %v3779 = vrcp.pop %v3778
    %v3780 = vmul.f32 1.0, %v3779
    %vm3781 = vcmask 27648
    %3782 = vst.msk [vmem:[#allocation2] sm:$0xf] %vm3781, %v3780
    %vm3783 = vcmask 31744
    %v3785 = vsel %vm3783, %v3780, 0
    %vm3787 = vcmask 1043456
    %v3788 = vsel %vm3787, %v3251, 0
    %v3790 = vsel %vm3787, %v3252, 0
    %3792 = vmatprep.subr.mxu0 %v3790
    %3793 = vmatpush1.msra.mxu0 %v3788
    %3794 = vmatprep.subr.mxu0 0.0
    %3795 = vmatpush1.msra.mxu0 0.0
    %3796 = vmatprep.subr.mxu0 0.0
    %3797 = vmatpush1.msra.mxu0 0.0
    %3798 = vmatprep.subr.mxu0 0.0
    %3799 = vmatpush1.msra.mxu0 0.0
    %3800 = vmatprep.subr.mxu0 0.0
    %3801 = vmatpush1.msra.mxu0 0.0
    %3802 = vmatprep.subr.mxu0 0.0
    %3803 = vmatpush1.msra.mxu0 0.0
    %3804 = vmatprep.subr.mxu0 0.0
    %3805 = vmatpush1.msra.mxu0 0.0
    %3806 = vmatprep.subr.mxu0 0.0
    %3807 = vmatpush1.msra.mxu0 0.0
    %3808 = vmatprep.subr.mxu0 0.0
    %3809 = vmatpush1.msra.mxu0 0.0
    %3810 = vmatprep.subr.mxu0 0.0
    %3811 = vmatpush1.msra.mxu0 0.0
    %3812 = vmatprep.subr.mxu0 0.0
    %3813 = vmatpush1.msra.mxu0 0.0
    %3814 = vmatprep.subr.mxu0 0.0
    %3815 = vmatpush1.msra.mxu0 0.0
    %3816 = vmatprep.subr.mxu0 0.0
    %3817 = vmatpush1.msra.mxu0 0.0
    %3818 = vmatprep.subr.mxu0 0.0
    %3819 = vmatpush1.msra.mxu0 0.0
    %3820 = vmatprep.subr.mxu0 0.0
    %3821 = vmatpush1.msra.mxu0 0.0
    %3822 = vmatprep.subr.mxu0 0.0
    %3823 = vmatpush1.msra.mxu0 0.0
    %3824 = vmatprep.subr.mxu0 0.0
    %3825 = vmatpush1.msra.mxu0 0.0
    %3826 = vmatprep.subr.mxu0 0.0
    %3827 = vmatpush1.msra.mxu0 0.0
    %3828 = vmatprep.subr.mxu0 0.0
    %3829 = vmatpush1.msra.mxu0 0.0
    %3830 = vmatprep.subr.mxu0 0.0
    %3831 = vmatpush1.msra.mxu0 0.0
    %3832 = vmatprep.subr.mxu0 0.0
    %3833 = vmatpush1.msra.mxu0 0.0
    %3834 = vmatprep.subr.mxu0 0.0
    %3835 = vmatpush1.msra.mxu0 0.0
    %3836 = vmatprep.subr.mxu0 0.0
    %3837 = vmatpush1.msra.mxu0 0.0
    %3838 = vmatprep.subr.mxu0 0.0
    %3839 = vmatpush1.msra.mxu0 0.0
    %3840 = vmatprep.subr.mxu0 0.0
    %3841 = vmatpush1.msra.mxu0 0.0
    %3842 = vmatprep.subr.mxu0 0.0
    %3843 = vmatpush1.msra.mxu0 0.0
    %3844 = vmatprep.subr.mxu0 0.0
    %3845 = vmatpush1.msra.mxu0 0.0
    %3846 = vmatprep.subr.mxu0 0.0
    %3847 = vmatpush1.msra.mxu0 0.0
    %3848 = vmatprep.subr.mxu0 0.0
    %3849 = vmatpush1.msra.mxu0 0.0
    %3850 = vmatprep.subr.mxu0 0.0
    %3851 = vmatpush1.msra.mxu0 0.0
    %3852 = vmatprep.subr.mxu0 0.0
    %3853 = vmatpush1.msra.mxu0 0.0
    %3854 = vmatprep.subr.mxu0 0.0
    %3855 = vmatpush1.msra.mxu0 0.0
    %3856 = vmatprep.mubr.f32.mxu0 0.0
    %3857 = vmatmul.mubr.f32.gmra.mrb[0].mxu0 %v3785
    %v3858 = vpop.f32.mrb[0].mxu0
    %v3859 = vadd.f32 0.0, %v3858
    %v3860 = vpop.f32.mrb[0].mxu0
    %v3861 = vadd.f32 0.0, %v3860
    %3862 = vdwg.mxu0
    %v3865 = vcombine.low %v3859, %v3861
    %3867 = vst [vmem:[#allocation6] sm:$0xff] %v3865
    // Predicated region
    $region46: #{ours_forward.1} parent=1 // pred_check
      _
    $region47: #{ours_forward.1} parent=1 // pred_check_branch
      %3869 = sbr.rel (0) target = $region49
    $region48: #{ours_forward.1} parent=1 // pred_region
      %s3871 = ssub.s32 64, 64
      %3872 = vsyncadd [#allocation3], %s3871
      %s3874 = sshll.u32 [#allocation2], 4
      %s3875 = int_to_ptr.vmem [resolvable:$true] %s3874
      %3877 = dma.vmem_to_hbm [thread:$0]  %s3875, 64, %s11, [#allocation3]
    $region49: #{ours_forward.1} parent=1 // pred_fallthru
      _
    // Predicated region
    $region50: #{ours_forward.1} parent=1 // pred_check
      _
    $region51: #{ours_forward.1} parent=1 // pred_check_branch
      %3879 = sbr.rel (0) target = $region53
    $region52: #{ours_forward.1} parent=1 // pred_region
      %s3881 = ssub.s32 128, 128
      %3882 = vsyncadd [#allocation5], %s3881
      %s3884 = sshll.u32 [#allocation4], 4
      %s3885 = int_to_ptr.vmem [resolvable:$true] %s3884
      %3887 = dma.vmem_to_hbm [thread:$0]  %s3885, 128, %s12, [#allocation5]
    $region53: #{ours_forward.1} parent=1 // pred_fallthru
      _
    // Predicated region
    $region54: #{ours_forward.1} parent=1 // pred_check
      _
    $region55: #{ours_forward.1} parent=1 // pred_check_branch
      %3889 = sbr.rel (0) target = $region57
    $region56: #{ours_forward.1} parent=1 // pred_region
      _
    $region57: #{ours_forward.1} parent=1 // pred_fallthru
      _
    // Predicated region
    $region58: #{ours_forward.1} parent=1 // pred_check
      _
    $region59: #{ours_forward.1} parent=1 // pred_check_branch
      %3891 = sbr.rel (0) target = $region61
    $region60: #{ours_forward.1} parent=1 // pred_region
      %s3893 = ssub.s32 128, 128
      %3894 = vsyncadd [#allocation5], %s3893
      %s3896 = sshll.u32 [#allocation6], 4
      %s3897 = int_to_ptr.vmem [resolvable:$true] %s3896
      %3899 = dma.vmem_to_hbm [thread:$0]  %s3897, 128, %s14, [#allocation5]
    $region61: #{ours_forward.1} parent=1 // pred_fallthru
      _
    // Predicated region
    $region62: #{ours_forward.1} parent=1 // pred_check
      _
    $region63: #{ours_forward.1} parent=1 // pred_check_branch
      %3901 = sbr.rel (0) target = $region65
    $region64: #{ours_forward.1} parent=1 // pred_region
      %3902 = dma.done [#allocation3], 64
    $region65: #{ours_forward.1} parent=1 // pred_fallthru
      _
    // Predicated region
    $region66: #{ours_forward.1} parent=1 // pred_check
      _
    $region67: #{ours_forward.1} parent=1 // pred_check_branch
      %3904 = sbr.rel (0) target = $region69
    $region68: #{ours_forward.1} parent=1 // pred_region
      %3905 = dma.done [#allocation5], 128
    $region69: #{ours_forward.1} parent=1 // pred_fallthru
      _
    // Predicated region
    $region70: #{ours_forward.1} parent=1 // pred_check
      _
    $region71: #{ours_forward.1} parent=1 // pred_check_branch
      %3907 = sbr.rel (0) target = $region73
    $region72: #{ours_forward.1} parent=1 // pred_region
      _
    $region73: #{ours_forward.1} parent=1 // pred_fallthru
      _
    // Predicated region
    $region74: #{ours_forward.1} parent=1 // pred_check
      _
    $region75: #{ours_forward.1} parent=1 // pred_check_branch
      %3909 = sbr.rel (0) target = $region77
    $region76: #{ours_forward.1} parent=1 // pred_region
      %3910 = dma.done [#allocation5], 128
    $region77: #{ours_forward.1} parent=1 // pred_fallthru
      _
    %3911 = vsyncpa [#allocation3], 1
    %3912 = vsyncpa [#allocation5], 1

</llo_original>
